<compile_context>
chip_gen: v7x
topology: tpu7x:2x2x1
jax: 0.10.0
libtpu: 0.0.40
codegen_flags: <defaults>
</compile_context>

<pallas_src>
import functools
import math

import jax
import jax.numpy as jnp
from jax.experimental import pallas as pl
from jax.experimental.pallas import tpu as pltpu

_NEG_INF = -1.0e30   # large-negative additive mask value (avoids -inf NaN corners)
_LN_EPS = 1e-5       # PyTorch LayerNorm default
_SINGLE_BUFFER_OK = None  # lazily probed: is pipeline_mode=pl.Buffered(1) supported?


# ----------------------------------------------------------------------------
# Small helpers (host side)
# ----------------------------------------------------------------------------
def _round_up(n, m):
    return ((n + m - 1) // m) * m


def _row_tile(m, target=512):
    """Row tile: multiple of 8, capped at `target`; rows are padded up to it."""
    return int(min(target, _round_up(max(m, 8), 8)))


def _col_tile(n, target=512):
    """Largest 128-multiple column block <= target dividing n (n is 128-aligned)."""
    best, t = 128, 128
    while t <= min(n, target):
        if n % t == 0:
            best = t
        t += 128
    return best


def _batch_tile(batch, seq, target_rows=256):
    """Largest divisor of `batch` whose packed row count bt*seq <= target_rows."""
    bt = max(1, min(batch, target_rows // max(seq, 1)))
    while batch % bt:
        bt -= 1
    return bt


def _clamp_vmem(est_bytes):
    """Explicit scoped-VMEM limit: generous but safe on v5e/v6e/v7x."""
    return int(min(max(est_bytes, 8 << 20), 48 << 20))


def _single_buffer_ok():
    """Probe once whether pl.Buffered(1) single-buffering lowers cleanly."""
    global _SINGLE_BUFFER_OK
    if _SINGLE_BUFFER_OK is None:
        try:
            def _probe(x_ref, o_ref):
                o_ref[...] = x_ref[...]

            x = jnp.zeros((8, 128), jnp.float32)
            out = pl.pallas_call(
                _probe,
                out_shape=jax.ShapeDtypeStruct((8, 128), jnp.float32),
                grid=(1,),
                in_specs=[pl.BlockSpec((8, 128), lambda i: (0, 0),
                                       pipeline_mode=pl.Buffered(1))],
                out_specs=pl.BlockSpec((8, 128), lambda i: (0, 0)),
            )(x)
            jax.block_until_ready(out)
            _SINGLE_BUFFER_OK = True
        except Exception:
            _SINGLE_BUFFER_OK = False
    return _SINGLE_BUFFER_OK


def _weight_spec(shape):
    """BlockSpec for a grid-constant (resident) operand on a 1-D grid.

    Single-buffered when supported (reclaims VMEM on v7x); otherwise default."""
    zeros = (0,) * len(shape)
    idx = lambda i, _z=zeros: _z
    if _single_buffer_ok():
        return pl.BlockSpec(shape, idx, pipeline_mode=pl.Buffered(1))
    return pl.BlockSpec(shape, idx)


# ----------------------------------------------------------------------------
# In-kernel helpers
# ----------------------------------------------------------------------------
def _add_layernorm(x, y, g, b):
    """LayerNorm(x + y) over the last dim (eps = 1e-5), f32 math."""
    z = x + y
    mu = jnp.mean(z, axis=-1, keepdims=True)
    zc = z - mu
    var = jnp.mean(zc * zc, axis=-1, keepdims=True)
    return zc * jax.lax.rsqrt(var + _LN_EPS) * g + b


def _mha(q, k, v, kmask, wo, bo, nhead, head_dim, bt, seq, causal):
    """Head-batched attention + output projection.

    q, k, v: (bt*seq, D) f32; q is already pre-scaled by 1/sqrt(head_dim).
    kmask:   (bt, 1, seq) additive key-padding mask (0 / -1e30), f32.
    wo: (D, D) bf16, bo: (1, D) f32.  Returns (bt*seq, D) f32.
    """
    d = nhead * head_dim
    bh = bt * nhead

    def _split(t):  # (bt*seq, D) -> (bt*nhead, seq, head_dim), bf16
        t = t.astype(jnp.bfloat16).reshape(bt, seq, nhead, head_dim)
        return t.transpose(0, 2, 1, 3).reshape(bh, seq, head_dim)

    qh, kh, vh = _split(q), _split(k), _split(v)

    # batched QK^T on the MXU, f32 accumulation
    s = jnp.einsum('bqd,bkd->bqk', qh, kh,
                   preferred_element_type=jnp.float32)          # (bh, S, S)
    s = s.reshape(bt, nhead, seq, seq) + kmask.reshape(bt, 1, 1, seq)
    if causal:
        row = jax.lax.broadcasted_iota(jnp.int32, (seq, seq), 0)
        col = jax.lax.broadcasted_iota(jnp.int32, (seq, seq), 1)
        s = jnp.where((col <= row)[None, None], s, _NEG_INF)    # fused mask

    s = s - jnp.max(s, axis=-1, keepdims=True)
    p = jnp.exp(s)
    p = p * pl.reciprocal(jnp.sum(p, axis=-1, keepdims=True), approx=True)
    p = p.reshape(bh, seq, seq).astype(jnp.bfloat16)

    # batched PV on the MXU
    o = jnp.einsum('bqk,bkd->bqd', p, vh,
                   preferred_element_type=jnp.float32)          # (bh, S, hd)
    attn = (o.reshape(bt, nhead, seq, head_dim)
              .transpose(0, 2, 1, 3)
              .reshape(bt * seq, d)
              .astype(jnp.bfloat16))
    # single full-D output projection
    return jnp.dot(attn, wo, preferred_element_type=jnp.float32) + bo


# ----------------------------------------------------------------------------
# Pallas kernels
# ----------------------------------------------------------------------------
def _self_attn_ln_kernel(nhead, head_dim,
                         x_ref, wqkv_ref, bqkv_ref, wo_ref, bo_ref,
                         kmask_ref, g_ref, b_ref, o_ref):
    """Fused: QKV proj -> causal MHA -> out proj -> residual add -> LayerNorm."""
    bt, seq, d = x_ref.shape
    x = x_ref[...].reshape(bt * seq, d)                         # bf16 rows
    xf = x.astype(jnp.float32)                                  # residual, f32
    # single fused (bt*S, D) @ (D, 3D) bf16 MXU matmul, f32 accumulation
    qkv = jnp.dot(x, wqkv_ref[...],
                  preferred_element_type=jnp.float32) + bqkv_ref[...]
    scale = 1.0 / math.sqrt(head_dim)
    q = qkv[:, :d] * scale                                      # pre-scaled q
    k = qkv[:, d:2 * d]
    v = qkv[:, 2 * d:]
    y = _mha(q, k, v, kmask_ref[...], wo_ref[...], bo_ref[...],
             nhead, head_dim, bt, seq, causal=True)
    out = _add_layernorm(xf, y, g_ref[...], b_ref[...])
    o_ref[...] = out.reshape(bt, seq, d).astype(o_ref.dtype)


def _cross_attn_ln_kernel(nhead, head_dim,
                          x_ref, m_ref, wq_ref, bq_ref, wkv_ref, bkv_ref,
                          wo_ref, bo_ref, kmask_ref, g_ref, b_ref, o_ref):
    """Fused: Q proj + fused KV proj -> MHA (key padding only) -> add + LN."""
    bt, seq, d = x_ref.shape
    x = x_ref[...].reshape(bt * seq, d)                         # bf16 rows
    mem = m_ref[...].reshape(bt * seq, d)                       # bf16 rows
    xf = x.astype(jnp.float32)
    scale = 1.0 / math.sqrt(head_dim)
    q = (jnp.dot(x, wq_ref[...],
                 preferred_element_type=jnp.float32) + bq_ref[...]) * scale
    kv = jnp.dot(mem, wkv_ref[...],
                 preferred_element_type=jnp.float32) + bkv_ref[...]
    y = _mha(q, kv[:, :d], kv[:, d:], kmask_ref[...], wo_ref[...], bo_ref[...],
             nhead, head_dim, bt, seq, causal=False)
    out = _add_layernorm(xf, y, g_ref[...], b_ref[...])
    o_ref[...] = out.reshape(bt, seq, d).astype(o_ref.dtype)


def _ffn_ln_kernel(x_ref, w1_ref, b1_ref, w2_ref, b2_ref, g_ref, beta_ref, o_ref):
    """Fused: linear1 -> exact GELU -> linear2 -> residual add -> LayerNorm."""
    x = x_ref[...]                                              # (tm, D) bf16
    xf = x.astype(jnp.float32)
    h = jnp.dot(x, w1_ref[...],
                preferred_element_type=jnp.float32) + b1_ref[...]
    h = 0.5 * h * (1.0 + jax.lax.erf(h * (1.0 / math.sqrt(2.0))))   # exact GELU
    y = jnp.dot(h.astype(jnp.bfloat16), w2_ref[...],
                preferred_element_type=jnp.float32) + b2_ref[...]
    o_ref[...] = _add_layernorm(xf, y, g_ref[...], beta_ref[...]).astype(o_ref.dtype)


def _linear_kernel(x_ref, w_ref, b_ref, o_ref):
    o_ref[...] = jnp.dot(x_ref[...], w_ref[...],
                         preferred_element_type=jnp.float32) + b_ref[...]


# ----------------------------------------------------------------------------
# Pallas wrappers
# ----------------------------------------------------------------------------
def self_attn_block(x, p, ln_g, ln_b, kmask, nhead, bt):
    B, S, D = x.shape
    hd = D // nhead
    kernel = functools.partial(_self_attn_ln_kernel, nhead, hd)
    blk3 = lambda b: (b, 0, 0)
    act = bt * S * D * 2                                 # bf16 I/O block
    wbytes = (3 * D * D + D * D) * 2 + (3 * D + 3 * D) * 4
    scratch = bt * S * 5 * D * 4 + 3 * bt * nhead * S * S * 4
    vmem = _clamp_vmem(4 * act + 2 * wbytes + scratch + (4 << 20))
    return pl.pallas_call(
        kernel,
        out_shape=jax.ShapeDtypeStruct((B, S, D), jnp.bfloat16),
        grid=(B // bt,),
        in_specs=[
            pl.BlockSpec((bt, S, D), blk3),              # x (query + residual), bf16
            _weight_spec((D, 3 * D)),                    # fused Wqkv (bf16)
            _weight_spec((1, 3 * D)),                    # fused bias
            _weight_spec((D, D)),                        # Wo (bf16)
            _weight_spec((1, D)),                        # bo
            pl.BlockSpec((bt, 1, S), blk3),              # key-padding additive mask
            _weight_spec((1, D)),                        # LN gamma
            _weight_spec((1, D)),                        # LN beta
        ],
        out_specs=pl.BlockSpec((bt, S, D), blk3),
        compiler_params=pltpu.CompilerParams(
            dimension_semantics=("parallel",), vmem_limit_bytes=vmem),
    )(x, p["wqkv"], p["bqkv"], p["wo"], p["bo"], kmask, ln_g, ln_b)


def cross_attn_block(x, memory, p, ln_g, ln_b, kmask, nhead, bt):
    B, S, D = x.shape
    hd = D // nhead
    kernel = functools.partial(_cross_attn_ln_kernel, nhead, hd)
    blk3 = lambda b: (b, 0, 0)
    act = bt * S * D * 2
    wbytes = (D * D + 2 * D * D + D * D) * 2 + (D + 2 * D + 3 * D) * 4
    scratch = bt * S * 6 * D * 4 + 3 * bt * nhead * S * S * 4
    vmem = _clamp_vmem(6 * act + 2 * wbytes + scratch + (4 << 20))
    return pl.pallas_call(
        kernel,
        out_shape=jax.ShapeDtypeStruct((B, S, D), jnp.bfloat16),
        grid=(B // bt,),
        in_specs=[
            pl.BlockSpec((bt, S, D), blk3),              # x (query + residual), bf16
            pl.BlockSpec((bt, S, D), blk3),              # memory (K/V input), bf16
            _weight_spec((D, D)),                        # Wq (bf16)
            _weight_spec((1, D)),                        # bq
            _weight_spec((D, 2 * D)),                    # fused Wkv (bf16)
            _weight_spec((1, 2 * D)),                    # fused bkv
            _weight_spec((D, D)),                        # Wo (bf16)
            _weight_spec((1, D)),                        # bo
            pl.BlockSpec((bt, 1, S), blk3),              # key-padding additive mask
            _weight_spec((1, D)),                        # LN gamma
            _weight_spec((1, D)),                        # LN beta
        ],
        out_specs=pl.BlockSpec((bt, S, D), blk3),
        compiler_params=pltpu.CompilerParams(
            dimension_semantics=("parallel",), vmem_limit_bytes=vmem),
    )(x, memory, p["wq"], p["bq"], p["wkv"], p["bkv"], p["wo"], p["bo"],
      kmask, ln_g, ln_b)


def ffn_block(x2, w1, b1, w2, b2, g, beta):
    """x2: (M, D) bf16 rows -> LayerNorm(x + FFN(x)), row-tiled & row-padded."""
    M, D = x2.shape
    dff = w1.shape[1]
    tm = _row_tile(M)
    Mp = _round_up(M, tm)
    if Mp != M:
        x2 = jnp.pad(x2, ((0, Mp - M), (0, 0)))
    act = tm * D * 2
    wbytes = 2 * D * dff * 2 + (dff + 3 * D) * 4
    scratch = tm * dff * 4 * 2 + tm * D * 4 * 2
    vmem = _clamp_vmem(4 * act + 2 * wbytes + scratch + (4 << 20))
    out = pl.pallas_call(
        _ffn_ln_kernel,
        out_shape=jax.ShapeDtypeStruct((Mp, D), jnp.bfloat16),
        grid=(Mp // tm,),
        in_specs=[
            pl.BlockSpec((tm, D), lambda i: (i, 0)),     # row block (pipelined)
            _weight_spec((D, dff)),                      # W1 (bf16, resident)
            _weight_spec((1, dff)),
            _weight_spec((dff, D)),                      # W2 (bf16, resident)
            _weight_spec((1, D)),
            _weight_spec((1, D)),                        # LN gamma
            _weight_spec((1, D)),                        # LN beta
        ],
        out_specs=pl.BlockSpec((tm, D), lambda i: (i, 0)),
        compiler_params=pltpu.CompilerParams(
            dimension_semantics=("parallel",), vmem_limit_bytes=vmem),
        cost_estimate=pl.CostEstimate(
            flops=int(4 * Mp * D * dff + 10 * Mp * D),
            transcendentals=int(Mp * dff),
            bytes_accessed=int(4 * Mp * D + 4 * D * dff)),
    )(x2, w1, b1, w2, b2, g, beta)
    return out[:M] if Mp != M else out


def final_linear(x2, w, b):
    """x2: (M, D) bf16, w: (D, Vpad) bf16 with Vpad % 128 == 0 (lane-dense)."""
    M, D = x2.shape
    N = w.shape[1]
    tm = _row_tile(M)
    Mp = _round_up(M, tm)
    if Mp != M:
        x2 = jnp.pad(x2, ((0, Mp - M), (0, 0)))
    tn = _col_tile(N)
    vmem = _clamp_vmem(2 * (tm * D * 2 + D * tn * 2 + tm * tn * 4) + (4 << 20))
    out = pl.pallas_call(
        _linear_kernel,
        out_shape=jax.ShapeDtypeStruct((Mp, N), jnp.float32),
        grid=(Mp // tm, N // tn),
        in_specs=[
            pl.BlockSpec((tm, D), lambda i, j: (i, 0)),
            pl.BlockSpec((D, tn), lambda i, j: (0, j)),
            pl.BlockSpec((1, tn), lambda i, j: (0, j)),
        ],
        out_specs=pl.BlockSpec((tm, tn), lambda i, j: (i, j)),
        compiler_params=pltpu.CompilerParams(
            dimension_semantics=("parallel", "parallel"), vmem_limit_bytes=vmem),
        cost_estimate=pl.CostEstimate(
            flops=int(2 * Mp * D * N), transcendentals=0,
            bytes_accessed=int(2 * Mp * D + 2 * D * N + 4 * Mp * N)),
    )(x2, w, b)
    return out[:M] if Mp != M else out


# ----------------------------------------------------------------------------
# Parameters & positional encoding (deterministic, synthetic)
# ----------------------------------------------------------------------------
def make_pe(max_len, d_model):
    position = jnp.arange(max_len, dtype=jnp.float32)[:, None]
    div_term = jnp.exp(jnp.arange(0, d_model, 2, dtype=jnp.float32)
                       * (-math.log(10000.0) / d_model))
    pe = jnp.zeros((max_len, d_model), jnp.float32)
    pe = pe.at[:, 0::2].set(jnp.sin(position * div_term))
    pe = pe.at[:, 1::2].set(jnp.cos(position * div_term))
    return pe


def init_params(key, vocab_size, d_model, nhead, num_layers, dff, max_seq_len):
    state = {"key": key}

    def nxt():
        state["key"], sub = jax.random.split(state["key"])
        return sub

    def dense(shape, scale=0.02):
        return (scale * jax.random.normal(nxt(), shape)).astype(jnp.float32)

    vpad = _round_up(vocab_size, 128)              # lane-dense final projection
    fc_w = jnp.zeros((d_model, vpad), jnp.float32)
    fc_w = fc_w.at[:, :vocab_size].set(dense((d_model, vocab_size)))

    params = {
        "d_model": d_model,
        "nhead": nhead,
        "vocab_size": vocab_size,
        "embedding": dense((vocab_size, d_model), 1.0),   # ~ nn.Embedding N(0,1)
        "pe": make_pe(max_seq_len, d_model),
        "fc_w": fc_w.astype(jnp.bfloat16),
        "fc_b": jnp.zeros((1, vpad), jnp.float32),
        "layers": [],
    }
    for _ in range(num_layers):
        params["layers"].append({
            "self": {
                "wqkv": dense((d_model, 3 * d_model)).astype(jnp.bfloat16),
                "bqkv": jnp.zeros((1, 3 * d_model), jnp.float32),
                "wo": dense((d_model, d_model)).astype(jnp.bfloat16),
                "bo": jnp.zeros((1, d_model), jnp.float32),
            },
            "cross": {
                "wq": dense((d_model, d_model)).astype(jnp.bfloat16),
                "bq": jnp.zeros((1, d_model), jnp.float32),
                "wkv": dense((d_model, 2 * d_model)).astype(jnp.bfloat16),
                "bkv": jnp.zeros((1, 2 * d_model), jnp.float32),
                "wo": dense((d_model, d_model)).astype(jnp.bfloat16),
                "bo": jnp.zeros((1, d_model), jnp.float32),
            },
            "ln1_g": jnp.ones((1, d_model), jnp.float32),
            "ln1_b": jnp.zeros((1, d_model), jnp.float32),
            "ln2_g": jnp.ones((1, d_model), jnp.float32),
            "ln2_b": jnp.zeros((1, d_model), jnp.float32),
            "ln3_g": jnp.ones((1, d_model), jnp.float32),
            "ln3_b": jnp.zeros((1, d_model), jnp.float32),
            "w1": dense((d_model, dff)).astype(jnp.bfloat16),
            "b1": jnp.zeros((1, dff), jnp.float32),
            "w2": dense((dff, d_model)).astype(jnp.bfloat16),
            "b2": jnp.zeros((1, d_model), jnp.float32),
        })
    return params


# ----------------------------------------------------------------------------
# Forward pass (mirrors MusicTransformer.forward, eval mode)
# ----------------------------------------------------------------------------
def music_transformer_forward(params, src, src_padding_mask=None):
    B, S = src.shape
    D = params["d_model"]
    nhead = params["nhead"]

    # embedding * sqrt(d_model) + positional encoding  (dropout = identity)
    # TODO(synk): dropout layers are identity (eval-mode semantics).
    emb = jnp.take(params["embedding"], src, axis=0) * math.sqrt(D)   # (B,S,D)
    x = (emb + params["pe"][:S][None, :, :]).astype(jnp.bfloat16)     # bf16 stream
    memory = x                                   # K/V input for cross-attention

    # tiny (B,1,S) additive key-padding mask (0 / -1e30); the causal mask is
    # generated inside the self-attention kernel, never materialized in HBM.
    if src_padding_mask is not None:
        kmask = jnp.where(src_padding_mask, _NEG_INF, 0.0).astype(jnp.float32)[:, None, :]
    else:
        kmask = jnp.zeros((B, 1, S), jnp.float32)

    bt = _batch_tile(B, S)                       # batch packing -> MXU row occupancy
    for layer in params["layers"]:
        # self-attention + add&norm (post-norm, causal + key padding)
        x = self_attn_block(x, layer["self"], layer["ln1_g"], layer["ln1_b"],
                            kmask, nhead, bt)
        # cross-attention over memory + add&norm (key padding only)
        x = cross_attn_block(x, memory, layer["cross"], layer["ln2_g"],
                             layer["ln2_b"], kmask, nhead, bt)
        # feed-forward (exact GELU) + add&norm, row-tiled
        x = ffn_block(x.reshape(B * S, D), layer["w1"], layer["b1"],
                      layer["w2"], layer["b2"],
                      layer["ln3_g"], layer["ln3_b"]).reshape(B, S, D)

    logits = final_linear(x.reshape(B * S, D), params["fc_w"], params["fc_b"])
    return logits.reshape(B, S, -1)[:, :, :params["vocab_size"]]


# ----------------------------------------------------------------------------
if __name__ == "__main__":
    # Small, module-consistent shapes (d_model kept lane-dense at 128)
    VOCAB = 16
    D_MODEL = 128
    NHEAD = 4
    NUM_LAYERS = 2
    DIM_FF = 256
    MAX_SEQ_LEN = 64
    B, S = 2, 16

    key = jax.random.PRNGKey(0)
    pkey, skey = jax.random.split(key)
    params = init_params(pkey, VOCAB, D_MODEL, NHEAD, NUM_LAYERS, DIM_FF, MAX_SEQ_LEN)
    src = jax.random.randint(skey, (B, S), 0, VOCAB, dtype=jnp.int32)

    logits = music_transformer_forward(params, src, src_padding_mask=None)
    jax.block_until_ready(logits)
    assert logits.shape == (B, S, VOCAB)
    assert bool(jnp.all(jnp.isfinite(logits)))
    print("KERNEL_OK")
</pallas_src>

<mosaic_0001>
module attributes {stable_mosaic.version = 11 : i64} {
  func.func @_probe(%arg0: i32, %arg1: memref<8x128xf32, #tpu.memory_space<vmem>>, %arg2: memref<8x128xf32, #tpu.memory_space<vmem>>) attributes {dimension_semantics = [#tpu.dimension_semantics<arbitrary>], iteration_bounds = array<i64: 1>, scalar_prefetch = 0 : i64, scratch_operands = 0 : i64, tpu.core_type = #tpu.core_type<tc>, window_params = [{pipeline_mode = #tpu.pipeline_mode<synchronous>, transform_indices = @transform_0, window_bounds = array<i64: 8, 128>}, {pipeline_mode = #tpu.pipeline_mode<synchronous>, transform_indices = @transform_1, window_bounds = array<i64: 8, 128>}]} {
    %c0 = arith.constant 0 : index
    %c0_0 = arith.constant 0 : index
    %0 = vector.load %arg1[%c0, %c0_0] : memref<8x128xf32, #tpu.memory_space<vmem>>, vector<8x128xf32>
    %c0_1 = arith.constant 0 : index
    %c0_2 = arith.constant 0 : index
    %1 = vector.load %arg2[%c0_1, %c0_2] : memref<8x128xf32, #tpu.memory_space<vmem>>, vector<8x128xf32>
    tpu.vector_store %arg2[%c0_1, %c0_2], %0 {strides = array<i32>} : memref<8x128xf32, #tpu.memory_space<vmem>>, vector<8x128xf32>,
    return
  }
  func.func @transform_0(%arg0: i32) -> (i32, i32) {
    %c0_i32 = arith.constant 0 : i32
    %c0_i32_0 = arith.constant 0 : i32
    %c0_i32_1 = arith.constant 0 : i32
    return %c0_i32, %c0_i32_0 : i32, i32
  }
  func.func @transform_1(%arg0: i32) -> (i32, i32) {
    %c0_i32 = arith.constant 0 : i32
    %c0_i32_0 = arith.constant 0 : i32
    %c0_i32_1 = arith.constant 0 : i32
    return %c0_i32, %c0_i32_0 : i32, i32
  }
}

module attributes {stable_mosaic.version = 11 : i64} {
  func.func @_self_attn_ln_kernel(%arg0: i32, %arg1: memref<2x16x128xbf16, #tpu.memory_space<vmem>>, %arg2: memref<128x384xbf16, #tpu.memory_space<vmem>>, %arg3: memref<1x384xf32, #tpu.memory_space<vmem>>, %arg4: memref<128x128xbf16, #tpu.memory_space<vmem>>, %arg5: memref<1x128xf32, #tpu.memory_space<vmem>>, %arg6: memref<2x1x16xf32, #tpu.memory_space<vmem>>, %arg7: memref<1x128xf32, #tpu.memory_space<vmem>>, %arg8: memref<1x128xf32, #tpu.memory_space<vmem>>, %arg9: memref<2x16x128xbf16, #tpu.memory_space<vmem>>) attributes {dimension_semantics = [#tpu.dimension_semantics<parallel>], iteration_bounds = array<i64: 1>, scalar_prefetch = 0 : i64, scratch_operands = 0 : i64, tpu.core_type = #tpu.core_type<tc>, window_params = [{transform_indices = @transform_0, window_bounds = array<i64: 2, 16, 128>}, {pipeline_mode = #tpu.pipeline_mode<synchronous>, transform_indices = @transform_1, window_bounds = array<i64: 128, 384>}, {pipeline_mode = #tpu.pipeline_mode<synchronous>, transform_indices = @transform_2, window_bounds = array<i64: 1, 384>}, {pipeline_mode = #tpu.pipeline_mode<synchronous>, transform_indices = @transform_3, window_bounds = array<i64: 128, 128>}, {pipeline_mode = #tpu.pipeline_mode<synchronous>, transform_indices = @transform_4, window_bounds = array<i64: 1, 128>}, {transform_indices = @transform_5, window_bounds = array<i64: 2, 1, 16>}, {pipeline_mode = #tpu.pipeline_mode<synchronous>, transform_indices = @transform_6, window_bounds = array<i64: 1, 128>}, {pipeline_mode = #tpu.pipeline_mode<synchronous>, transform_indices = @transform_7, window_bounds = array<i64: 1, 128>}, {transform_indices = @transform_8, window_bounds = array<i64: 2, 16, 128>}]} {
    %c0 = arith.constant 0 : index
    %c0_0 = arith.constant 0 : index
    %c0_1 = arith.constant 0 : index
    %0 = vector.load %arg1[%c0, %c0_0, %c0_1] : memref<2x16x128xbf16, #tpu.memory_space<vmem>>, vector<2x16x128xbf16>
    %1 = vector.shape_cast %0 : vector<2x16x128xbf16> to vector<32x128xbf16>
    %2 = arith.extf %1 : vector<32x128xbf16> to vector<32x128xf32>
    %c0_2 = arith.constant 0 : index
    %c0_3 = arith.constant 0 : index
    %3 = vector.load %arg2[%c0_2, %c0_3] : memref<128x384xbf16, #tpu.memory_space<vmem>>, vector<128x384xbf16>
    %cst = arith.constant dense<0.000000e+00> : vector<32x384xf32>
    %4 = tpu.matmul %1, %3, %cst {dimension_numbers = #tpu.dot_dimension_numbers<[1], [0], [0], [1], [0, 0, 1, 1], [], []>} : vector<32x128xbf16>, vector<128x384xbf16>, vector<32x384xf32> -> vector<32x384xf32>
    %c0_4 = arith.constant 0 : index
    %c0_5 = arith.constant 0 : index
    %5 = vector.load %arg3[%c0_4, %c0_5] : memref<1x384xf32, #tpu.memory_space<vmem>>, vector<1x384xf32>
    %6 = vector.broadcast %5 : vector<1x384xf32> to vector<32x384xf32>
    %7 = arith.addf %4, %6 : vector<32x384xf32>
    %8 = vector.extract_strided_slice %7 {offsets = [0, 0], sizes = [32, 128], strides = [1, 1]} : vector<32x384xf32> to vector<32x128xf32>
    %cst_6 = arith.constant 0.176776692 : f32
    %9 = vector.broadcast %cst_6 : f32 to vector<32x128xf32>
    %10 = arith.mulf %8, %9 : vector<32x128xf32>
    %11 = vector.extract_strided_slice %7 {offsets = [0, 128], sizes = [32, 128], strides = [1, 1]} : vector<32x384xf32> to vector<32x128xf32>
    %12 = vector.extract_strided_slice %7 {offsets = [0, 256], sizes = [32, 128], strides = [1, 1]} : vector<32x384xf32> to vector<32x128xf32>
    %c0_7 = arith.constant 0 : index
    %c0_8 = arith.constant 0 : index
    %c0_9 = arith.constant 0 : index
    %13 = vector.load %arg6[%c0_7, %c0_8, %c0_9] : memref<2x1x16xf32, #tpu.memory_space<vmem>>, vector<2x1x16xf32>
    %c0_10 = arith.constant 0 : index
    %c0_11 = arith.constant 0 : index
    %14 = vector.load %arg4[%c0_10, %c0_11] : memref<128x128xbf16, #tpu.memory_space<vmem>>, vector<128x128xbf16>
    %c0_12 = arith.constant 0 : index
    %c0_13 = arith.constant 0 : index
    %15 = vector.load %arg5[%c0_12, %c0_13] : memref<1x128xf32, #tpu.memory_space<vmem>>, vector<1x128xf32>
    %16 = arith.truncf %10 : vector<32x128xf32> to vector<32x128xbf16>
    %17 = vector.shape_cast %16 : vector<32x128xbf16> to vector<2x16x4x32xbf16>
    %18 = tpu.transpose %17, [0, 2, 1, 3] : vector<2x16x4x32xbf16> -> vector<2x4x16x32xbf16>
    %19 = vector.shape_cast %18 : vector<2x4x16x32xbf16> to vector<8x16x32xbf16>
    %20 = arith.truncf %11 : vector<32x128xf32> to vector<32x128xbf16>
    %21 = vector.shape_cast %20 : vector<32x128xbf16> to vector<2x16x4x32xbf16>
    %22 = tpu.transpose %21, [0, 2, 1, 3] : vector<2x16x4x32xbf16> -> vector<2x4x16x32xbf16>
    %23 = vector.shape_cast %22 : vector<2x4x16x32xbf16> to vector<8x16x32xbf16>
    %24 = arith.truncf %12 : vector<32x128xf32> to vector<32x128xbf16>
    %25 = vector.shape_cast %24 : vector<32x128xbf16> to vector<2x16x4x32xbf16>
    %26 = tpu.transpose %25, [0, 2, 1, 3] : vector<2x16x4x32xbf16> -> vector<2x4x16x32xbf16>
    %27 = vector.shape_cast %26 : vector<2x4x16x32xbf16> to vector<8x16x32xbf16>
    "tpu.trace_start"() <{level = 10 : i32, message = "bqd,bkd->bqk"}> : () -> ()
    %cst_14 = arith.constant dense<0.000000e+00> : vector<8x16x16xf32>
    %28 = tpu.matmul %19, %23, %cst_14 {dimension_numbers = #tpu.dot_dimension_numbers<[2], [2], [1], [1], [0, 0, 0, 1, 1, 1], [0], [0]>} : vector<8x16x32xbf16>, vector<8x16x32xbf16>, vector<8x16x16xf32> -> vector<8x16x16xf32>
    "tpu.trace_stop"() : () -> ()
    %29 = vector.shape_cast %28 : vector<8x16x16xf32> to vector<2x4x16x16xf32>
    %30 = vector.shape_cast %13 : vector<2x1x16xf32> to vector<2x1x1x16xf32>
    %31 = vector.broadcast %30 : vector<2x1x1x16xf32> to vector<2x4x16x16xf32>
    %32 = arith.addf %29, %31 : vector<2x4x16x16xf32>
    %33 = tpu.iota {dimensions = array<i32: 0>} : vector<16x16xi32>
    %34 = tpu.iota {dimensions = array<i32: 1>} : vector<16x16xi32>
    %35 = arith.cmpi sle, %34, %33 : vector<16x16xi32>
    %36 = vector.shape_cast %35 : vector<16x16xi1> to vector<1x1x16x16xi1>
    %cst_15 = arith.constant -1.000000e+30 : f32
    %37 = vector.shape_cast %36 : vector<1x1x16x16xi1> to vector<1x1x16x16xi1>
    %38 = vector.broadcast %37 : vector<1x1x16x16xi1> to vector<2x4x16x16xi1>
    %39 = vector.broadcast %cst_15 : f32 to vector<2x4x16x16xf32>
    %40 = arith.select %38, %32, %39 : vector<2x4x16x16xi1>, vector<2x4x16x16xf32>
    %cst_16 = arith.constant dense<0xFF800000> : vector<2x4x16xf32>
    %41 = vector.multi_reduction <maximumf>, %40, %cst_16 [3] : vector<2x4x16x16xf32> to vector<2x4x16xf32>
    %42 = vector.shape_cast %41 : vector<2x4x16xf32> to vector<2x4x16x1xf32>
    %43 = vector.broadcast %42 : vector<2x4x16x1xf32> to vector<2x4x16x16xf32>
    %44 = arith.subf %40, %43 : vector<2x4x16x16xf32>
    %45 = math.exp %44 : vector<2x4x16x16xf32>
    %cst_17 = arith.constant dense<0.000000e+00> : vector<2x4x16xf32>
    %46 = vector.multi_reduction <add>, %45, %cst_17 [3] : vector<2x4x16x16xf32> to vector<2x4x16xf32>
    %47 = vector.shape_cast %46 : vector<2x4x16xf32> to vector<2x4x16x1xf32>
    %48 = tpu.reciprocal %47 {approx = true} : vector<2x4x16x1xf32> -> vector<2x4x16x1xf32>
    %49 = vector.broadcast %48 : vector<2x4x16x1xf32> to vector<2x4x16x16xf32>
    %50 = arith.mulf %45, %49 : vector<2x4x16x16xf32>
    %51 = vector.shape_cast %50 : vector<2x4x16x16xf32> to vector<8x16x16xf32>
    %52 = arith.truncf %51 : vector<8x16x16xf32> to vector<8x16x16xbf16>
    "tpu.trace_start"() <{level = 10 : i32, message = "bqk,bkd->bqd"}> : () -> ()
    %cst_18 = arith.constant dense<0.000000e+00> : vector<8x16x32xf32>
    %53 = tpu.matmul %52, %27, %cst_18 {dimension_numbers = #tpu.dot_dimension_numbers<[2], [1], [1], [2], [0, 0, 0, 1, 1, 2], [0], [0]>} : vector<8x16x16xbf16>, vector<8x16x32xbf16>, vector<8x16x32xf32> -> vector<8x16x32xf32>
    "tpu.trace_stop"() : () -> ()
    %54 = vector.shape_cast %53 : vector<8x16x32xf32> to vector<2x4x16x32xf32>
    %55 = tpu.transpose %54, [0, 2, 1, 3] : vector<2x4x16x32xf32> -> vector<2x16x4x32xf32>
    %56 = vector.shape_cast %55 : vector<2x16x4x32xf32> to vector<32x128xf32>
    %57 = arith.truncf %56 : vector<32x128xf32> to vector<32x128xbf16>
    %cst_19 = arith.constant dense<0.000000e+00> : vector<32x128xf32>
    %58 = tpu.matmul %57, %14, %cst_19 {dimension_numbers = #tpu.dot_dimension_numbers<[1], [0], [0], [1], [0, 0, 1, 1], [], []>} : vector<32x128xbf16>, vector<128x128xbf16>, vector<32x128xf32> -> vector<32x128xf32>
    %59 = vector.broadcast %15 : vector<1x128xf32> to vector<32x128xf32>
    %60 = arith.addf %58, %59 : vector<32x128xf32>
    %c0_20 = arith.constant 0 : index
    %c0_21 = arith.constant 0 : index
    %61 = vector.load %arg7[%c0_20, %c0_21] : memref<1x128xf32, #tpu.memory_space<vmem>>, vector<1x128xf32>
    %c0_22 = arith.constant 0 : index
    %c0_23 = arith.constant 0 : index
    %62 = vector.load %arg8[%c0_22, %c0_23] : memref<1x128xf32, #tpu.memory_space<vmem>>, vector<1x128xf32>
    %63 = arith.addf %2, %60 : vector<32x128xf32>
    %cst_24 = arith.constant dense<0.000000e+00> : vector<32xf32>
    %64 = vector.multi_reduction <add>, %63, %cst_24 [1] : vector<32x128xf32> to vector<32xf32>
    %65 = vector.shape_cast %64 : vector<32xf32> to vector<32x1xf32>
    %cst_25 = arith.constant 1.280000e+02 : f32
    %66 = vector.broadcast %cst_25 : f32 to vector<32x1xf32>
    %67 = arith.divf %65, %66 : vector<32x1xf32>
    %68 = vector.broadcast %67 : vector<32x1xf32> to vector<32x128xf32>
    %69 = arith.subf %63, %68 : vector<32x128xf32>
    %70 = arith.mulf %69, %69 : vector<32x128xf32>
    %cst_26 = arith.constant dense<0.000000e+00> : vector<32xf32>
    %71 = vector.multi_reduction <add>, %70, %cst_26 [1] : vector<32x128xf32> to vector<32xf32>
    %72 = vector.shape_cast %71 : vector<32xf32> to vector<32x1xf32>
    %cst_27 = arith.constant 1.280000e+02 : f32
    %73 = vector.broadcast %cst_27 : f32 to vector<32x1xf32>
    %74 = arith.divf %72, %73 : vector<32x1xf32>
    %cst_28 = arith.constant 9.99999974E-6 : f32
    %75 = vector.broadcast %cst_28 : f32 to vector<32x1xf32>
    %76 = arith.addf %74, %75 : vector<32x1xf32>
    %77 = math.rsqrt %76 : vector<32x1xf32>
    %78 = vector.broadcast %77 : vector<32x1xf32> to vector<32x128xf32>
    %79 = arith.mulf %69, %78 : vector<32x128xf32>
    %80 = vector.broadcast %61 : vector<1x128xf32> to vector<32x128xf32>
    %81 = arith.mulf %79, %80 : vector<32x128xf32>
    %82 = vector.broadcast %62 : vector<1x128xf32> to vector<32x128xf32>
    %83 = arith.addf %81, %82 : vector<32x128xf32>
    %84 = vector.shape_cast %83 : vector<32x128xf32> to vector<2x16x128xf32>
    %85 = arith.truncf %84 : vector<2x16x128xf32> to vector<2x16x128xbf16>
    %c0_29 = arith.constant 0 : index
    %c0_30 = arith.constant 0 : index
    %c0_31 = arith.constant 0 : index
    %86 = vector.load %arg9[%c0_29, %c0_30, %c0_31] : memref<2x16x128xbf16, #tpu.memory_space<vmem>>, vector<2x16x128xbf16>
    tpu.vector_store %arg9[%c0_29, %c0_30, %c0_31], %85 {strides = array<i32>} : memref<2x16x128xbf16, #tpu.memory_space<vmem>>, vector<2x16x128xbf16>,
    return
  }
  func.func @transform_0(%arg0: i32) -> (i32, i32, i32) {
    %c0_i32 = arith.constant 0 : i32
    %c0_i32_0 = arith.constant 0 : i32
    %c0_i32_1 = arith.constant 0 : i32
    return %arg0, %c0_i32, %c0_i32_0 : i32, i32, i32
  }
  func.func @transform_1(%arg0: i32) -> (i32, i32) {
    %c0_i32 = arith.constant 0 : i32
    %c0_i32_0 = arith.constant 0 : i32
    %c0_i32_1 = arith.constant 0 : i32
    return %c0_i32, %c0_i32_0 : i32, i32
  }
  func.func @transform_2(%arg0: i32) -> (i32, i32) {
    %c0_i32 = arith.constant 0 : i32
    %c0_i32_0 = arith.constant 0 : i32
    %c0_i32_1 = arith.constant 0 : i32
    return %c0_i32, %c0_i32_0 : i32, i32
  }
  func.func @transform_3(%arg0: i32) -> (i32, i32) {
    %c0_i32 = arith.constant 0 : i32
    %c0_i32_0 = arith.constant 0 : i32
    %c0_i32_1 = arith.constant 0 : i32
    return %c0_i32, %c0_i32_0 : i32, i32
  }
  func.func @transform_4(%arg0: i32) -> (i32, i32) {
    %c0_i32 = arith.constant 0 : i32
    %c0_i32_0 = arith.constant 0 : i32
    %c0_i32_1 = arith.constant 0 : i32
    return %c0_i32, %c0_i32_0 : i32, i32
  }
  func.func @transform_5(%arg0: i32) -> (i32, i32, i32) {
    %c0_i32 = arith.constant 0 : i32
    %c0_i32_0 = arith.constant 0 : i32
    %c0_i32_1 = arith.constant 0 : i32
    return %arg0, %c0_i32, %c0_i32_0 : i32, i32, i32
  }
  func.func @transform_6(%arg0: i32) -> (i32, i32) {
    %c0_i32 = arith.constant 0 : i32
    %c0_i32_0 = arith.constant 0 : i32
    %c0_i32_1 = arith.constant 0 : i32
    return %c0_i32, %c0_i32_0 : i32, i32
  }
  func.func @transform_7(%arg0: i32) -> (i32, i32) {
    %c0_i32 = arith.constant 0 : i32
    %c0_i32_0 = arith.constant 0 : i32
    %c0_i32_1 = arith.constant 0 : i32
    return %c0_i32, %c0_i32_0 : i32, i32
  }
  func.func @transform_8(%arg0: i32) -> (i32, i32, i32) {
    %c0_i32 = arith.constant 0 : i32
    %c0_i32_0 = arith.constant 0 : i32
    %c0_i32_1 = arith.constant 0 : i32
    return %arg0, %c0_i32, %c0_i32_0 : i32, i32, i32
  }
}

</mosaic_0001>

<llo_original>
// kernel: tpu_custom_call.1
$region0: #{tpu_custom_call.1}
  #allocation0 [shape = 'u32[]', space=smem, size = 0x4, offset = 0x4, fixed_abs, tag = 'smem constant byte address 0x4 - core index']
  #allocation1 [shape = 'u32[144,128]{1,0:T(1,128)}', space=vmem, size = 0x12000, scoped, tag = 'internal scratch']
  %s0 = inlined_call_operand.hbm [shape: f32[8,128], index: 0, kind: input, shape index: {}]
  %s1 = inlined_call_operand.hbm [shape: f32[8,128], index: 1, kind: output, shape index: {}]
  %s2 = sld [smem:[#allocation0]]
  $region18: #{tpu_custom_call.1} parent=0
    _
  %s4 = ssub.s32 1, %s2
  %s5 = scalar_select 0, %s4, %s2
  $region1: #{tpu_custom_call.1} parent=0
    #allocation2 [shape = 'u8[4096]{0}', space=vmem, size = 0x1000, scoped, tag = 'input window, operand 0, single buffered']
    #allocation3 [shape = 's32[1]{0}', space=sflag, size = 0x4, scoped, tag = 'scoped memory for tpu_custom_call.1']
    #allocation4 [shape = 's32[1]{0}', space=sflag, size = 0x4, scoped, tag = 'scoped memory for tpu_custom_call.1']
    #allocation5 [shape = 'u8[4096]{0}', space=vmem, size = 0x1000, scoped, tag = 'output window, operand 0, single buffered']
    %6 = vsyncpa [#allocation3], 0
    %7 = vsyncpa [#allocation4], 0
    // Predicated region
    $region2: #{tpu_custom_call.1} parent=1 // pred_check
      _
    $region3: #{tpu_custom_call.1} parent=1 // pred_check_branch
      %9 = sbr.rel (0) target = $region5
    $region4: #{tpu_custom_call.1} parent=1 // pred_region
      %s11 = ssub.s32 128, 128
      %12 = vsyncadd [#allocation3], %s11
      %s14 = sshll.u32 [#allocation2], 4
      %s15 = int_to_ptr.vmem [resolvable:$true] %s14
      %17 = dma.hbm_to_vmem [thread:$0]  %s0, 128, %s15, [#allocation3]
    $region5: #{tpu_custom_call.1} parent=1 // pred_fallthru
      _
    // Predicated region
    $region6: #{tpu_custom_call.1} parent=1 // pred_check
      _
    $region7: #{tpu_custom_call.1} parent=1 // pred_check_branch
      %19 = sbr.rel (0) target = $region9
    $region8: #{tpu_custom_call.1} parent=1 // pred_region
      %20 = dma.done [#allocation3], 128
    $region9: #{tpu_custom_call.1} parent=1 // pred_fallthru
      _
    %v21 = vld [vmem:[#allocation2] sm:$0xff]
    %22 = vst [vmem:[#allocation5] sm:$0xff] %v21
    // Predicated region
    $region10: #{tpu_custom_call.1} parent=1 // pred_check
      _
    $region11: #{tpu_custom_call.1} parent=1 // pred_check_branch
      %24 = sbr.rel (0) target = $region13
    $region12: #{tpu_custom_call.1} parent=1 // pred_region
      %s26 = ssub.s32 128, 128
      %27 = vsyncadd [#allocation4], %s26
      %s29 = sshll.u32 [#allocation5], 4
      %s30 = int_to_ptr.vmem [resolvable:$true] %s29
      %32 = dma.vmem_to_hbm [thread:$0]  %s30, 128, %s1, [#allocation4]
    $region13: #{tpu_custom_call.1} parent=1 // pred_fallthru
      _
    // Predicated region
    $region14: #{tpu_custom_call.1} parent=1 // pred_check
      _
    $region15: #{tpu_custom_call.1} parent=1 // pred_check_branch
      %34 = sbr.rel (0) target = $region17
    $region16: #{tpu_custom_call.1} parent=1 // pred_region
      %35 = dma.done [#allocation4], 128
    $region17: #{tpu_custom_call.1} parent=1 // pred_fallthru
      _
    %36 = vsyncpa [#allocation3], 1
    %37 = vsyncpa [#allocation4], 1

// kernel: tpu_custom_call.1
$region0: #{tpu_custom_call.1}
  #allocation0 [shape = 'u32[]', space=smem, size = 0x4, offset = 0x4, fixed_abs, tag = 'smem constant byte address 0x4 - core index']
  #allocation1 [shape = 'u32[144,128]{1,0:T(1,128)}', space=vmem, size = 0x12000, scoped, tag = 'internal scratch']
  %s0 = inlined_call_operand.hbm [shape: bf16[2,16,128], index: 0, kind: input, shape index: {}]
  %s1 = inlined_call_operand.hbm [shape: bf16[128,384], index: 1, kind: input, shape index: {}]
  %s2 = inlined_call_operand.vmem [shape: f32[1,384], index: 2, kind: input, shape index: {}]
  %s3 = inlined_call_operand.hbm [shape: bf16[128,128], index: 3, kind: input, shape index: {}]
  %s4 = inlined_call_operand.vmem [shape: f32[1,128], index: 4, kind: input, shape index: {}]
  %s5 = inlined_call_operand.vmem [shape: f32[2,1,16], index: 5, kind: input, shape index: {}]
  %s6 = inlined_call_operand.vmem [shape: f32[1,128], index: 6, kind: input, shape index: {}]
  %s7 = inlined_call_operand.vmem [shape: f32[1,128], index: 7, kind: input, shape index: {}]
  %s8 = inlined_call_operand.hbm [shape: bf16[2,16,128], index: 8, kind: output, shape index: {}]
  %s9 = sld [smem:[#allocation0]]
  $region54: #{tpu_custom_call.1} parent=0
    _
  %s11 = ssub.s32 1, %s9
  %s12 = scalar_select 0, %s11, %s9
  $region1: #{tpu_custom_call.1} parent=0
    #allocation2 [shape = 'u8[8192]{0}', space=vmem, size = 0x2000, scoped, tag = 'input window, operand 0, single buffered']
    #allocation3 [shape = 's32[1]{0}', space=sflag, size = 0x4, scoped, tag = 'scoped memory for tpu_custom_call.1']
    #allocation4 [shape = 's32[1]{0}', space=sflag, size = 0x4, scoped, tag = 'scoped memory for tpu_custom_call.1']
    #allocation5 [shape = 'u8[98304]{0}', space=vmem, size = 0x18000, scoped, tag = 'input window, operand 1, single buffered']
    #allocation6 [shape = 's32[1]{0}', space=sflag, size = 0x4, scoped, tag = 'scoped memory for tpu_custom_call.1']
    #allocation7 [shape = 'u8[32768]{0}', space=vmem, size = 0x8000, scoped, tag = 'input window, operand 3, single buffered']
    #allocation8 [shape = 'u8[8192]{0}', space=vmem, size = 0x2000, scoped, tag = 'output window, operand 0, single buffered']
    %13 = vsyncpa [#allocation3], 0
    %14 = vsyncpa [#allocation6], 0
    %15 = vsyncpa [#allocation4], 0
    // Predicated region
    $region2: #{tpu_custom_call.1} parent=1 // pred_check
      _
    $region3: #{tpu_custom_call.1} parent=1 // pred_check_branch
      %17 = sbr.rel (0) target = $region5
    $region4: #{tpu_custom_call.1} parent=1 // pred_region
      %s19 = ssub.s32 256, 256
      %20 = vsyncadd [#allocation3], %s19
      %s21 = sshll.u32 [#allocation2], 4
      %s22 = int_to_ptr.vmem [resolvable:$true] %s21
      %27 = dma.hbm_to_vmem [thread:$0]  %s0, 256, %s22, [#allocation3], 64, 64, 4
    $region5: #{tpu_custom_call.1} parent=1 // pred_fallthru
      _
    // Predicated region
    $region6: #{tpu_custom_call.1} parent=1 // pred_check
      _
    $region7: #{tpu_custom_call.1} parent=1 // pred_check_branch
      %29 = sbr.rel (0) target = $region9
    $region8: #{tpu_custom_call.1} parent=1 // pred_region
      %s31 = ssub.s32 3072, 3072
      %32 = vsyncadd [#allocation6], %s31
      %s33 = sshll.u32 [#allocation5], 4
      %s34 = int_to_ptr.vmem [resolvable:$true] %s33
      %39 = dma.hbm_to_vmem [thread:$0]  %s1, 3072, %s34, [#allocation6], 192, 192, 12
    $region9: #{tpu_custom_call.1} parent=1 // pred_fallthru
      _
    // Predicated region
    $region10: #{tpu_custom_call.1} parent=1 // pred_check
      _
    $region11: #{tpu_custom_call.1} parent=1 // pred_check_branch
      %41 = sbr.rel (0) target = $region13
    $region12: #{tpu_custom_call.1} parent=1 // pred_region
      _
    $region13: #{tpu_custom_call.1} parent=1 // pred_fallthru
      _
    // Predicated region
    $region14: #{tpu_custom_call.1} parent=1 // pred_check
      _
    $region15: #{tpu_custom_call.1} parent=1 // pred_check_branch
      %43 = sbr.rel (0) target = $region17
    $region16: #{tpu_custom_call.1} parent=1 // pred_region
      %s45 = ssub.s32 1024, 1024
      %46 = vsyncadd [#allocation6], %s45
      %s47 = sshll.u32 [#allocation7], 4
      %s48 = int_to_ptr.vmem [resolvable:$true] %s47
      %53 = dma.hbm_to_vmem [thread:$0]  %s3, 1024, %s48, [#allocation6], 64, 64, 4
    $region17: #{tpu_custom_call.1} parent=1 // pred_fallthru
      _
    // Predicated region
    $region18: #{tpu_custom_call.1} parent=1 // pred_check
      _
    $region19: #{tpu_custom_call.1} parent=1 // pred_check_branch
      %55 = sbr.rel (0) target = $region21
    $region20: #{tpu_custom_call.1} parent=1 // pred_region
      _
    $region21: #{tpu_custom_call.1} parent=1 // pred_fallthru
      _
    // Predicated region
    $region22: #{tpu_custom_call.1} parent=1 // pred_check
      _
    $region23: #{tpu_custom_call.1} parent=1 // pred_check_branch
      %57 = sbr.rel (0) target = $region25
    $region24: #{tpu_custom_call.1} parent=1 // pred_region
      _
    $region25: #{tpu_custom_call.1} parent=1 // pred_fallthru
      _
    // Predicated region
    $region26: #{tpu_custom_call.1} parent=1 // pred_check
      _
    $region27: #{tpu_custom_call.1} parent=1 // pred_check_branch
      %59 = sbr.rel (0) target = $region29
    $region28: #{tpu_custom_call.1} parent=1 // pred_region
      _
    $region29: #{tpu_custom_call.1} parent=1 // pred_fallthru
      _
    // Predicated region
    $region30: #{tpu_custom_call.1} parent=1 // pred_check
      _
    $region31: #{tpu_custom_call.1} parent=1 // pred_check_branch
      %61 = sbr.rel (0) target = $region33
    $region32: #{tpu_custom_call.1} parent=1 // pred_region
      _
    $region33: #{tpu_custom_call.1} parent=1 // pred_fallthru
      _
    // Predicated region
    $region34: #{tpu_custom_call.1} parent=1 // pred_check
      _
    $region35: #{tpu_custom_call.1} parent=1 // pred_check_branch
      %63 = sbr.rel (0) target = $region37
    $region36: #{tpu_custom_call.1} parent=1 // pred_region
      %64 = dma.done [#allocation3], 256
    $region37: #{tpu_custom_call.1} parent=1 // pred_fallthru
      _
    // Predicated region
    $region38: #{tpu_custom_call.1} parent=1 // pred_check
      _
    $region39: #{tpu_custom_call.1} parent=1 // pred_check_branch
      %66 = sbr.rel (0) target = $region41
    $region40: #{tpu_custom_call.1} parent=1 // pred_region
      %67 = dma.done [#allocation6], 3072
    $region41: #{tpu_custom_call.1} parent=1 // pred_fallthru
      _
    // Predicated region
    $region42: #{tpu_custom_call.1} parent=1 // pred_check
      _
    $region43: #{tpu_custom_call.1} parent=1 // pred_check_branch
      %69 = sbr.rel (0) target = $region45
    $region44: #{tpu_custom_call.1} parent=1 // pred_region
      %70 = dma.done [#allocation6], 1024
    $region45: #{tpu_custom_call.1} parent=1 // pred_fallthru
      _
    %v72 = vld [vmem:[#allocation2] sm:$0xf]
    %v73 = vld [vmem:[#allocation2 + $0x4] sm:$0xf]
    %v74 = vld [vmem:[#allocation2 + $0x8] sm:$0xf]
    %v75 = vld [vmem:[#allocation2 + $0xc] sm:$0xf]
    %v76 = vunpack.c.l.bf16 %v72
    %v77 = vunpack.c.l.bf16 %v73
    %v78 = vunpack.c.l.bf16 %v74
    %v79 = vunpack.c.l.bf16 %v75
    %v80 = vld [vmem:[#allocation5] sm:$0xff]
    %v81 = vld [vmem:[#allocation5 + $0x8] sm:$0xf]
    %v82 = vld [vmem:[#allocation5 + $0xc] sm:$0xff]
    %v83 = vld [vmem:[#allocation5 + $0x14] sm:$0xf]
    %v84 = vld [vmem:[#allocation5 + $0x18] sm:$0xff]
    %v85 = vld [vmem:[#allocation5 + $0x20] sm:$0xf]
    %v86 = vld [vmem:[#allocation5 + $0x24] sm:$0xff]
    %v87 = vld [vmem:[#allocation5 + $0x2c] sm:$0xf]
    %v88 = vld [vmem:[#allocation5 + $0x30] sm:$0xff]
    %v89 = vld [vmem:[#allocation5 + $0x38] sm:$0xf]
    %v90 = vld [vmem:[#allocation5 + $0x3c] sm:$0xff]
    %v91 = vld [vmem:[#allocation5 + $0x44] sm:$0xf]
    %v92 = vld [vmem:[#allocation5 + $0x48] sm:$0xff]
    %v93 = vld [vmem:[#allocation5 + $0x50] sm:$0xf]
    %v94 = vld [vmem:[#allocation5 + $0x54] sm:$0xff]
    %v95 = vld [vmem:[#allocation5 + $0x5c] sm:$0xf]
    %v96 = vld [vmem:[#allocation5 + $0x60] sm:$0xff]
    %v97 = vld [vmem:[#allocation5 + $0x68] sm:$0xf]
    %v98 = vld [vmem:[#allocation5 + $0x6c] sm:$0xff]
    %v99 = vld [vmem:[#allocation5 + $0x74] sm:$0xf]
    %v100 = vld [vmem:[#allocation5 + $0x78] sm:$0xff]
    %v101 = vld [vmem:[#allocation5 + $0x80] sm:$0xf]
    %v102 = vld [vmem:[#allocation5 + $0x84] sm:$0xff]
    %v103 = vld [vmem:[#allocation5 + $0x8c] sm:$0xf]
    %v104 = vld [vmem:[#allocation5 + $0x90] sm:$0xff]
    %v105 = vld [vmem:[#allocation5 + $0x98] sm:$0xf]
    %v106 = vld [vmem:[#allocation5 + $0x9c] sm:$0xff]
    %v107 = vld [vmem:[#allocation5 + $0xa4] sm:$0xf]
    %v108 = vld [vmem:[#allocation5 + $0xa8] sm:$0xff]
    %v109 = vld [vmem:[#allocation5 + $0xb0] sm:$0xf]
    %v110 = vld [vmem:[#allocation5 + $0xb4] sm:$0xff]
    %v111 = vld [vmem:[#allocation5 + $0xbc] sm:$0xf]
    %v112 = vld [vmem:[%s2] sm:$0x7]
    %v114 = vlaneseq
    %v115 = vshrl.u32 %v114, 7
    %v116 = vsub.s32 0, %v115
    %v117 = vrot.slane %v112, %v116
    %v118 = vlaneseq
    %v119 = vshrl.u32 %v118, 7
    %v120 = vsub.s32 1, %v119
    %v121 = vrot.slane %v112, %v120
    %v122 = vlaneseq
    %v123 = vshrl.u32 %v122, 7
    %v124 = vsub.s32 2, %v123
    %v125 = vrot.slane %v112, %v124
    %v133 = vunpack.c.l.b16 %v72
    %v134 = vunpack.c.l.b16 %v73
    %v135 = vunpack.c.l.b16 %v74
    %v136 = vunpack.c.l.b16 %v75
    %v137 = vpack.c.b16 %v134, %v133
    %v138 = vpack.c.b16 %v136, %v135
    %v173 = vunpack.c.l.b16 %v80
    %v174 = vunpack.c.h.b16 %v80
    %v175 = vunpack.c.l.b16 %v81
    %v176 = vunpack.c.l.b16 %v82
    %v177 = vunpack.c.h.b16 %v82
    %v178 = vunpack.c.l.b16 %v83
    %v179 = vunpack.c.l.b16 %v84
    %v180 = vunpack.c.h.b16 %v84
    %v181 = vunpack.c.l.b16 %v85
    %v182 = vunpack.c.l.b16 %v86
    %v183 = vunpack.c.h.b16 %v86
    %v184 = vunpack.c.l.b16 %v87
    %v185 = vunpack.c.l.b16 %v88
    %v186 = vunpack.c.h.b16 %v88
    %v187 = vunpack.c.l.b16 %v89
    %v188 = vunpack.c.l.b16 %v90
    %v189 = vunpack.c.h.b16 %v90
    %v190 = vunpack.c.l.b16 %v91
    %v191 = vunpack.c.l.b16 %v92
    %v192 = vunpack.c.h.b16 %v92
    %v193 = vunpack.c.l.b16 %v93
    %v194 = vunpack.c.l.b16 %v94
    %v195 = vunpack.c.h.b16 %v94
    %v196 = vunpack.c.l.b16 %v95
    %v197 = vunpack.c.l.b16 %v96
    %v198 = vunpack.c.h.b16 %v96
    %v199 = vunpack.c.l.b16 %v97
    %v200 = vunpack.c.l.b16 %v98
    %v201 = vunpack.c.h.b16 %v98
    %v202 = vunpack.c.l.b16 %v99
    %v203 = vunpack.c.l.b16 %v100
    %v204 = vunpack.c.h.b16 %v100
    %v205 = vunpack.c.l.b16 %v101
    %v206 = vunpack.c.l.b16 %v102
    %v207 = vunpack.c.h.b16 %v102
    %v208 = vunpack.c.l.b16 %v103
    %v209 = vunpack.c.l.b16 %v104
    %v210 = vunpack.c.h.b16 %v104
    %v211 = vunpack.c.l.b16 %v105
    %v212 = vunpack.c.l.b16 %v106
    %v213 = vunpack.c.h.b16 %v106
    %v214 = vunpack.c.l.b16 %v107
    %v215 = vunpack.c.l.b16 %v108
    %v216 = vunpack.c.h.b16 %v108
    %v217 = vunpack.c.l.b16 %v109
    %v218 = vunpack.c.l.b16 %v110
    %v219 = vunpack.c.h.b16 %v110
    %v220 = vunpack.c.l.b16 %v111
    %v221 = vpack.c.b16 %v176, %v173
    %v222 = vpack.c.b16 %v177, %v174
    %v223 = vpack.c.b16 %v178, %v175
    %v224 = vpack.c.b16 %v182, %v179
    %v225 = vpack.c.b16 %v183, %v180
    %v226 = vpack.c.b16 %v184, %v181
    %v227 = vpack.c.b16 %v188, %v185
    %v228 = vpack.c.b16 %v189, %v186
    %v229 = vpack.c.b16 %v190, %v187
    %v230 = vpack.c.b16 %v194, %v191
    %v231 = vpack.c.b16 %v195, %v192
    %v232 = vpack.c.b16 %v196, %v193
    %v233 = vpack.c.b16 %v200, %v197
    %v234 = vpack.c.b16 %v201, %v198
    %v235 = vpack.c.b16 %v202, %v199
    %v236 = vpack.c.b16 %v206, %v203
    %v237 = vpack.c.b16 %v207, %v204
    %v238 = vpack.c.b16 %v208, %v205
    %v239 = vpack.c.b16 %v212, %v209
    %v240 = vpack.c.b16 %v213, %v210
    %v241 = vpack.c.b16 %v214, %v211
    %v242 = vpack.c.b16 %v218, %v215
    %v243 = vpack.c.b16 %v219, %v216
    %v244 = vpack.c.b16 %v220, %v217
    %269 = vmatprep.subr.bf16.mxu0 %v222
    %270 = vmatpush1.bf16.msra.mxu0 %v221
    %271 = vmatprep.subr.bf16.mxu0 %v225
    %272 = vmatpush1.bf16.msra.mxu0 %v224
    %273 = vmatprep.subr.bf16.mxu0 %v228
    %274 = vmatpush1.bf16.msra.mxu0 %v227
    %275 = vmatprep.subr.bf16.mxu0 %v231
    %276 = vmatpush1.bf16.msra.mxu0 %v230
    %277 = vmatprep.subr.bf16.mxu0 %v234
    %278 = vmatpush1.bf16.msra.mxu0 %v233
    %279 = vmatprep.subr.bf16.mxu0 %v237
    %280 = vmatpush1.bf16.msra.mxu0 %v236
    %281 = vmatprep.subr.bf16.mxu0 %v240
    %282 = vmatpush1.bf16.msra.mxu0 %v239
    %283 = vmatprep.subr.bf16.mxu0 %v243
    %284 = vmatpush1.bf16.msra.mxu0 %v242
    %285 = vmatprep.subr.bf16.mxu0 0
    %286 = vmatpush1.bf16.msra.mxu0 0
    %287 = vmatprep.subr.bf16.mxu0 0
    %288 = vmatpush1.bf16.msra.mxu0 0
    %289 = vmatprep.subr.bf16.mxu0 0
    %290 = vmatpush1.bf16.msra.mxu0 0
    %291 = vmatprep.subr.bf16.mxu0 0
    %292 = vmatpush1.bf16.msra.mxu0 0
    %293 = vmatprep.subr.bf16.mxu0 0
    %294 = vmatpush1.bf16.msra.mxu0 0
    %295 = vmatprep.subr.bf16.mxu0 0
    %296 = vmatpush1.bf16.msra.mxu0 0
    %297 = vmatprep.subr.bf16.mxu0 0
    %298 = vmatpush1.bf16.msra.mxu0 0
    %299 = vmatprep.subr.bf16.mxu0 0
    %300 = vmatpush1.bf16.msra.mxu0 0
    %301 = vmatprep.mubr.bf16.mxu0 0
    %302 = vmatmul.mubr.bf16.gmra.mrb[0].mxu0 %v137
    %v303 = vpop.f32.mrb[0].mxu0
    %v304 = vadd.f32 %v117, %v303
    %v305 = vpop.f32.mrb[0].mxu0
    %v306 = vadd.f32 %v121, %v305
    %v307 = vpop.f32.mrb[0].mxu0
    %v308 = vadd.f32 %v117, %v307
    %v309 = vpop.f32.mrb[0].mxu0
    %v310 = vadd.f32 %v121, %v309
    %311 = vmatprep.mubr.bf16.mxu0 0
    %312 = vmatmul.mubr.bf16.gmra.mrb[0].mxu0 %v138
    %v313 = vpop.f32.mrb[0].mxu0
    %v314 = vadd.f32 %v117, %v313
    %v315 = vpop.f32.mrb[0].mxu0
    %v316 = vadd.f32 %v121, %v315
    %v317 = vpop.f32.mrb[0].mxu0
    %v318 = vadd.f32 %v117, %v317
    %v319 = vpop.f32.mrb[0].mxu0
    %v320 = vadd.f32 %v121, %v319
    %321 = vdwg.mxu0
    %322 = vmatprep.subr.bf16.mxu0 0
    %323 = vmatpush1.bf16.msra.mxu0 %v223
    %324 = vmatprep.subr.bf16.mxu0 0
    %325 = vmatpush1.bf16.msra.mxu0 %v226
    %326 = vmatprep.subr.bf16.mxu0 0
    %327 = vmatpush1.bf16.msra.mxu0 %v229
    %328 = vmatprep.subr.bf16.mxu0 0
    %329 = vmatpush1.bf16.msra.mxu0 %v232
    %330 = vmatprep.subr.bf16.mxu0 0
    %331 = vmatpush1.bf16.msra.mxu0 %v235
    %332 = vmatprep.subr.bf16.mxu0 0
    %333 = vmatpush1.bf16.msra.mxu0 %v238
    %334 = vmatprep.subr.bf16.mxu0 0
    %335 = vmatpush1.bf16.msra.mxu0 %v241
    %336 = vmatprep.subr.bf16.mxu0 0
    %337 = vmatpush1.bf16.msra.mxu0 %v244
    %338 = vmatprep.subr.bf16.mxu0 0
    %339 = vmatpush1.bf16.msra.mxu0 0
    %340 = vmatprep.subr.bf16.mxu0 0
    %341 = vmatpush1.bf16.msra.mxu0 0
    %342 = vmatprep.subr.bf16.mxu0 0
    %343 = vmatpush1.bf16.msra.mxu0 0
    %344 = vmatprep.subr.bf16.mxu0 0
    %345 = vmatpush1.bf16.msra.mxu0 0
    %346 = vmatprep.subr.bf16.mxu0 0
    %347 = vmatpush1.bf16.msra.mxu0 0
    %348 = vmatprep.subr.bf16.mxu0 0
    %349 = vmatpush1.bf16.msra.mxu0 0
    %350 = vmatprep.subr.bf16.mxu0 0
    %351 = vmatpush1.bf16.msra.mxu0 0
    %352 = vmatprep.subr.bf16.mxu0 0
    %353 = vmatpush1.bf16.msra.mxu0 0
    %354 = vmatprep.mubr.bf16.mxu0 0
    %355 = vmatmul.mubr.bf16.gmra.mrb[0].mxu0 %v137
    %v356 = vpop.f32.mrb[0].mxu0
    %v357 = vadd.f32 %v125, %v356
    %v358 = vpop.f32.mrb[0].mxu0
    %v359 = vpop.f32.mrb[0].mxu0
    %v360 = vadd.f32 %v125, %v359
    %v361 = vpop.f32.mrb[0].mxu0
    %362 = vmatprep.mubr.bf16.mxu0 0
    %363 = vmatmul.mubr.bf16.gmra.mrb[0].mxu0 %v138
    %v364 = vpop.f32.mrb[0].mxu0
    %v365 = vadd.f32 %v125, %v364
    %v366 = vpop.f32.mrb[0].mxu0
    %v367 = vpop.f32.mrb[0].mxu0
    %v368 = vadd.f32 %v125, %v367
    %v369 = vpop.f32.mrb[0].mxu0
    %370 = vdwg.mxu0
    %v371 = vmul.f32 %v304, 0.17677669
    %v372 = vmul.f32 %v308, 0.17677669
    %v373 = vmul.f32 %v314, 0.17677669
    %v374 = vmul.f32 %v318, 0.17677669
    %v375 = vld [vmem:[%s5] sm:$0x1]
    %v376 = vld [vmem:[%s5 + $0x1] sm:$0x1]
    %v377 = vld [vmem:[#allocation7] sm:$0xf]
    %v378 = vld [vmem:[#allocation7 + $0x4] sm:$0xf]
    %v379 = vld [vmem:[#allocation7 + $0x8] sm:$0xf]
    %v380 = vld [vmem:[#allocation7 + $0xc] sm:$0xf]
    %v381 = vld [vmem:[#allocation7 + $0x10] sm:$0xf]
    %v382 = vld [vmem:[#allocation7 + $0x14] sm:$0xf]
    %v383 = vld [vmem:[#allocation7 + $0x18] sm:$0xf]
    %v384 = vld [vmem:[#allocation7 + $0x1c] sm:$0xf]
    %v385 = vld [vmem:[#allocation7 + $0x20] sm:$0xf]
    %v386 = vld [vmem:[#allocation7 + $0x24] sm:$0xf]
    %v387 = vld [vmem:[#allocation7 + $0x28] sm:$0xf]
    %v388 = vld [vmem:[#allocation7 + $0x2c] sm:$0xf]
    %v389 = vld [vmem:[#allocation7 + $0x30] sm:$0xf]
    %v390 = vld [vmem:[#allocation7 + $0x34] sm:$0xf]
    %v391 = vld [vmem:[#allocation7 + $0x38] sm:$0xf]
    %v392 = vld [vmem:[#allocation7 + $0x3c] sm:$0xf]
    %v393 = vld [vmem:[%s4] sm:$0x1]
    %v394 = vpack.c.bf16 %v372, %v371
    %v395 = vpack.c.bf16 %v374, %v373
    %398 = vrot.lane.b32.xlu0 %v394, 96
    %v399 = vpop.permute.xlu0 %398
    %400 = vrot.lane.b32.xlu0 %v395, 96
    %v401 = vpop.permute.xlu0 %400
    %402 = vrot.lane.b32.xlu0 %v394, 64
    %v403 = vpop.permute.xlu0 %402
    %404 = vrot.lane.b32.xlu0 %v395, 64
    %v405 = vpop.permute.xlu0 %404
    %406 = vrot.lane.b32.xlu0 %v394, 32
    %v407 = vpop.permute.xlu0 %406
    %408 = vrot.lane.b32.xlu0 %v395, 32
    %v409 = vpop.permute.xlu0 %408
    %v412 = vpack.i.b16 %v399, %v394
    %v414 = vshrl.u32 %v394, 16
    %v415 = vshrl.u32 %v399, 16
    %v416 = vpack.i.b16 %v415, %v414
    %v420 = vpack.i.b16 %v407, %v403
    %v422 = vshrl.u32 %v403, 16
    %v423 = vshrl.u32 %v407, 16
    %v424 = vpack.i.b16 %v423, %v422
    %v427 = vpack.i.b16 0, 0
    %v429 = vshrl.u32 0, 16
    %v430 = vpack.i.b16 %v429, %v429
    %v434 = vpack.i.b16 %v401, %v395
    %v436 = vshrl.u32 %v395, 16
    %v437 = vshrl.u32 %v401, 16
    %v438 = vpack.i.b16 %v437, %v436
    %v442 = vpack.i.b16 %v409, %v405
    %v444 = vshrl.u32 %v405, 16
    %v445 = vshrl.u32 %v409, 16
    %v446 = vpack.i.b16 %v445, %v444
    %v448 = vcombine.high %v412, %v427
    %v450 = vunpack.c.l.s4 1983009808
    %v451 = vunpack.c.0.s8 %v450
    %v452 = vlaneseq
    %v453 = vshrl.u32 %v452, 7
    %v454 = vsub.s32 %v451, %v453
    %v455 = vrot.slane %v412, %v454
    %v457 = vunpack.c.l.s4 1983009808
    %v458 = vunpack.c.0.s8 %v457
    %v459 = vlaneseq
    %v460 = vshrl.u32 %v459, 7
    %v461 = vsub.s32 %v458, %v460
    %v462 = vrot.slane %v448, %v461
    %v463 = vcombine.high %v420, %v427
    %v465 = vunpack.c.l.s4 1983009808
    %v466 = vunpack.c.0.s8 %v465
    %v467 = vlaneseq
    %v468 = vshrl.u32 %v467, 7
    %v469 = vsub.s32 %v466, %v468
    %v470 = vrot.slane %v420, %v469
    %v472 = vunpack.c.l.s4 1983009808
    %v473 = vunpack.c.0.s8 %v472
    %v474 = vlaneseq
    %v475 = vshrl.u32 %v474, 7
    %v476 = vsub.s32 %v473, %v475
    %v477 = vrot.slane %v463, %v476
    %v478 = vcombine.low %v455, %v470
    %v479 = vcombine.high %v455, %v470
    %v481 = vunpack.c.l.s4 1934713408
    %v482 = vunpack.c.0.s8 %v481
    %v483 = vlaneseq
    %v484 = vshrl.u32 %v483, 7
    %v485 = vsub.s32 %v482, %v484
    %v486 = vrot.slane %v478, %v485
    %v488 = vunpack.c.l.s4 1934713408
    %v489 = vunpack.c.0.s8 %v488
    %v490 = vlaneseq
    %v491 = vshrl.u32 %v490, 7
    %v492 = vsub.s32 %v489, %v491
    %v493 = vrot.slane %v479, %v492
    %v494 = vcombine.low %v462, %v477
    %v495 = vcombine.high %v462, %v477
    %v497 = vunpack.c.l.s4 1934713408
    %v498 = vunpack.c.0.s8 %v497
    %v499 = vlaneseq
    %v500 = vshrl.u32 %v499, 7
    %v501 = vsub.s32 %v498, %v500
    %v502 = vrot.slane %v494, %v501
    %v504 = vunpack.c.l.s4 1934713408
    %v505 = vunpack.c.0.s8 %v504
    %v506 = vlaneseq
    %v507 = vshrl.u32 %v506, 7
    %v508 = vsub.s32 %v505, %v507
    %v509 = vrot.slane %v495, %v508
    %v510 = vcombine.high %v486, 0
    %v511 = vcombine.high %v493, 0
    %v512 = vcombine.high %v502, 0
    %v513 = vcombine.high %v509, 0
    %v514 = vcombine.high %v416, %v430
    %v516 = vunpack.c.l.s4 1983009808
    %v517 = vunpack.c.0.s8 %v516
    %v518 = vlaneseq
    %v519 = vshrl.u32 %v518, 7
    %v520 = vsub.s32 %v517, %v519
    %v521 = vrot.slane %v416, %v520
    %v523 = vunpack.c.l.s4 1983009808
    %v524 = vunpack.c.0.s8 %v523
    %v525 = vlaneseq
    %v526 = vshrl.u32 %v525, 7
    %v527 = vsub.s32 %v524, %v526
    %v528 = vrot.slane %v514, %v527
    %v529 = vcombine.high %v424, %v430
    %v531 = vunpack.c.l.s4 1983009808
    %v532 = vunpack.c.0.s8 %v531
    %v533 = vlaneseq
    %v534 = vshrl.u32 %v533, 7
    %v535 = vsub.s32 %v532, %v534
    %v536 = vrot.slane %v424, %v535
    %v538 = vunpack.c.l.s4 1983009808
    %v539 = vunpack.c.0.s8 %v538
    %v540 = vlaneseq
    %v541 = vshrl.u32 %v540, 7
    %v542 = vsub.s32 %v539, %v541
    %v543 = vrot.slane %v529, %v542
    %v544 = vcombine.low %v521, %v536
    %v545 = vcombine.high %v521, %v536
    %v547 = vunpack.c.l.s4 1934713408
    %v548 = vunpack.c.0.s8 %v547
    %v549 = vlaneseq
    %v550 = vshrl.u32 %v549, 7
    %v551 = vsub.s32 %v548, %v550
    %v552 = vrot.slane %v544, %v551
    %v554 = vunpack.c.l.s4 1934713408
    %v555 = vunpack.c.0.s8 %v554
    %v556 = vlaneseq
    %v557 = vshrl.u32 %v556, 7
    %v558 = vsub.s32 %v555, %v557
    %v559 = vrot.slane %v545, %v558
    %v560 = vcombine.low %v528, %v543
    %v561 = vcombine.high %v528, %v543
    %v563 = vunpack.c.l.s4 1934713408
    %v564 = vunpack.c.0.s8 %v563
    %v565 = vlaneseq
    %v566 = vshrl.u32 %v565, 7
    %v567 = vsub.s32 %v564, %v566
    %v568 = vrot.slane %v560, %v567
    %v570 = vunpack.c.l.s4 1934713408
    %v571 = vunpack.c.0.s8 %v570
    %v572 = vlaneseq
    %v573 = vshrl.u32 %v572, 7
    %v574 = vsub.s32 %v571, %v573
    %v575 = vrot.slane %v561, %v574
    %v576 = vcombine.high %v552, 0
    %v577 = vcombine.high %v559, 0
    %v578 = vcombine.high %v568, 0
    %v579 = vcombine.high %v575, 0
    %v580 = vcombine.high %v434, %v427
    %v582 = vunpack.c.l.s4 1983009808
    %v583 = vunpack.c.0.s8 %v582
    %v584 = vlaneseq
    %v585 = vshrl.u32 %v584, 7
    %v586 = vsub.s32 %v583, %v585
    %v587 = vrot.slane %v434, %v586
    %v589 = vunpack.c.l.s4 1983009808
    %v590 = vunpack.c.0.s8 %v589
    %v591 = vlaneseq
    %v592 = vshrl.u32 %v591, 7
    %v593 = vsub.s32 %v590, %v592
    %v594 = vrot.slane %v580, %v593
    %v595 = vcombine.high %v442, %v427
    %v597 = vunpack.c.l.s4 1983009808
    %v598 = vunpack.c.0.s8 %v597
    %v599 = vlaneseq
    %v600 = vshrl.u32 %v599, 7
    %v601 = vsub.s32 %v598, %v600
    %v602 = vrot.slane %v442, %v601
    %v604 = vunpack.c.l.s4 1983009808
    %v605 = vunpack.c.0.s8 %v604
    %v606 = vlaneseq
    %v607 = vshrl.u32 %v606, 7
    %v608 = vsub.s32 %v605, %v607
    %v609 = vrot.slane %v595, %v608
    %v610 = vcombine.low %v587, %v602
    %v611 = vcombine.high %v587, %v602
    %v613 = vunpack.c.l.s4 1934713408
    %v614 = vunpack.c.0.s8 %v613
    %v615 = vlaneseq
    %v616 = vshrl.u32 %v615, 7
    %v617 = vsub.s32 %v614, %v616
    %v618 = vrot.slane %v610, %v617
    %v620 = vunpack.c.l.s4 1934713408
    %v621 = vunpack.c.0.s8 %v620
    %v622 = vlaneseq
    %v623 = vshrl.u32 %v622, 7
    %v624 = vsub.s32 %v621, %v623
    %v625 = vrot.slane %v611, %v624
    %v626 = vcombine.low %v594, %v609
    %v627 = vcombine.high %v594, %v609
    %v629 = vunpack.c.l.s4 1934713408
    %v630 = vunpack.c.0.s8 %v629
    %v631 = vlaneseq
    %v632 = vshrl.u32 %v631, 7
    %v633 = vsub.s32 %v630, %v632
    %v634 = vrot.slane %v626, %v633
    %v636 = vunpack.c.l.s4 1934713408
    %v637 = vunpack.c.0.s8 %v636
    %v638 = vlaneseq
    %v639 = vshrl.u32 %v638, 7
    %v640 = vsub.s32 %v637, %v639
    %v641 = vrot.slane %v627, %v640
    %v642 = vcombine.high %v618, 0
    %v643 = vcombine.high %v625, 0
    %v644 = vcombine.high %v634, 0
    %v645 = vcombine.high %v641, 0
    %v646 = vcombine.high %v438, %v430
    %v648 = vunpack.c.l.s4 1983009808
    %v649 = vunpack.c.0.s8 %v648
    %v650 = vlaneseq
    %v651 = vshrl.u32 %v650, 7
    %v652 = vsub.s32 %v649, %v651
    %v653 = vrot.slane %v438, %v652
    %v655 = vunpack.c.l.s4 1983009808
    %v656 = vunpack.c.0.s8 %v655
    %v657 = vlaneseq
    %v658 = vshrl.u32 %v657, 7
    %v659 = vsub.s32 %v656, %v658
    %v660 = vrot.slane %v646, %v659
    %v661 = vcombine.high %v446, %v430
    %v663 = vunpack.c.l.s4 1983009808
    %v664 = vunpack.c.0.s8 %v663
    %v665 = vlaneseq
    %v666 = vshrl.u32 %v665, 7
    %v667 = vsub.s32 %v664, %v666
    %v668 = vrot.slane %v446, %v667
    %v670 = vunpack.c.l.s4 1983009808
    %v671 = vunpack.c.0.s8 %v670
    %v672 = vlaneseq
    %v673 = vshrl.u32 %v672, 7
    %v674 = vsub.s32 %v671, %v673
    %v675 = vrot.slane %v661, %v674
    %v676 = vcombine.low %v653, %v668
    %v677 = vcombine.high %v653, %v668
    %v679 = vunpack.c.l.s4 1934713408
    %v680 = vunpack.c.0.s8 %v679
    %v681 = vlaneseq
    %v682 = vshrl.u32 %v681, 7
    %v683 = vsub.s32 %v680, %v682
    %v684 = vrot.slane %v676, %v683
    %v686 = vunpack.c.l.s4 1934713408
    %v687 = vunpack.c.0.s8 %v686
    %v688 = vlaneseq
    %v689 = vshrl.u32 %v688, 7
    %v690 = vsub.s32 %v687, %v689
    %v691 = vrot.slane %v677, %v690
    %v692 = vcombine.low %v660, %v675
    %v693 = vcombine.high %v660, %v675
    %v695 = vunpack.c.l.s4 1934713408
    %v696 = vunpack.c.0.s8 %v695
    %v697 = vlaneseq
    %v698 = vshrl.u32 %v697, 7
    %v699 = vsub.s32 %v696, %v698
    %v700 = vrot.slane %v692, %v699
    %v702 = vunpack.c.l.s4 1934713408
    %v703 = vunpack.c.0.s8 %v702
    %v704 = vlaneseq
    %v705 = vshrl.u32 %v704, 7
    %v706 = vsub.s32 %v703, %v705
    %v707 = vrot.slane %v693, %v706
    %v708 = vcombine.high %v684, 0
    %v709 = vcombine.high %v691, 0
    %v710 = vcombine.high %v700, 0
    %v711 = vcombine.high %v707, 0
    %v712 = vcombine.low %v486, %v493
    %v714 = vunpack.c.l.s4 1983009808
    %v715 = vunpack.c.0.s8 %v714
    %v716 = vlaneseq
    %v717 = vshrl.u32 %v716, 7
    %v718 = vsub.s32 %v715, %v717
    %v719 = vrot.slane %v712, %v718
    %v720 = vcombine.low %v510, %v511
    %v722 = vunpack.c.l.s4 1983009808
    %v723 = vunpack.c.0.s8 %v722
    %v724 = vlaneseq
    %v725 = vshrl.u32 %v724, 7
    %v726 = vsub.s32 %v723, %v725
    %v727 = vrot.slane %v720, %v726
    %v728 = vcombine.low %v502, %v509
    %v730 = vunpack.c.l.s4 1983009808
    %v731 = vunpack.c.0.s8 %v730
    %v732 = vlaneseq
    %v733 = vshrl.u32 %v732, 7
    %v734 = vsub.s32 %v731, %v733
    %v735 = vrot.slane %v728, %v734
    %v736 = vcombine.low %v512, %v513
    %v738 = vunpack.c.l.s4 1983009808
    %v739 = vunpack.c.0.s8 %v738
    %v740 = vlaneseq
    %v741 = vshrl.u32 %v740, 7
    %v742 = vsub.s32 %v739, %v741
    %v743 = vrot.slane %v736, %v742
    %v744 = vcombine.low %v719, %v727
    %v746 = vunpack.c.l.s4 1934713408
    %v747 = vunpack.c.0.s8 %v746
    %v748 = vlaneseq
    %v749 = vshrl.u32 %v748, 7
    %v750 = vsub.s32 %v747, %v749
    %v751 = vrot.slane %v744, %v750
    %v752 = vcombine.low %v735, %v743
    %v754 = vunpack.c.l.s4 1934713408
    %v755 = vunpack.c.0.s8 %v754
    %v756 = vlaneseq
    %v757 = vshrl.u32 %v756, 7
    %v758 = vsub.s32 %v755, %v757
    %v759 = vrot.slane %v752, %v758
    %v760 = vcombine.low %v751, %v759
    %v761 = vcombine.high %v751, %v759
    %v762 = vcombine.low %v552, %v559
    %v764 = vunpack.c.l.s4 1983009808
    %v765 = vunpack.c.0.s8 %v764
    %v766 = vlaneseq
    %v767 = vshrl.u32 %v766, 7
    %v768 = vsub.s32 %v765, %v767
    %v769 = vrot.slane %v762, %v768
    %v770 = vcombine.low %v576, %v577
    %v772 = vunpack.c.l.s4 1983009808
    %v773 = vunpack.c.0.s8 %v772
    %v774 = vlaneseq
    %v775 = vshrl.u32 %v774, 7
    %v776 = vsub.s32 %v773, %v775
    %v777 = vrot.slane %v770, %v776
    %v778 = vcombine.low %v568, %v575
    %v780 = vunpack.c.l.s4 1983009808
    %v781 = vunpack.c.0.s8 %v780
    %v782 = vlaneseq
    %v783 = vshrl.u32 %v782, 7
    %v784 = vsub.s32 %v781, %v783
    %v785 = vrot.slane %v778, %v784
    %v786 = vcombine.low %v578, %v579
    %v788 = vunpack.c.l.s4 1983009808
    %v789 = vunpack.c.0.s8 %v788
    %v790 = vlaneseq
    %v791 = vshrl.u32 %v790, 7
    %v792 = vsub.s32 %v789, %v791
    %v793 = vrot.slane %v786, %v792
    %v794 = vcombine.low %v769, %v777
    %v796 = vunpack.c.l.s4 1934713408
    %v797 = vunpack.c.0.s8 %v796
    %v798 = vlaneseq
    %v799 = vshrl.u32 %v798, 7
    %v800 = vsub.s32 %v797, %v799
    %v801 = vrot.slane %v794, %v800
    %v802 = vcombine.low %v785, %v793
    %v804 = vunpack.c.l.s4 1934713408
    %v805 = vunpack.c.0.s8 %v804
    %v806 = vlaneseq
    %v807 = vshrl.u32 %v806, 7
    %v808 = vsub.s32 %v805, %v807
    %v809 = vrot.slane %v802, %v808
    %v810 = vcombine.low %v801, %v809
    %v811 = vcombine.high %v801, %v809
    %v812 = vcombine.low %v618, %v625
    %v814 = vunpack.c.l.s4 1983009808
    %v815 = vunpack.c.0.s8 %v814
    %v816 = vlaneseq
    %v817 = vshrl.u32 %v816, 7
    %v818 = vsub.s32 %v815, %v817
    %v819 = vrot.slane %v812, %v818
    %v820 = vcombine.low %v642, %v643
    %v822 = vunpack.c.l.s4 1983009808
    %v823 = vunpack.c.0.s8 %v822
    %v824 = vlaneseq
    %v825 = vshrl.u32 %v824, 7
    %v826 = vsub.s32 %v823, %v825
    %v827 = vrot.slane %v820, %v826
    %v828 = vcombine.low %v634, %v641
    %v830 = vunpack.c.l.s4 1983009808
    %v831 = vunpack.c.0.s8 %v830
    %v832 = vlaneseq
    %v833 = vshrl.u32 %v832, 7
    %v834 = vsub.s32 %v831, %v833
    %v835 = vrot.slane %v828, %v834
    %v836 = vcombine.low %v644, %v645
    %v838 = vunpack.c.l.s4 1983009808
    %v839 = vunpack.c.0.s8 %v838
    %v840 = vlaneseq
    %v841 = vshrl.u32 %v840, 7
    %v842 = vsub.s32 %v839, %v841
    %v843 = vrot.slane %v836, %v842
    %v844 = vcombine.low %v819, %v827
    %v846 = vunpack.c.l.s4 1934713408
    %v847 = vunpack.c.0.s8 %v846
    %v848 = vlaneseq
    %v849 = vshrl.u32 %v848, 7
    %v850 = vsub.s32 %v847, %v849
    %v851 = vrot.slane %v844, %v850
    %v852 = vcombine.low %v835, %v843
    %v854 = vunpack.c.l.s4 1934713408
    %v855 = vunpack.c.0.s8 %v854
    %v856 = vlaneseq
    %v857 = vshrl.u32 %v856, 7
    %v858 = vsub.s32 %v855, %v857
    %v859 = vrot.slane %v852, %v858
    %v860 = vcombine.low %v851, %v859
    %v861 = vcombine.high %v851, %v859
    %v862 = vcombine.low %v684, %v691
    %v864 = vunpack.c.l.s4 1983009808
    %v865 = vunpack.c.0.s8 %v864
    %v866 = vlaneseq
    %v867 = vshrl.u32 %v866, 7
    %v868 = vsub.s32 %v865, %v867
    %v869 = vrot.slane %v862, %v868
    %v870 = vcombine.low %v708, %v709
    %v872 = vunpack.c.l.s4 1983009808
    %v873 = vunpack.c.0.s8 %v872
    %v874 = vlaneseq
    %v875 = vshrl.u32 %v874, 7
    %v876 = vsub.s32 %v873, %v875
    %v877 = vrot.slane %v870, %v876
    %v878 = vcombine.low %v700, %v707
    %v880 = vunpack.c.l.s4 1983009808
    %v881 = vunpack.c.0.s8 %v880
    %v882 = vlaneseq
    %v883 = vshrl.u32 %v882, 7
    %v884 = vsub.s32 %v881, %v883
    %v885 = vrot.slane %v878, %v884
    %v886 = vcombine.low %v710, %v711
    %v888 = vunpack.c.l.s4 1983009808
    %v889 = vunpack.c.0.s8 %v888
    %v890 = vlaneseq
    %v891 = vshrl.u32 %v890, 7
    %v892 = vsub.s32 %v889, %v891
    %v893 = vrot.slane %v886, %v892
    %v894 = vcombine.low %v869, %v877
    %v896 = vunpack.c.l.s4 1934713408
    %v897 = vunpack.c.0.s8 %v896
    %v898 = vlaneseq
    %v899 = vshrl.u32 %v898, 7
    %v900 = vsub.s32 %v897, %v899
    %v901 = vrot.slane %v894, %v900
    %v902 = vcombine.low %v885, %v893
    %v904 = vunpack.c.l.s4 1934713408
    %v905 = vunpack.c.0.s8 %v904
    %v906 = vlaneseq
    %v907 = vshrl.u32 %v906, 7
    %v908 = vsub.s32 %v905, %v907
    %v909 = vrot.slane %v902, %v908
    %v910 = vcombine.low %v901, %v909
    %v911 = vcombine.high %v901, %v909
    %v914 = vpack.i.b16 %v810, %v760
    %v915 = vshrl.u32 %v760, 16
    %v916 = vshrl.u32 %v810, 16
    %v917 = vpack.i.b16 %v916, %v915
    %v920 = vpack.i.b16 %v811, %v761
    %v921 = vshrl.u32 %v761, 16
    %v922 = vshrl.u32 %v811, 16
    %v923 = vpack.i.b16 %v922, %v921
    %v926 = vpack.i.b16 %v910, %v860
    %v927 = vshrl.u32 %v860, 16
    %v928 = vshrl.u32 %v910, 16
    %v929 = vpack.i.b16 %v928, %v927
    %v932 = vpack.i.b16 %v911, %v861
    %v933 = vshrl.u32 %v861, 16
    %v934 = vshrl.u32 %v911, 16
    %v935 = vpack.i.b16 %v934, %v933
    %v936 = vpack.c.bf16 %v310, %v306
    %v937 = vpack.c.bf16 %v320, %v316
    %940 = vrot.lane.b32.xlu0 %v936, 96
    %v941 = vpop.permute.xlu0 %940
    %942 = vrot.lane.b32.xlu0 %v937, 96
    %v943 = vpop.permute.xlu0 %942
    %944 = vrot.lane.b32.xlu0 %v936, 64
    %v945 = vpop.permute.xlu0 %944
    %946 = vrot.lane.b32.xlu0 %v937, 64
    %v947 = vpop.permute.xlu0 %946
    %948 = vrot.lane.b32.xlu0 %v936, 32
    %v949 = vpop.permute.xlu0 %948
    %950 = vrot.lane.b32.xlu0 %v937, 32
    %v951 = vpop.permute.xlu0 %950
    %v954 = vpack.i.b16 %v941, %v936
    %v956 = vshrl.u32 %v936, 16
    %v957 = vshrl.u32 %v941, 16
    %v958 = vpack.i.b16 %v957, %v956
    %v962 = vpack.i.b16 %v949, %v945
    %v964 = vshrl.u32 %v945, 16
    %v965 = vshrl.u32 %v949, 16
    %v966 = vpack.i.b16 %v965, %v964
    %v970 = vpack.i.b16 %v943, %v937
    %v972 = vshrl.u32 %v937, 16
    %v973 = vshrl.u32 %v943, 16
    %v974 = vpack.i.b16 %v973, %v972
    %v978 = vpack.i.b16 %v951, %v947
    %v980 = vshrl.u32 %v947, 16
    %v981 = vshrl.u32 %v951, 16
    %v982 = vpack.i.b16 %v981, %v980
    %v984 = vcombine.high %v954, %v427
    %v986 = vunpack.c.l.s4 1983009808
    %v987 = vunpack.c.0.s8 %v986
    %v988 = vlaneseq
    %v989 = vshrl.u32 %v988, 7
    %v990 = vsub.s32 %v987, %v989
    %v991 = vrot.slane %v954, %v990
    %v993 = vunpack.c.l.s4 1983009808
    %v994 = vunpack.c.0.s8 %v993
    %v995 = vlaneseq
    %v996 = vshrl.u32 %v995, 7
    %v997 = vsub.s32 %v994, %v996
    %v998 = vrot.slane %v984, %v997
    %v999 = vcombine.high %v962, %v427
    %v1001 = vunpack.c.l.s4 1983009808
    %v1002 = vunpack.c.0.s8 %v1001
    %v1003 = vlaneseq
    %v1004 = vshrl.u32 %v1003, 7
    %v1005 = vsub.s32 %v1002, %v1004
    %v1006 = vrot.slane %v962, %v1005
    %v1008 = vunpack.c.l.s4 1983009808
    %v1009 = vunpack.c.0.s8 %v1008
    %v1010 = vlaneseq
    %v1011 = vshrl.u32 %v1010, 7
    %v1012 = vsub.s32 %v1009, %v1011
    %v1013 = vrot.slane %v999, %v1012
    %v1014 = vcombine.low %v991, %v1006
    %v1015 = vcombine.high %v991, %v1006
    %v1017 = vunpack.c.l.s4 1934713408
    %v1018 = vunpack.c.0.s8 %v1017
    %v1019 = vlaneseq
    %v1020 = vshrl.u32 %v1019, 7
    %v1021 = vsub.s32 %v1018, %v1020
    %v1022 = vrot.slane %v1014, %v1021
    %v1024 = vunpack.c.l.s4 1934713408
    %v1025 = vunpack.c.0.s8 %v1024
    %v1026 = vlaneseq
    %v1027 = vshrl.u32 %v1026, 7
    %v1028 = vsub.s32 %v1025, %v1027
    %v1029 = vrot.slane %v1015, %v1028
    %v1030 = vcombine.low %v998, %v1013
    %v1031 = vcombine.high %v998, %v1013
    %v1033 = vunpack.c.l.s4 1934713408
    %v1034 = vunpack.c.0.s8 %v1033
    %v1035 = vlaneseq
    %v1036 = vshrl.u32 %v1035, 7
    %v1037 = vsub.s32 %v1034, %v1036
    %v1038 = vrot.slane %v1030, %v1037
    %v1040 = vunpack.c.l.s4 1934713408
    %v1041 = vunpack.c.0.s8 %v1040
    %v1042 = vlaneseq
    %v1043 = vshrl.u32 %v1042, 7
    %v1044 = vsub.s32 %v1041, %v1043
    %v1045 = vrot.slane %v1031, %v1044
    %v1046 = vcombine.high %v1022, 0
    %v1047 = vcombine.high %v1029, 0
    %v1048 = vcombine.high %v1038, 0
    %v1049 = vcombine.high %v1045, 0
    %v1050 = vcombine.high %v958, %v430
    %v1052 = vunpack.c.l.s4 1983009808
    %v1053 = vunpack.c.0.s8 %v1052
    %v1054 = vlaneseq
    %v1055 = vshrl.u32 %v1054, 7
    %v1056 = vsub.s32 %v1053, %v1055
    %v1057 = vrot.slane %v958, %v1056
    %v1059 = vunpack.c.l.s4 1983009808
    %v1060 = vunpack.c.0.s8 %v1059
    %v1061 = vlaneseq
    %v1062 = vshrl.u32 %v1061, 7
    %v1063 = vsub.s32 %v1060, %v1062
    %v1064 = vrot.slane %v1050, %v1063
    %v1065 = vcombine.high %v966, %v430
    %v1067 = vunpack.c.l.s4 1983009808
    %v1068 = vunpack.c.0.s8 %v1067
    %v1069 = vlaneseq
    %v1070 = vshrl.u32 %v1069, 7
    %v1071 = vsub.s32 %v1068, %v1070
    %v1072 = vrot.slane %v966, %v1071
    %v1074 = vunpack.c.l.s4 1983009808
    %v1075 = vunpack.c.0.s8 %v1074
    %v1076 = vlaneseq
    %v1077 = vshrl.u32 %v1076, 7
    %v1078 = vsub.s32 %v1075, %v1077
    %v1079 = vrot.slane %v1065, %v1078
    %v1080 = vcombine.low %v1057, %v1072
    %v1081 = vcombine.high %v1057, %v1072
    %v1083 = vunpack.c.l.s4 1934713408
    %v1084 = vunpack.c.0.s8 %v1083
    %v1085 = vlaneseq
    %v1086 = vshrl.u32 %v1085, 7
    %v1087 = vsub.s32 %v1084, %v1086
    %v1088 = vrot.slane %v1080, %v1087
    %v1090 = vunpack.c.l.s4 1934713408
    %v1091 = vunpack.c.0.s8 %v1090
    %v1092 = vlaneseq
    %v1093 = vshrl.u32 %v1092, 7
    %v1094 = vsub.s32 %v1091, %v1093
    %v1095 = vrot.slane %v1081, %v1094
    %v1096 = vcombine.low %v1064, %v1079
    %v1097 = vcombine.high %v1064, %v1079
    %v1099 = vunpack.c.l.s4 1934713408
    %v1100 = vunpack.c.0.s8 %v1099
    %v1101 = vlaneseq
    %v1102 = vshrl.u32 %v1101, 7
    %v1103 = vsub.s32 %v1100, %v1102
    %v1104 = vrot.slane %v1096, %v1103
    %v1106 = vunpack.c.l.s4 1934713408
    %v1107 = vunpack.c.0.s8 %v1106
    %v1108 = vlaneseq
    %v1109 = vshrl.u32 %v1108, 7
    %v1110 = vsub.s32 %v1107, %v1109
    %v1111 = vrot.slane %v1097, %v1110
    %v1112 = vcombine.high %v1088, 0
    %v1113 = vcombine.high %v1095, 0
    %v1114 = vcombine.high %v1104, 0
    %v1115 = vcombine.high %v1111, 0
    %v1116 = vcombine.high %v970, %v427
    %v1118 = vunpack.c.l.s4 1983009808
    %v1119 = vunpack.c.0.s8 %v1118
    %v1120 = vlaneseq
    %v1121 = vshrl.u32 %v1120, 7
    %v1122 = vsub.s32 %v1119, %v1121
    %v1123 = vrot.slane %v970, %v1122
    %v1125 = vunpack.c.l.s4 1983009808
    %v1126 = vunpack.c.0.s8 %v1125
    %v1127 = vlaneseq
    %v1128 = vshrl.u32 %v1127, 7
    %v1129 = vsub.s32 %v1126, %v1128
    %v1130 = vrot.slane %v1116, %v1129
    %v1131 = vcombine.high %v978, %v427
    %v1133 = vunpack.c.l.s4 1983009808
    %v1134 = vunpack.c.0.s8 %v1133
    %v1135 = vlaneseq
    %v1136 = vshrl.u32 %v1135, 7
    %v1137 = vsub.s32 %v1134, %v1136
    %v1138 = vrot.slane %v978, %v1137
    %v1140 = vunpack.c.l.s4 1983009808
    %v1141 = vunpack.c.0.s8 %v1140
    %v1142 = vlaneseq
    %v1143 = vshrl.u32 %v1142, 7
    %v1144 = vsub.s32 %v1141, %v1143
    %v1145 = vrot.slane %v1131, %v1144
    %v1146 = vcombine.low %v1123, %v1138
    %v1147 = vcombine.high %v1123, %v1138
    %v1149 = vunpack.c.l.s4 1934713408
    %v1150 = vunpack.c.0.s8 %v1149
    %v1151 = vlaneseq
    %v1152 = vshrl.u32 %v1151, 7
    %v1153 = vsub.s32 %v1150, %v1152
    %v1154 = vrot.slane %v1146, %v1153
    %v1156 = vunpack.c.l.s4 1934713408
    %v1157 = vunpack.c.0.s8 %v1156
    %v1158 = vlaneseq
    %v1159 = vshrl.u32 %v1158, 7
    %v1160 = vsub.s32 %v1157, %v1159
    %v1161 = vrot.slane %v1147, %v1160
    %v1162 = vcombine.low %v1130, %v1145
    %v1163 = vcombine.high %v1130, %v1145
    %v1165 = vunpack.c.l.s4 1934713408
    %v1166 = vunpack.c.0.s8 %v1165
    %v1167 = vlaneseq
    %v1168 = vshrl.u32 %v1167, 7
    %v1169 = vsub.s32 %v1166, %v1168
    %v1170 = vrot.slane %v1162, %v1169
    %v1172 = vunpack.c.l.s4 1934713408
    %v1173 = vunpack.c.0.s8 %v1172
    %v1174 = vlaneseq
    %v1175 = vshrl.u32 %v1174, 7
    %v1176 = vsub.s32 %v1173, %v1175
    %v1177 = vrot.slane %v1163, %v1176
    %v1178 = vcombine.high %v1154, 0
    %v1179 = vcombine.high %v1161, 0
    %v1180 = vcombine.high %v1170, 0
    %v1181 = vcombine.high %v1177, 0
    %v1182 = vcombine.high %v974, %v430
    %v1184 = vunpack.c.l.s4 1983009808
    %v1185 = vunpack.c.0.s8 %v1184
    %v1186 = vlaneseq
    %v1187 = vshrl.u32 %v1186, 7
    %v1188 = vsub.s32 %v1185, %v1187
    %v1189 = vrot.slane %v974, %v1188
    %v1191 = vunpack.c.l.s4 1983009808
    %v1192 = vunpack.c.0.s8 %v1191
    %v1193 = vlaneseq
    %v1194 = vshrl.u32 %v1193, 7
    %v1195 = vsub.s32 %v1192, %v1194
    %v1196 = vrot.slane %v1182, %v1195
    %v1197 = vcombine.high %v982, %v430
    %v1199 = vunpack.c.l.s4 1983009808
    %v1200 = vunpack.c.0.s8 %v1199
    %v1201 = vlaneseq
    %v1202 = vshrl.u32 %v1201, 7
    %v1203 = vsub.s32 %v1200, %v1202
    %v1204 = vrot.slane %v982, %v1203
    %v1206 = vunpack.c.l.s4 1983009808
    %v1207 = vunpack.c.0.s8 %v1206
    %v1208 = vlaneseq
    %v1209 = vshrl.u32 %v1208, 7
    %v1210 = vsub.s32 %v1207, %v1209
    %v1211 = vrot.slane %v1197, %v1210
    %v1212 = vcombine.low %v1189, %v1204
    %v1213 = vcombine.high %v1189, %v1204
    %v1215 = vunpack.c.l.s4 1934713408
    %v1216 = vunpack.c.0.s8 %v1215
    %v1217 = vlaneseq
    %v1218 = vshrl.u32 %v1217, 7
    %v1219 = vsub.s32 %v1216, %v1218
    %v1220 = vrot.slane %v1212, %v1219
    %v1222 = vunpack.c.l.s4 1934713408
    %v1223 = vunpack.c.0.s8 %v1222
    %v1224 = vlaneseq
    %v1225 = vshrl.u32 %v1224, 7
    %v1226 = vsub.s32 %v1223, %v1225
    %v1227 = vrot.slane %v1213, %v1226
    %v1228 = vcombine.low %v1196, %v1211
    %v1229 = vcombine.high %v1196, %v1211
    %v1231 = vunpack.c.l.s4 1934713408
    %v1232 = vunpack.c.0.s8 %v1231
    %v1233 = vlaneseq
    %v1234 = vshrl.u32 %v1233, 7
    %v1235 = vsub.s32 %v1232, %v1234
    %v1236 = vrot.slane %v1228, %v1235
    %v1238 = vunpack.c.l.s4 1934713408
    %v1239 = vunpack.c.0.s8 %v1238
    %v1240 = vlaneseq
    %v1241 = vshrl.u32 %v1240, 7
    %v1242 = vsub.s32 %v1239, %v1241
    %v1243 = vrot.slane %v1229, %v1242
    %v1244 = vcombine.high %v1220, 0
    %v1245 = vcombine.high %v1227, 0
    %v1246 = vcombine.high %v1236, 0
    %v1247 = vcombine.high %v1243, 0
    %v1248 = vcombine.low %v1022, %v1029
    %v1250 = vunpack.c.l.s4 1983009808
    %v1251 = vunpack.c.0.s8 %v1250
    %v1252 = vlaneseq
    %v1253 = vshrl.u32 %v1252, 7
    %v1254 = vsub.s32 %v1251, %v1253
    %v1255 = vrot.slane %v1248, %v1254
    %v1256 = vcombine.low %v1046, %v1047
    %v1258 = vunpack.c.l.s4 1983009808
    %v1259 = vunpack.c.0.s8 %v1258
    %v1260 = vlaneseq
    %v1261 = vshrl.u32 %v1260, 7
    %v1262 = vsub.s32 %v1259, %v1261
    %v1263 = vrot.slane %v1256, %v1262
    %v1264 = vcombine.low %v1038, %v1045
    %v1266 = vunpack.c.l.s4 1983009808
    %v1267 = vunpack.c.0.s8 %v1266
    %v1268 = vlaneseq
    %v1269 = vshrl.u32 %v1268, 7
    %v1270 = vsub.s32 %v1267, %v1269
    %v1271 = vrot.slane %v1264, %v1270
    %v1272 = vcombine.low %v1048, %v1049
    %v1274 = vunpack.c.l.s4 1983009808
    %v1275 = vunpack.c.0.s8 %v1274
    %v1276 = vlaneseq
    %v1277 = vshrl.u32 %v1276, 7
    %v1278 = vsub.s32 %v1275, %v1277
    %v1279 = vrot.slane %v1272, %v1278
    %v1280 = vcombine.low %v1255, %v1263
    %v1282 = vunpack.c.l.s4 1934713408
    %v1283 = vunpack.c.0.s8 %v1282
    %v1284 = vlaneseq
    %v1285 = vshrl.u32 %v1284, 7
    %v1286 = vsub.s32 %v1283, %v1285
    %v1287 = vrot.slane %v1280, %v1286
    %v1288 = vcombine.low %v1271, %v1279
    %v1290 = vunpack.c.l.s4 1934713408
    %v1291 = vunpack.c.0.s8 %v1290
    %v1292 = vlaneseq
    %v1293 = vshrl.u32 %v1292, 7
    %v1294 = vsub.s32 %v1291, %v1293
    %v1295 = vrot.slane %v1288, %v1294
    %v1296 = vcombine.low %v1287, %v1295
    %v1297 = vcombine.high %v1287, %v1295
    %v1298 = vcombine.low %v1088, %v1095
    %v1300 = vunpack.c.l.s4 1983009808
    %v1301 = vunpack.c.0.s8 %v1300
    %v1302 = vlaneseq
    %v1303 = vshrl.u32 %v1302, 7
    %v1304 = vsub.s32 %v1301, %v1303
    %v1305 = vrot.slane %v1298, %v1304
    %v1306 = vcombine.low %v1112, %v1113
    %v1308 = vunpack.c.l.s4 1983009808
    %v1309 = vunpack.c.0.s8 %v1308
    %v1310 = vlaneseq
    %v1311 = vshrl.u32 %v1310, 7
    %v1312 = vsub.s32 %v1309, %v1311
    %v1313 = vrot.slane %v1306, %v1312
    %v1314 = vcombine.low %v1104, %v1111
    %v1316 = vunpack.c.l.s4 1983009808
    %v1317 = vunpack.c.0.s8 %v1316
    %v1318 = vlaneseq
    %v1319 = vshrl.u32 %v1318, 7
    %v1320 = vsub.s32 %v1317, %v1319
    %v1321 = vrot.slane %v1314, %v1320
    %v1322 = vcombine.low %v1114, %v1115
    %v1324 = vunpack.c.l.s4 1983009808
    %v1325 = vunpack.c.0.s8 %v1324
    %v1326 = vlaneseq
    %v1327 = vshrl.u32 %v1326, 7
    %v1328 = vsub.s32 %v1325, %v1327
    %v1329 = vrot.slane %v1322, %v1328
    %v1330 = vcombine.low %v1305, %v1313
    %v1332 = vunpack.c.l.s4 1934713408
    %v1333 = vunpack.c.0.s8 %v1332
    %v1334 = vlaneseq
    %v1335 = vshrl.u32 %v1334, 7
    %v1336 = vsub.s32 %v1333, %v1335
    %v1337 = vrot.slane %v1330, %v1336
    %v1338 = vcombine.low %v1321, %v1329
    %v1340 = vunpack.c.l.s4 1934713408
    %v1341 = vunpack.c.0.s8 %v1340
    %v1342 = vlaneseq
    %v1343 = vshrl.u32 %v1342, 7
    %v1344 = vsub.s32 %v1341, %v1343
    %v1345 = vrot.slane %v1338, %v1344
    %v1346 = vcombine.low %v1337, %v1345
    %v1347 = vcombine.high %v1337, %v1345
    %v1348 = vcombine.low %v1154, %v1161
    %v1350 = vunpack.c.l.s4 1983009808
    %v1351 = vunpack.c.0.s8 %v1350
    %v1352 = vlaneseq
    %v1353 = vshrl.u32 %v1352, 7
    %v1354 = vsub.s32 %v1351, %v1353
    %v1355 = vrot.slane %v1348, %v1354
    %v1356 = vcombine.low %v1178, %v1179
    %v1358 = vunpack.c.l.s4 1983009808
    %v1359 = vunpack.c.0.s8 %v1358
    %v1360 = vlaneseq
    %v1361 = vshrl.u32 %v1360, 7
    %v1362 = vsub.s32 %v1359, %v1361
    %v1363 = vrot.slane %v1356, %v1362
    %v1364 = vcombine.low %v1170, %v1177
    %v1366 = vunpack.c.l.s4 1983009808
    %v1367 = vunpack.c.0.s8 %v1366
    %v1368 = vlaneseq
    %v1369 = vshrl.u32 %v1368, 7
    %v1370 = vsub.s32 %v1367, %v1369
    %v1371 = vrot.slane %v1364, %v1370
    %v1372 = vcombine.low %v1180, %v1181
    %v1374 = vunpack.c.l.s4 1983009808
    %v1375 = vunpack.c.0.s8 %v1374
    %v1376 = vlaneseq
    %v1377 = vshrl.u32 %v1376, 7
    %v1378 = vsub.s32 %v1375, %v1377
    %v1379 = vrot.slane %v1372, %v1378
    %v1380 = vcombine.low %v1355, %v1363
    %v1382 = vunpack.c.l.s4 1934713408
    %v1383 = vunpack.c.0.s8 %v1382
    %v1384 = vlaneseq
    %v1385 = vshrl.u32 %v1384, 7
    %v1386 = vsub.s32 %v1383, %v1385
    %v1387 = vrot.slane %v1380, %v1386
    %v1388 = vcombine.low %v1371, %v1379
    %v1390 = vunpack.c.l.s4 1934713408
    %v1391 = vunpack.c.0.s8 %v1390
    %v1392 = vlaneseq
    %v1393 = vshrl.u32 %v1392, 7
    %v1394 = vsub.s32 %v1391, %v1393
    %v1395 = vrot.slane %v1388, %v1394
    %v1396 = vcombine.low %v1387, %v1395
    %v1397 = vcombine.high %v1387, %v1395
    %v1398 = vcombine.low %v1220, %v1227
    %v1400 = vunpack.c.l.s4 1983009808
    %v1401 = vunpack.c.0.s8 %v1400
    %v1402 = vlaneseq
    %v1403 = vshrl.u32 %v1402, 7
    %v1404 = vsub.s32 %v1401, %v1403
    %v1405 = vrot.slane %v1398, %v1404
    %v1406 = vcombine.low %v1244, %v1245
    %v1408 = vunpack.c.l.s4 1983009808
    %v1409 = vunpack.c.0.s8 %v1408
    %v1410 = vlaneseq
    %v1411 = vshrl.u32 %v1410, 7
    %v1412 = vsub.s32 %v1409, %v1411
    %v1413 = vrot.slane %v1406, %v1412
    %v1414 = vcombine.low %v1236, %v1243
    %v1416 = vunpack.c.l.s4 1983009808
    %v1417 = vunpack.c.0.s8 %v1416
    %v1418 = vlaneseq
    %v1419 = vshrl.u32 %v1418, 7
    %v1420 = vsub.s32 %v1417, %v1419
    %v1421 = vrot.slane %v1414, %v1420
    %v1422 = vcombine.low %v1246, %v1247
    %v1424 = vunpack.c.l.s4 1983009808
    %v1425 = vunpack.c.0.s8 %v1424
    %v1426 = vlaneseq
    %v1427 = vshrl.u32 %v1426, 7
    %v1428 = vsub.s32 %v1425, %v1427
    %v1429 = vrot.slane %v1422, %v1428
    %v1430 = vcombine.low %v1405, %v1413
    %v1432 = vunpack.c.l.s4 1934713408
    %v1433 = vunpack.c.0.s8 %v1432
    %v1434 = vlaneseq
    %v1435 = vshrl.u32 %v1434, 7
    %v1436 = vsub.s32 %v1433, %v1435
    %v1437 = vrot.slane %v1430, %v1436
    %v1438 = vcombine.low %v1421, %v1429
    %v1440 = vunpack.c.l.s4 1934713408
    %v1441 = vunpack.c.0.s8 %v1440
    %v1442 = vlaneseq
    %v1443 = vshrl.u32 %v1442, 7
    %v1444 = vsub.s32 %v1441, %v1443
    %v1445 = vrot.slane %v1438, %v1444
    %v1446 = vcombine.low %v1437, %v1445
    %v1447 = vcombine.high %v1437, %v1445
    %v1450 = vpack.i.b16 %v1346, %v1296
    %v1451 = vshrl.u32 %v1296, 16
    %v1452 = vshrl.u32 %v1346, 16
    %v1453 = vpack.i.b16 %v1452, %v1451
    %v1456 = vpack.i.b16 %v1347, %v1297
    %v1457 = vshrl.u32 %v1297, 16
    %v1458 = vshrl.u32 %v1347, 16
    %v1459 = vpack.i.b16 %v1458, %v1457
    %v1462 = vpack.i.b16 %v1446, %v1396
    %v1463 = vshrl.u32 %v1396, 16
    %v1464 = vshrl.u32 %v1446, 16
    %v1465 = vpack.i.b16 %v1464, %v1463
    %v1468 = vpack.i.b16 %v1447, %v1397
    %v1469 = vshrl.u32 %v1397, 16
    %v1470 = vshrl.u32 %v1447, 16
    %v1471 = vpack.i.b16 %v1470, %v1469
    %v1472 = vpack.c.bf16 %v360, %v357
    %v1473 = vpack.c.bf16 %v368, %v365
    %1476 = vrot.lane.b32.xlu0 %v1472, 96
    %v1477 = vpop.permute.xlu0 %1476
    %1478 = vrot.lane.b32.xlu0 %v1473, 96
    %v1479 = vpop.permute.xlu0 %1478
    %1480 = vrot.lane.b32.xlu0 %v1472, 64
    %v1481 = vpop.permute.xlu0 %1480
    %1482 = vrot.lane.b32.xlu0 %v1473, 64
    %v1483 = vpop.permute.xlu0 %1482
    %1484 = vrot.lane.b32.xlu0 %v1472, 32
    %v1485 = vpop.permute.xlu0 %1484
    %1486 = vrot.lane.b32.xlu0 %v1473, 32
    %v1487 = vpop.permute.xlu0 %1486
    %v1490 = vpack.i.b16 %v1477, %v1472
    %v1492 = vshrl.u32 %v1472, 16
    %v1493 = vshrl.u32 %v1477, 16
    %v1494 = vpack.i.b16 %v1493, %v1492
    %v1498 = vpack.i.b16 %v1485, %v1481
    %v1500 = vshrl.u32 %v1481, 16
    %v1501 = vshrl.u32 %v1485, 16
    %v1502 = vpack.i.b16 %v1501, %v1500
    %v1506 = vpack.i.b16 %v1479, %v1473
    %v1508 = vshrl.u32 %v1473, 16
    %v1509 = vshrl.u32 %v1479, 16
    %v1510 = vpack.i.b16 %v1509, %v1508
    %v1514 = vpack.i.b16 %v1487, %v1483
    %v1516 = vshrl.u32 %v1483, 16
    %v1517 = vshrl.u32 %v1487, 16
    %v1518 = vpack.i.b16 %v1517, %v1516
    %v1520 = vcombine.high %v1490, %v427
    %v1522 = vunpack.c.l.s4 1983009808
    %v1523 = vunpack.c.0.s8 %v1522
    %v1524 = vlaneseq
    %v1525 = vshrl.u32 %v1524, 7
    %v1526 = vsub.s32 %v1523, %v1525
    %v1527 = vrot.slane %v1490, %v1526
    %v1529 = vunpack.c.l.s4 1983009808
    %v1530 = vunpack.c.0.s8 %v1529
    %v1531 = vlaneseq
    %v1532 = vshrl.u32 %v1531, 7
    %v1533 = vsub.s32 %v1530, %v1532
    %v1534 = vrot.slane %v1520, %v1533
    %v1535 = vcombine.high %v1498, %v427
    %v1537 = vunpack.c.l.s4 1983009808
    %v1538 = vunpack.c.0.s8 %v1537
    %v1539 = vlaneseq
    %v1540 = vshrl.u32 %v1539, 7
    %v1541 = vsub.s32 %v1538, %v1540
    %v1542 = vrot.slane %v1498, %v1541
    %v1544 = vunpack.c.l.s4 1983009808
    %v1545 = vunpack.c.0.s8 %v1544
    %v1546 = vlaneseq
    %v1547 = vshrl.u32 %v1546, 7
    %v1548 = vsub.s32 %v1545, %v1547
    %v1549 = vrot.slane %v1535, %v1548
    %v1550 = vcombine.low %v1527, %v1542
    %v1551 = vcombine.high %v1527, %v1542
    %v1553 = vunpack.c.l.s4 1934713408
    %v1554 = vunpack.c.0.s8 %v1553
    %v1555 = vlaneseq
    %v1556 = vshrl.u32 %v1555, 7
    %v1557 = vsub.s32 %v1554, %v1556
    %v1558 = vrot.slane %v1550, %v1557
    %v1560 = vunpack.c.l.s4 1934713408
    %v1561 = vunpack.c.0.s8 %v1560
    %v1562 = vlaneseq
    %v1563 = vshrl.u32 %v1562, 7
    %v1564 = vsub.s32 %v1561, %v1563
    %v1565 = vrot.slane %v1551, %v1564
    %v1566 = vcombine.low %v1534, %v1549
    %v1567 = vcombine.high %v1534, %v1549
    %v1569 = vunpack.c.l.s4 1934713408
    %v1570 = vunpack.c.0.s8 %v1569
    %v1571 = vlaneseq
    %v1572 = vshrl.u32 %v1571, 7
    %v1573 = vsub.s32 %v1570, %v1572
    %v1574 = vrot.slane %v1566, %v1573
    %v1576 = vunpack.c.l.s4 1934713408
    %v1577 = vunpack.c.0.s8 %v1576
    %v1578 = vlaneseq
    %v1579 = vshrl.u32 %v1578, 7
    %v1580 = vsub.s32 %v1577, %v1579
    %v1581 = vrot.slane %v1567, %v1580
    %v1582 = vcombine.high %v1558, 0
    %v1583 = vcombine.high %v1565, 0
    %v1584 = vcombine.high %v1574, 0
    %v1585 = vcombine.high %v1581, 0
    %v1586 = vcombine.high %v1494, %v430
    %v1588 = vunpack.c.l.s4 1983009808
    %v1589 = vunpack.c.0.s8 %v1588
    %v1590 = vlaneseq
    %v1591 = vshrl.u32 %v1590, 7
    %v1592 = vsub.s32 %v1589, %v1591
    %v1593 = vrot.slane %v1494, %v1592
    %v1595 = vunpack.c.l.s4 1983009808
    %v1596 = vunpack.c.0.s8 %v1595
    %v1597 = vlaneseq
    %v1598 = vshrl.u32 %v1597, 7
    %v1599 = vsub.s32 %v1596, %v1598
    %v1600 = vrot.slane %v1586, %v1599
    %v1601 = vcombine.high %v1502, %v430
    %v1603 = vunpack.c.l.s4 1983009808
    %v1604 = vunpack.c.0.s8 %v1603
    %v1605 = vlaneseq
    %v1606 = vshrl.u32 %v1605, 7
    %v1607 = vsub.s32 %v1604, %v1606
    %v1608 = vrot.slane %v1502, %v1607
    %v1610 = vunpack.c.l.s4 1983009808
    %v1611 = vunpack.c.0.s8 %v1610
    %v1612 = vlaneseq
    %v1613 = vshrl.u32 %v1612, 7
    %v1614 = vsub.s32 %v1611, %v1613
    %v1615 = vrot.slane %v1601, %v1614
    %v1616 = vcombine.low %v1593, %v1608
    %v1617 = vcombine.high %v1593, %v1608
    %v1619 = vunpack.c.l.s4 1934713408
    %v1620 = vunpack.c.0.s8 %v1619
    %v1621 = vlaneseq
    %v1622 = vshrl.u32 %v1621, 7
    %v1623 = vsub.s32 %v1620, %v1622
    %v1624 = vrot.slane %v1616, %v1623
    %v1626 = vunpack.c.l.s4 1934713408
    %v1627 = vunpack.c.0.s8 %v1626
    %v1628 = vlaneseq
    %v1629 = vshrl.u32 %v1628, 7
    %v1630 = vsub.s32 %v1627, %v1629
    %v1631 = vrot.slane %v1617, %v1630
    %v1632 = vcombine.low %v1600, %v1615
    %v1633 = vcombine.high %v1600, %v1615
    %v1635 = vunpack.c.l.s4 1934713408
    %v1636 = vunpack.c.0.s8 %v1635
    %v1637 = vlaneseq
    %v1638 = vshrl.u32 %v1637, 7
    %v1639 = vsub.s32 %v1636, %v1638
    %v1640 = vrot.slane %v1632, %v1639
    %v1642 = vunpack.c.l.s4 1934713408
    %v1643 = vunpack.c.0.s8 %v1642
    %v1644 = vlaneseq
    %v1645 = vshrl.u32 %v1644, 7
    %v1646 = vsub.s32 %v1643, %v1645
    %v1647 = vrot.slane %v1633, %v1646
    %v1648 = vcombine.high %v1624, 0
    %v1649 = vcombine.high %v1631, 0
    %v1650 = vcombine.high %v1640, 0
    %v1651 = vcombine.high %v1647, 0
    %v1652 = vcombine.high %v1506, %v427
    %v1654 = vunpack.c.l.s4 1983009808
    %v1655 = vunpack.c.0.s8 %v1654
    %v1656 = vlaneseq
    %v1657 = vshrl.u32 %v1656, 7
    %v1658 = vsub.s32 %v1655, %v1657
    %v1659 = vrot.slane %v1506, %v1658
    %v1661 = vunpack.c.l.s4 1983009808
    %v1662 = vunpack.c.0.s8 %v1661
    %v1663 = vlaneseq
    %v1664 = vshrl.u32 %v1663, 7
    %v1665 = vsub.s32 %v1662, %v1664
    %v1666 = vrot.slane %v1652, %v1665
    %v1667 = vcombine.high %v1514, %v427
    %v1669 = vunpack.c.l.s4 1983009808
    %v1670 = vunpack.c.0.s8 %v1669
    %v1671 = vlaneseq
    %v1672 = vshrl.u32 %v1671, 7
    %v1673 = vsub.s32 %v1670, %v1672
    %v1674 = vrot.slane %v1514, %v1673
    %v1676 = vunpack.c.l.s4 1983009808
    %v1677 = vunpack.c.0.s8 %v1676
    %v1678 = vlaneseq
    %v1679 = vshrl.u32 %v1678, 7
    %v1680 = vsub.s32 %v1677, %v1679
    %v1681 = vrot.slane %v1667, %v1680
    %v1682 = vcombine.low %v1659, %v1674
    %v1683 = vcombine.high %v1659, %v1674
    %v1685 = vunpack.c.l.s4 1934713408
    %v1686 = vunpack.c.0.s8 %v1685
    %v1687 = vlaneseq
    %v1688 = vshrl.u32 %v1687, 7
    %v1689 = vsub.s32 %v1686, %v1688
    %v1690 = vrot.slane %v1682, %v1689
    %v1692 = vunpack.c.l.s4 1934713408
    %v1693 = vunpack.c.0.s8 %v1692
    %v1694 = vlaneseq
    %v1695 = vshrl.u32 %v1694, 7
    %v1696 = vsub.s32 %v1693, %v1695
    %v1697 = vrot.slane %v1683, %v1696
    %v1698 = vcombine.low %v1666, %v1681
    %v1699 = vcombine.high %v1666, %v1681
    %v1701 = vunpack.c.l.s4 1934713408
    %v1702 = vunpack.c.0.s8 %v1701
    %v1703 = vlaneseq
    %v1704 = vshrl.u32 %v1703, 7
    %v1705 = vsub.s32 %v1702, %v1704
    %v1706 = vrot.slane %v1698, %v1705
    %v1708 = vunpack.c.l.s4 1934713408
    %v1709 = vunpack.c.0.s8 %v1708
    %v1710 = vlaneseq
    %v1711 = vshrl.u32 %v1710, 7
    %v1712 = vsub.s32 %v1709, %v1711
    %v1713 = vrot.slane %v1699, %v1712
    %v1714 = vcombine.high %v1690, 0
    %v1715 = vcombine.high %v1697, 0
    %v1716 = vcombine.high %v1706, 0
    %v1717 = vcombine.high %v1713, 0
    %v1718 = vcombine.high %v1510, %v430
    %v1720 = vunpack.c.l.s4 1983009808
    %v1721 = vunpack.c.0.s8 %v1720
    %v1722 = vlaneseq
    %v1723 = vshrl.u32 %v1722, 7
    %v1724 = vsub.s32 %v1721, %v1723
    %v1725 = vrot.slane %v1510, %v1724
    %v1727 = vunpack.c.l.s4 1983009808
    %v1728 = vunpack.c.0.s8 %v1727
    %v1729 = vlaneseq
    %v1730 = vshrl.u32 %v1729, 7
    %v1731 = vsub.s32 %v1728, %v1730
    %v1732 = vrot.slane %v1718, %v1731
    %v1733 = vcombine.high %v1518, %v430
    %v1735 = vunpack.c.l.s4 1983009808
    %v1736 = vunpack.c.0.s8 %v1735
    %v1737 = vlaneseq
    %v1738 = vshrl.u32 %v1737, 7
    %v1739 = vsub.s32 %v1736, %v1738
    %v1740 = vrot.slane %v1518, %v1739
    %v1742 = vunpack.c.l.s4 1983009808
    %v1743 = vunpack.c.0.s8 %v1742
    %v1744 = vlaneseq
    %v1745 = vshrl.u32 %v1744, 7
    %v1746 = vsub.s32 %v1743, %v1745
    %v1747 = vrot.slane %v1733, %v1746
    %v1748 = vcombine.low %v1725, %v1740
    %v1749 = vcombine.high %v1725, %v1740
    %v1751 = vunpack.c.l.s4 1934713408
    %v1752 = vunpack.c.0.s8 %v1751
    %v1753 = vlaneseq
    %v1754 = vshrl.u32 %v1753, 7
    %v1755 = vsub.s32 %v1752, %v1754
    %v1756 = vrot.slane %v1748, %v1755
    %v1758 = vunpack.c.l.s4 1934713408
    %v1759 = vunpack.c.0.s8 %v1758
    %v1760 = vlaneseq
    %v1761 = vshrl.u32 %v1760, 7
    %v1762 = vsub.s32 %v1759, %v1761
    %v1763 = vrot.slane %v1749, %v1762
    %v1764 = vcombine.low %v1732, %v1747
    %v1765 = vcombine.high %v1732, %v1747
    %v1767 = vunpack.c.l.s4 1934713408
    %v1768 = vunpack.c.0.s8 %v1767
    %v1769 = vlaneseq
    %v1770 = vshrl.u32 %v1769, 7
    %v1771 = vsub.s32 %v1768, %v1770
    %v1772 = vrot.slane %v1764, %v1771
    %v1774 = vunpack.c.l.s4 1934713408
    %v1775 = vunpack.c.0.s8 %v1774
    %v1776 = vlaneseq
    %v1777 = vshrl.u32 %v1776, 7
    %v1778 = vsub.s32 %v1775, %v1777
    %v1779 = vrot.slane %v1765, %v1778
    %v1780 = vcombine.high %v1756, 0
    %v1781 = vcombine.high %v1763, 0
    %v1782 = vcombine.high %v1772, 0
    %v1783 = vcombine.high %v1779, 0
    %v1784 = vcombine.low %v1558, %v1565
    %v1786 = vunpack.c.l.s4 1983009808
    %v1787 = vunpack.c.0.s8 %v1786
    %v1788 = vlaneseq
    %v1789 = vshrl.u32 %v1788, 7
    %v1790 = vsub.s32 %v1787, %v1789
    %v1791 = vrot.slane %v1784, %v1790
    %v1792 = vcombine.low %v1582, %v1583
    %v1794 = vunpack.c.l.s4 1983009808
    %v1795 = vunpack.c.0.s8 %v1794
    %v1796 = vlaneseq
    %v1797 = vshrl.u32 %v1796, 7
    %v1798 = vsub.s32 %v1795, %v1797
    %v1799 = vrot.slane %v1792, %v1798
    %v1800 = vcombine.low %v1574, %v1581
    %v1802 = vunpack.c.l.s4 1983009808
    %v1803 = vunpack.c.0.s8 %v1802
    %v1804 = vlaneseq
    %v1805 = vshrl.u32 %v1804, 7
    %v1806 = vsub.s32 %v1803, %v1805
    %v1807 = vrot.slane %v1800, %v1806
    %v1808 = vcombine.low %v1584, %v1585
    %v1810 = vunpack.c.l.s4 1983009808
    %v1811 = vunpack.c.0.s8 %v1810
    %v1812 = vlaneseq
    %v1813 = vshrl.u32 %v1812, 7
    %v1814 = vsub.s32 %v1811, %v1813
    %v1815 = vrot.slane %v1808, %v1814
    %v1816 = vcombine.low %v1791, %v1799
    %v1818 = vunpack.c.l.s4 1934713408
    %v1819 = vunpack.c.0.s8 %v1818
    %v1820 = vlaneseq
    %v1821 = vshrl.u32 %v1820, 7
    %v1822 = vsub.s32 %v1819, %v1821
    %v1823 = vrot.slane %v1816, %v1822
    %v1824 = vcombine.low %v1807, %v1815
    %v1826 = vunpack.c.l.s4 1934713408
    %v1827 = vunpack.c.0.s8 %v1826
    %v1828 = vlaneseq
    %v1829 = vshrl.u32 %v1828, 7
    %v1830 = vsub.s32 %v1827, %v1829
    %v1831 = vrot.slane %v1824, %v1830
    %v1832 = vcombine.low %v1823, %v1831
    %v1833 = vcombine.high %v1823, %v1831
    %v1834 = vcombine.low %v1624, %v1631
    %v1836 = vunpack.c.l.s4 1983009808
    %v1837 = vunpack.c.0.s8 %v1836
    %v1838 = vlaneseq
    %v1839 = vshrl.u32 %v1838, 7
    %v1840 = vsub.s32 %v1837, %v1839
    %v1841 = vrot.slane %v1834, %v1840
    %v1842 = vcombine.low %v1648, %v1649
    %v1844 = vunpack.c.l.s4 1983009808
    %v1845 = vunpack.c.0.s8 %v1844
    %v1846 = vlaneseq
    %v1847 = vshrl.u32 %v1846, 7
    %v1848 = vsub.s32 %v1845, %v1847
    %v1849 = vrot.slane %v1842, %v1848
    %v1850 = vcombine.low %v1640, %v1647
    %v1852 = vunpack.c.l.s4 1983009808
    %v1853 = vunpack.c.0.s8 %v1852
    %v1854 = vlaneseq
    %v1855 = vshrl.u32 %v1854, 7
    %v1856 = vsub.s32 %v1853, %v1855
    %v1857 = vrot.slane %v1850, %v1856
    %v1858 = vcombine.low %v1650, %v1651
    %v1860 = vunpack.c.l.s4 1983009808
    %v1861 = vunpack.c.0.s8 %v1860
    %v1862 = vlaneseq
    %v1863 = vshrl.u32 %v1862, 7
    %v1864 = vsub.s32 %v1861, %v1863
    %v1865 = vrot.slane %v1858, %v1864
    %v1866 = vcombine.low %v1841, %v1849
    %v1868 = vunpack.c.l.s4 1934713408
    %v1869 = vunpack.c.0.s8 %v1868
    %v1870 = vlaneseq
    %v1871 = vshrl.u32 %v1870, 7
    %v1872 = vsub.s32 %v1869, %v1871
    %v1873 = vrot.slane %v1866, %v1872
    %v1874 = vcombine.low %v1857, %v1865
    %v1876 = vunpack.c.l.s4 1934713408
    %v1877 = vunpack.c.0.s8 %v1876
    %v1878 = vlaneseq
    %v1879 = vshrl.u32 %v1878, 7
    %v1880 = vsub.s32 %v1877, %v1879
    %v1881 = vrot.slane %v1874, %v1880
    %v1882 = vcombine.low %v1873, %v1881
    %v1883 = vcombine.high %v1873, %v1881
    %v1884 = vcombine.low %v1690, %v1697
    %v1886 = vunpack.c.l.s4 1983009808
    %v1887 = vunpack.c.0.s8 %v1886
    %v1888 = vlaneseq
    %v1889 = vshrl.u32 %v1888, 7
    %v1890 = vsub.s32 %v1887, %v1889
    %v1891 = vrot.slane %v1884, %v1890
    %v1892 = vcombine.low %v1714, %v1715
    %v1894 = vunpack.c.l.s4 1983009808
    %v1895 = vunpack.c.0.s8 %v1894
    %v1896 = vlaneseq
    %v1897 = vshrl.u32 %v1896, 7
    %v1898 = vsub.s32 %v1895, %v1897
    %v1899 = vrot.slane %v1892, %v1898
    %v1900 = vcombine.low %v1706, %v1713
    %v1902 = vunpack.c.l.s4 1983009808
    %v1903 = vunpack.c.0.s8 %v1902
    %v1904 = vlaneseq
    %v1905 = vshrl.u32 %v1904, 7
    %v1906 = vsub.s32 %v1903, %v1905
    %v1907 = vrot.slane %v1900, %v1906
    %v1908 = vcombine.low %v1716, %v1717
    %v1910 = vunpack.c.l.s4 1983009808
    %v1911 = vunpack.c.0.s8 %v1910
    %v1912 = vlaneseq
    %v1913 = vshrl.u32 %v1912, 7
    %v1914 = vsub.s32 %v1911, %v1913
    %v1915 = vrot.slane %v1908, %v1914
    %v1916 = vcombine.low %v1891, %v1899
    %v1918 = vunpack.c.l.s4 1934713408
    %v1919 = vunpack.c.0.s8 %v1918
    %v1920 = vlaneseq
    %v1921 = vshrl.u32 %v1920, 7
    %v1922 = vsub.s32 %v1919, %v1921
    %v1923 = vrot.slane %v1916, %v1922
    %v1924 = vcombine.low %v1907, %v1915
    %v1926 = vunpack.c.l.s4 1934713408
    %v1927 = vunpack.c.0.s8 %v1926
    %v1928 = vlaneseq
    %v1929 = vshrl.u32 %v1928, 7
    %v1930 = vsub.s32 %v1927, %v1929
    %v1931 = vrot.slane %v1924, %v1930
    %v1932 = vcombine.low %v1923, %v1931
    %v1933 = vcombine.high %v1923, %v1931
    %v1934 = vcombine.low %v1756, %v1763
    %v1936 = vunpack.c.l.s4 1983009808
    %v1937 = vunpack.c.0.s8 %v1936
    %v1938 = vlaneseq
    %v1939 = vshrl.u32 %v1938, 7
    %v1940 = vsub.s32 %v1937, %v1939
    %v1941 = vrot.slane %v1934, %v1940
    %v1942 = vcombine.low %v1780, %v1781
    %v1944 = vunpack.c.l.s4 1983009808
    %v1945 = vunpack.c.0.s8 %v1944
    %v1946 = vlaneseq
    %v1947 = vshrl.u32 %v1946, 7
    %v1948 = vsub.s32 %v1945, %v1947
    %v1949 = vrot.slane %v1942, %v1948
    %v1950 = vcombine.low %v1772, %v1779
    %v1952 = vunpack.c.l.s4 1983009808
    %v1953 = vunpack.c.0.s8 %v1952
    %v1954 = vlaneseq
    %v1955 = vshrl.u32 %v1954, 7
    %v1956 = vsub.s32 %v1953, %v1955
    %v1957 = vrot.slane %v1950, %v1956
    %v1958 = vcombine.low %v1782, %v1783
    %v1960 = vunpack.c.l.s4 1983009808
    %v1961 = vunpack.c.0.s8 %v1960
    %v1962 = vlaneseq
    %v1963 = vshrl.u32 %v1962, 7
    %v1964 = vsub.s32 %v1961, %v1963
    %v1965 = vrot.slane %v1958, %v1964
    %v1966 = vcombine.low %v1941, %v1949
    %v1968 = vunpack.c.l.s4 1934713408
    %v1969 = vunpack.c.0.s8 %v1968
    %v1970 = vlaneseq
    %v1971 = vshrl.u32 %v1970, 7
    %v1972 = vsub.s32 %v1969, %v1971
    %v1973 = vrot.slane %v1966, %v1972
    %v1974 = vcombine.low %v1957, %v1965
    %v1976 = vunpack.c.l.s4 1934713408
    %v1977 = vunpack.c.0.s8 %v1976
    %v1978 = vlaneseq
    %v1979 = vshrl.u32 %v1978, 7
    %v1980 = vsub.s32 %v1977, %v1979
    %v1981 = vrot.slane %v1974, %v1980
    %v1982 = vcombine.low %v1973, %v1981
    %v1983 = vcombine.high %v1973, %v1981
    %v1986 = vpack.i.b16 %v1882, %v1832
    %v1988 = vshrl.u32 %v1832, 16
    %v1989 = vshrl.u32 %v1882, 16
    %v1990 = vpack.i.b16 %v1989, %v1988
    %v1994 = vpack.i.b16 %v1883, %v1833
    %v1996 = vshrl.u32 %v1833, 16
    %v1997 = vshrl.u32 %v1883, 16
    %v1998 = vpack.i.b16 %v1997, %v1996
    %v2002 = vpack.i.b16 %v1982, %v1932
    %v2004 = vshrl.u32 %v1932, 16
    %v2005 = vshrl.u32 %v1982, 16
    %v2006 = vpack.i.b16 %v2005, %v2004
    %v2010 = vpack.i.b16 %v1983, %v1933
    %v2012 = vshrl.u32 %v1933, 16
    %v2013 = vshrl.u32 %v1983, 16
    %v2014 = vpack.i.b16 %v2013, %v2012
    %vm2016 = vcmask 261120
    %v2018 = vsel %vm2016, %v914, 0
    %v2021 = vsel %vm2016, %v1450, 0
    %2023 = vmatprep.subr.bf16.mxu0 0
    %2024 = vmatpush1.bf16.xpose.msra.mxu0 %v2021
    %2025 = vmatprep.subr.bf16.mxu0 0
    %2026 = vmatpush1.bf16.xpose.msra.mxu0 0
    %2027 = vmatprep.subr.bf16.mxu0 0
    %2028 = vmatpush1.bf16.xpose.msra.mxu0 0
    %2029 = vmatprep.subr.bf16.mxu0 0
    %2030 = vmatpush1.bf16.xpose.msra.mxu0 0
    %2031 = vmatprep.subr.bf16.mxu0 0
    %2032 = vmatpush1.bf16.xpose.msra.mxu0 0
    %2033 = vmatprep.subr.bf16.mxu0 0
    %2034 = vmatpush1.bf16.xpose.msra.mxu0 0
    %2035 = vmatprep.subr.bf16.mxu0 0
    %2036 = vmatpush1.bf16.xpose.msra.mxu0 0
    %2037 = vmatprep.subr.bf16.mxu0 0
    %2038 = vmatpush1.bf16.xpose.msra.mxu0 0
    %2039 = vmatprep.subr.bf16.mxu0 0
    %2040 = vmatpush1.bf16.xpose.msra.mxu0 0
    %2041 = vmatprep.subr.bf16.mxu0 0
    %2042 = vmatpush1.bf16.xpose.msra.mxu0 0
    %2043 = vmatprep.subr.bf16.mxu0 0
    %2044 = vmatpush1.bf16.xpose.msra.mxu0 0
    %2045 = vmatprep.subr.bf16.mxu0 0
    %2046 = vmatpush1.bf16.xpose.msra.mxu0 0
    %2047 = vmatprep.subr.bf16.mxu0 0
    %2048 = vmatpush1.bf16.xpose.msra.mxu0 0
    %2049 = vmatprep.subr.bf16.mxu0 0
    %2050 = vmatpush1.bf16.xpose.msra.mxu0 0
    %2051 = vmatprep.subr.bf16.mxu0 0
    %2052 = vmatpush1.bf16.xpose.msra.mxu0 0
    %2053 = vmatprep.subr.bf16.mxu0 0
    %2054 = vmatpush1.bf16.xpose.msra.mxu0 0
    %2055 = vmatprep.mubr.bf16.mxu0 0
    %2056 = vmatmul.mubr.bf16.gmra.mrb[0].mxu0 %v2018
    %v2057 = vpop.f32.mrb[0].mxu0
    %v2058 = vadd.f32 0.0, %v2057
    %v2059 = vpop.f32.mrb[0].mxu0
    %v2060 = vpop.f32.mrb[0].mxu0
    %v2061 = vadd.f32 0.0, %v2060
    %v2062 = vpop.f32.mrb[0].mxu0
    %2063 = vdwg.mxu0
    %v2065 = vsel %vm2016, %v917, 0
    %v2068 = vsel %vm2016, %v1453, 0
    %2070 = vmatprep.subr.bf16.mxu0 0
    %2071 = vmatpush1.bf16.xpose.msra.mxu0 %v2068
    %2072 = vmatprep.subr.bf16.mxu0 0
    %2073 = vmatpush1.bf16.xpose.msra.mxu0 0
    %2074 = vmatprep.subr.bf16.mxu0 0
    %2075 = vmatpush1.bf16.xpose.msra.mxu0 0
    %2076 = vmatprep.subr.bf16.mxu0 0
    %2077 = vmatpush1.bf16.xpose.msra.mxu0 0
    %2078 = vmatprep.subr.bf16.mxu0 0
    %2079 = vmatpush1.bf16.xpose.msra.mxu0 0
    %2080 = vmatprep.subr.bf16.mxu0 0
    %2081 = vmatpush1.bf16.xpose.msra.mxu0 0
    %2082 = vmatprep.subr.bf16.mxu0 0
    %2083 = vmatpush1.bf16.xpose.msra.mxu0 0
    %2084 = vmatprep.subr.bf16.mxu0 0
    %2085 = vmatpush1.bf16.xpose.msra.mxu0 0
    %2086 = vmatprep.subr.bf16.mxu0 0
    %2087 = vmatpush1.bf16.xpose.msra.mxu0 0
    %2088 = vmatprep.subr.bf16.mxu0 0
    %2089 = vmatpush1.bf16.xpose.msra.mxu0 0
    %2090 = vmatprep.subr.bf16.mxu0 0
    %2091 = vmatpush1.bf16.xpose.msra.mxu0 0
    %2092 = vmatprep.subr.bf16.mxu0 0
    %2093 = vmatpush1.bf16.xpose.msra.mxu0 0
    %2094 = vmatprep.subr.bf16.mxu0 0
    %2095 = vmatpush1.bf16.xpose.msra.mxu0 0
    %2096 = vmatprep.subr.bf16.mxu0 0
    %2097 = vmatpush1.bf16.xpose.msra.mxu0 0
    %2098 = vmatprep.subr.bf16.mxu0 0
    %2099 = vmatpush1.bf16.xpose.msra.mxu0 0
    %2100 = vmatprep.subr.bf16.mxu0 0
    %2101 = vmatpush1.bf16.xpose.msra.mxu0 0
    %2102 = vmatprep.mubr.bf16.mxu0 0
    %2103 = vmatmul.mubr.bf16.gmra.mrb[0].mxu0 %v2065
    %v2104 = vpop.f32.mrb[0].mxu0
    %v2105 = vadd.f32 0.0, %v2104
    %v2106 = vpop.f32.mrb[0].mxu0
    %v2107 = vpop.f32.mrb[0].mxu0
    %v2108 = vadd.f32 0.0, %v2107
    %v2109 = vpop.f32.mrb[0].mxu0
    %2110 = vdwg.mxu0
    %v2112 = vsel %vm2016, %v920, 0
    %v2115 = vsel %vm2016, %v1456, 0
    %2117 = vmatprep.subr.bf16.mxu0 0
    %2118 = vmatpush1.bf16.xpose.msra.mxu0 %v2115
    %2119 = vmatprep.subr.bf16.mxu0 0
    %2120 = vmatpush1.bf16.xpose.msra.mxu0 0
    %2121 = vmatprep.subr.bf16.mxu0 0
    %2122 = vmatpush1.bf16.xpose.msra.mxu0 0
    %2123 = vmatprep.subr.bf16.mxu0 0
    %2124 = vmatpush1.bf16.xpose.msra.mxu0 0
    %2125 = vmatprep.subr.bf16.mxu0 0
    %2126 = vmatpush1.bf16.xpose.msra.mxu0 0
    %2127 = vmatprep.subr.bf16.mxu0 0
    %2128 = vmatpush1.bf16.xpose.msra.mxu0 0
    %2129 = vmatprep.subr.bf16.mxu0 0
    %2130 = vmatpush1.bf16.xpose.msra.mxu0 0
    %2131 = vmatprep.subr.bf16.mxu0 0
    %2132 = vmatpush1.bf16.xpose.msra.mxu0 0
    %2133 = vmatprep.subr.bf16.mxu0 0
    %2134 = vmatpush1.bf16.xpose.msra.mxu0 0
    %2135 = vmatprep.subr.bf16.mxu0 0
    %2136 = vmatpush1.bf16.xpose.msra.mxu0 0
    %2137 = vmatprep.subr.bf16.mxu0 0
    %2138 = vmatpush1.bf16.xpose.msra.mxu0 0
    %2139 = vmatprep.subr.bf16.mxu0 0
    %2140 = vmatpush1.bf16.xpose.msra.mxu0 0
    %2141 = vmatprep.subr.bf16.mxu0 0
    %2142 = vmatpush1.bf16.xpose.msra.mxu0 0
    %2143 = vmatprep.subr.bf16.mxu0 0
    %2144 = vmatpush1.bf16.xpose.msra.mxu0 0
    %2145 = vmatprep.subr.bf16.mxu0 0
    %2146 = vmatpush1.bf16.xpose.msra.mxu0 0
    %2147 = vmatprep.subr.bf16.mxu0 0
    %2148 = vmatpush1.bf16.xpose.msra.mxu0 0
    %2149 = vmatprep.mubr.bf16.mxu0 0
    %2150 = vmatmul.mubr.bf16.gmra.mrb[0].mxu0 %v2112
    %v2151 = vpop.f32.mrb[0].mxu0
    %v2152 = vadd.f32 0.0, %v2151
    %v2153 = vpop.f32.mrb[0].mxu0
    %v2154 = vpop.f32.mrb[0].mxu0
    %v2155 = vadd.f32 0.0, %v2154
    %v2156 = vpop.f32.mrb[0].mxu0
    %2157 = vdwg.mxu0
    %v2159 = vsel %vm2016, %v923, 0
    %v2162 = vsel %vm2016, %v1459, 0
    %2164 = vmatprep.subr.bf16.mxu0 0
    %2165 = vmatpush1.bf16.xpose.msra.mxu0 %v2162
    %2166 = vmatprep.subr.bf16.mxu0 0
    %2167 = vmatpush1.bf16.xpose.msra.mxu0 0
    %2168 = vmatprep.subr.bf16.mxu0 0
    %2169 = vmatpush1.bf16.xpose.msra.mxu0 0
    %2170 = vmatprep.subr.bf16.mxu0 0
    %2171 = vmatpush1.bf16.xpose.msra.mxu0 0
    %2172 = vmatprep.subr.bf16.mxu0 0
    %2173 = vmatpush1.bf16.xpose.msra.mxu0 0
    %2174 = vmatprep.subr.bf16.mxu0 0
    %2175 = vmatpush1.bf16.xpose.msra.mxu0 0
    %2176 = vmatprep.subr.bf16.mxu0 0
    %2177 = vmatpush1.bf16.xpose.msra.mxu0 0
    %2178 = vmatprep.subr.bf16.mxu0 0
    %2179 = vmatpush1.bf16.xpose.msra.mxu0 0
    %2180 = vmatprep.subr.bf16.mxu0 0
    %2181 = vmatpush1.bf16.xpose.msra.mxu0 0
    %2182 = vmatprep.subr.bf16.mxu0 0
    %2183 = vmatpush1.bf16.xpose.msra.mxu0 0
    %2184 = vmatprep.subr.bf16.mxu0 0
    %2185 = vmatpush1.bf16.xpose.msra.mxu0 0
    %2186 = vmatprep.subr.bf16.mxu0 0
    %2187 = vmatpush1.bf16.xpose.msra.mxu0 0
    %2188 = vmatprep.subr.bf16.mxu0 0
    %2189 = vmatpush1.bf16.xpose.msra.mxu0 0
    %2190 = vmatprep.subr.bf16.mxu0 0
    %2191 = vmatpush1.bf16.xpose.msra.mxu0 0
    %2192 = vmatprep.subr.bf16.mxu0 0
    %2193 = vmatpush1.bf16.xpose.msra.mxu0 0
    %2194 = vmatprep.subr.bf16.mxu0 0
    %2195 = vmatpush1.bf16.xpose.msra.mxu0 0
    %2196 = vmatprep.mubr.bf16.mxu0 0
    %2197 = vmatmul.mubr.bf16.gmra.mrb[0].mxu0 %v2159
    %v2198 = vpop.f32.mrb[0].mxu0
    %v2199 = vadd.f32 0.0, %v2198
    %v2200 = vpop.f32.mrb[0].mxu0
    %v2201 = vpop.f32.mrb[0].mxu0
    %v2202 = vadd.f32 0.0, %v2201
    %v2203 = vpop.f32.mrb[0].mxu0
    %2204 = vdwg.mxu0
    %v2206 = vsel %vm2016, %v926, 0
    %v2209 = vsel %vm2016, %v1462, 0
    %2211 = vmatprep.subr.bf16.mxu0 0
    %2212 = vmatpush1.bf16.xpose.msra.mxu0 %v2209
    %2213 = vmatprep.subr.bf16.mxu0 0
    %2214 = vmatpush1.bf16.xpose.msra.mxu0 0
    %2215 = vmatprep.subr.bf16.mxu0 0
    %2216 = vmatpush1.bf16.xpose.msra.mxu0 0
    %2217 = vmatprep.subr.bf16.mxu0 0
    %2218 = vmatpush1.bf16.xpose.msra.mxu0 0
    %2219 = vmatprep.subr.bf16.mxu0 0
    %2220 = vmatpush1.bf16.xpose.msra.mxu0 0
    %2221 = vmatprep.subr.bf16.mxu0 0
    %2222 = vmatpush1.bf16.xpose.msra.mxu0 0
    %2223 = vmatprep.subr.bf16.mxu0 0
    %2224 = vmatpush1.bf16.xpose.msra.mxu0 0
    %2225 = vmatprep.subr.bf16.mxu0 0
    %2226 = vmatpush1.bf16.xpose.msra.mxu0 0
    %2227 = vmatprep.subr.bf16.mxu0 0
    %2228 = vmatpush1.bf16.xpose.msra.mxu0 0
    %2229 = vmatprep.subr.bf16.mxu0 0
    %2230 = vmatpush1.bf16.xpose.msra.mxu0 0
    %2231 = vmatprep.subr.bf16.mxu0 0
    %2232 = vmatpush1.bf16.xpose.msra.mxu0 0
    %2233 = vmatprep.subr.bf16.mxu0 0
    %2234 = vmatpush1.bf16.xpose.msra.mxu0 0
    %2235 = vmatprep.subr.bf16.mxu0 0
    %2236 = vmatpush1.bf16.xpose.msra.mxu0 0
    %2237 = vmatprep.subr.bf16.mxu0 0
    %2238 = vmatpush1.bf16.xpose.msra.mxu0 0
    %2239 = vmatprep.subr.bf16.mxu0 0
    %2240 = vmatpush1.bf16.xpose.msra.mxu0 0
    %2241 = vmatprep.subr.bf16.mxu0 0
    %2242 = vmatpush1.bf16.xpose.msra.mxu0 0
    %2243 = vmatprep.mubr.bf16.mxu0 0
    %2244 = vmatmul.mubr.bf16.gmra.mrb[0].mxu0 %v2206
    %v2245 = vpop.f32.mrb[0].mxu0
    %v2246 = vadd.f32 0.0, %v2245
    %v2247 = vpop.f32.mrb[0].mxu0
    %v2248 = vpop.f32.mrb[0].mxu0
    %v2249 = vadd.f32 0.0, %v2248
    %v2250 = vpop.f32.mrb[0].mxu0
    %2251 = vdwg.mxu0
    %v2253 = vsel %vm2016, %v929, 0
    %v2256 = vsel %vm2016, %v1465, 0
    %2258 = vmatprep.subr.bf16.mxu0 0
    %2259 = vmatpush1.bf16.xpose.msra.mxu0 %v2256
    %2260 = vmatprep.subr.bf16.mxu0 0
    %2261 = vmatpush1.bf16.xpose.msra.mxu0 0
    %2262 = vmatprep.subr.bf16.mxu0 0
    %2263 = vmatpush1.bf16.xpose.msra.mxu0 0
    %2264 = vmatprep.subr.bf16.mxu0 0
    %2265 = vmatpush1.bf16.xpose.msra.mxu0 0
    %2266 = vmatprep.subr.bf16.mxu0 0
    %2267 = vmatpush1.bf16.xpose.msra.mxu0 0
    %2268 = vmatprep.subr.bf16.mxu0 0
    %2269 = vmatpush1.bf16.xpose.msra.mxu0 0
    %2270 = vmatprep.subr.bf16.mxu0 0
    %2271 = vmatpush1.bf16.xpose.msra.mxu0 0
    %2272 = vmatprep.subr.bf16.mxu0 0
    %2273 = vmatpush1.bf16.xpose.msra.mxu0 0
    %2274 = vmatprep.subr.bf16.mxu0 0
    %2275 = vmatpush1.bf16.xpose.msra.mxu0 0
    %2276 = vmatprep.subr.bf16.mxu0 0
    %2277 = vmatpush1.bf16.xpose.msra.mxu0 0
    %2278 = vmatprep.subr.bf16.mxu0 0
    %2279 = vmatpush1.bf16.xpose.msra.mxu0 0
    %2280 = vmatprep.subr.bf16.mxu0 0
    %2281 = vmatpush1.bf16.xpose.msra.mxu0 0
    %2282 = vmatprep.subr.bf16.mxu0 0
    %2283 = vmatpush1.bf16.xpose.msra.mxu0 0
    %2284 = vmatprep.subr.bf16.mxu0 0
    %2285 = vmatpush1.bf16.xpose.msra.mxu0 0
    %2286 = vmatprep.subr.bf16.mxu0 0
    %2287 = vmatpush1.bf16.xpose.msra.mxu0 0
    %2288 = vmatprep.subr.bf16.mxu0 0
    %2289 = vmatpush1.bf16.xpose.msra.mxu0 0
    %2290 = vmatprep.mubr.bf16.mxu0 0
    %2291 = vmatmul.mubr.bf16.gmra.mrb[0].mxu0 %v2253
    %v2292 = vpop.f32.mrb[0].mxu0
    %v2293 = vadd.f32 0.0, %v2292
    %v2294 = vpop.f32.mrb[0].mxu0
    %v2295 = vpop.f32.mrb[0].mxu0
    %v2296 = vadd.f32 0.0, %v2295
    %v2297 = vpop.f32.mrb[0].mxu0
    %2298 = vdwg.mxu0
    %v2300 = vsel %vm2016, %v932, 0
    %v2303 = vsel %vm2016, %v1468, 0
    %2305 = vmatprep.subr.bf16.mxu0 0
    %2306 = vmatpush1.bf16.xpose.msra.mxu0 %v2303
    %2307 = vmatprep.subr.bf16.mxu0 0
    %2308 = vmatpush1.bf16.xpose.msra.mxu0 0
    %2309 = vmatprep.subr.bf16.mxu0 0
    %2310 = vmatpush1.bf16.xpose.msra.mxu0 0
    %2311 = vmatprep.subr.bf16.mxu0 0
    %2312 = vmatpush1.bf16.xpose.msra.mxu0 0
    %2313 = vmatprep.subr.bf16.mxu0 0
    %2314 = vmatpush1.bf16.xpose.msra.mxu0 0
    %2315 = vmatprep.subr.bf16.mxu0 0
    %2316 = vmatpush1.bf16.xpose.msra.mxu0 0
    %2317 = vmatprep.subr.bf16.mxu0 0
    %2318 = vmatpush1.bf16.xpose.msra.mxu0 0
    %2319 = vmatprep.subr.bf16.mxu0 0
    %2320 = vmatpush1.bf16.xpose.msra.mxu0 0
    %2321 = vmatprep.subr.bf16.mxu0 0
    %2322 = vmatpush1.bf16.xpose.msra.mxu0 0
    %2323 = vmatprep.subr.bf16.mxu0 0
    %2324 = vmatpush1.bf16.xpose.msra.mxu0 0
    %2325 = vmatprep.subr.bf16.mxu0 0
    %2326 = vmatpush1.bf16.xpose.msra.mxu0 0
    %2327 = vmatprep.subr.bf16.mxu0 0
    %2328 = vmatpush1.bf16.xpose.msra.mxu0 0
    %2329 = vmatprep.subr.bf16.mxu0 0
    %2330 = vmatpush1.bf16.xpose.msra.mxu0 0
    %2331 = vmatprep.subr.bf16.mxu0 0
    %2332 = vmatpush1.bf16.xpose.msra.mxu0 0
    %2333 = vmatprep.subr.bf16.mxu0 0
    %2334 = vmatpush1.bf16.xpose.msra.mxu0 0
    %2335 = vmatprep.subr.bf16.mxu0 0
    %2336 = vmatpush1.bf16.xpose.msra.mxu0 0
    %2337 = vmatprep.mubr.bf16.mxu0 0
    %2338 = vmatmul.mubr.bf16.gmra.mrb[0].mxu0 %v2300
    %v2339 = vpop.f32.mrb[0].mxu0
    %v2340 = vadd.f32 0.0, %v2339
    %v2341 = vpop.f32.mrb[0].mxu0
    %v2342 = vpop.f32.mrb[0].mxu0
    %v2343 = vadd.f32 0.0, %v2342
    %v2344 = vpop.f32.mrb[0].mxu0
    %2345 = vdwg.mxu0
    %v2347 = vsel %vm2016, %v935, 0
    %v2350 = vsel %vm2016, %v1471, 0
    %2352 = vmatprep.subr.bf16.mxu0 0
    %2353 = vmatpush1.bf16.xpose.msra.mxu0 %v2350
    %2354 = vmatprep.subr.bf16.mxu0 0
    %2355 = vmatpush1.bf16.xpose.msra.mxu0 0
    %2356 = vmatprep.subr.bf16.mxu0 0
    %2357 = vmatpush1.bf16.xpose.msra.mxu0 0
    %2358 = vmatprep.subr.bf16.mxu0 0
    %2359 = vmatpush1.bf16.xpose.msra.mxu0 0
    %2360 = vmatprep.subr.bf16.mxu0 0
    %2361 = vmatpush1.bf16.xpose.msra.mxu0 0
    %2362 = vmatprep.subr.bf16.mxu0 0
    %2363 = vmatpush1.bf16.xpose.msra.mxu0 0
    %2364 = vmatprep.subr.bf16.mxu0 0
    %2365 = vmatpush1.bf16.xpose.msra.mxu0 0
    %2366 = vmatprep.subr.bf16.mxu0 0
    %2367 = vmatpush1.bf16.xpose.msra.mxu0 0
    %2368 = vmatprep.subr.bf16.mxu0 0
    %2369 = vmatpush1.bf16.xpose.msra.mxu0 0
    %2370 = vmatprep.subr.bf16.mxu0 0
    %2371 = vmatpush1.bf16.xpose.msra.mxu0 0
    %2372 = vmatprep.subr.bf16.mxu0 0
    %2373 = vmatpush1.bf16.xpose.msra.mxu0 0
    %2374 = vmatprep.subr.bf16.mxu0 0
    %2375 = vmatpush1.bf16.xpose.msra.mxu0 0
    %2376 = vmatprep.subr.bf16.mxu0 0
    %2377 = vmatpush1.bf16.xpose.msra.mxu0 0
    %2378 = vmatprep.subr.bf16.mxu0 0
    %2379 = vmatpush1.bf16.xpose.msra.mxu0 0
    %2380 = vmatprep.subr.bf16.mxu0 0
    %2381 = vmatpush1.bf16.xpose.msra.mxu0 0
    %2382 = vmatprep.subr.bf16.mxu0 0
    %2383 = vmatpush1.bf16.xpose.msra.mxu0 0
    %2384 = vmatprep.mubr.bf16.mxu0 0
    %2385 = vmatmul.mubr.bf16.gmra.mrb[0].mxu0 %v2347
    %v2386 = vpop.f32.mrb[0].mxu0
    %v2387 = vadd.f32 0.0, %v2386
    %v2388 = vpop.f32.mrb[0].mxu0
    %v2389 = vpop.f32.mrb[0].mxu0
    %v2390 = vadd.f32 0.0, %v2389
    %v2391 = vpop.f32.mrb[0].mxu0
    %2392 = vdwg.mxu0
    %v2395 = vlaneseq
    %v2396 = vshrl.u32 %v2395, 7
    %v2397 = vsub.s32 0, %v2396
    %v2398 = vrot.slane %v375, %v2397
    %v2399 = vlaneseq
    %v2400 = vshrl.u32 %v2399, 7
    %v2401 = vsub.s32 0, %v2400
    %v2402 = vrot.slane %v376, %v2401
    %v2405 = vadd.f32 %v2058, %v2398
    %v2406 = vadd.f32 %v2061, %v2398
    %v2407 = vadd.f32 %v2105, %v2398
    %v2408 = vadd.f32 %v2108, %v2398
    %v2409 = vadd.f32 %v2152, %v2398
    %v2410 = vadd.f32 %v2155, %v2398
    %v2411 = vadd.f32 %v2199, %v2398
    %v2412 = vadd.f32 %v2202, %v2398
    %v2413 = vadd.f32 %v2246, %v2402
    %v2414 = vadd.f32 %v2249, %v2402
    %v2415 = vadd.f32 %v2293, %v2402
    %v2416 = vadd.f32 %v2296, %v2402
    %v2417 = vadd.f32 %v2340, %v2402
    %v2418 = vadd.f32 %v2343, %v2402
    %v2419 = vadd.f32 %v2387, %v2402
    %v2420 = vadd.f32 %v2390, %v2402
    %v2421 = vlaneseq
    %v2422 = vshrl.u32 %v2421, 7
    %v2423 = vadd.s32 %v2422, 8
    %v2424 = vlaneseq
    %v2425 = vand.u32 %v2424, 127
    %vm2426 = vcmp.le.s32.totalorder %v2425, %v2422
    %vm2427 = vcmp.le.s32.totalorder %v2425, %v2423
    %v2428 = vsel %vm2426, 1, 0
    %v2429 = vsel %vm2427, 1, 0
    %vm2430 = vcmp.eq.s32.totalorder %v2428, 1
    %vm2431 = vcmp.eq.s32.totalorder %v2429, 1
    %v2432 = vsel %vm2430, %v2405, -1e+30
    %v2433 = vsel %vm2431, %v2406, -1e+30
    %v2434 = vsel %vm2430, %v2407, -1e+30
    %v2435 = vsel %vm2431, %v2408, -1e+30
    %v2436 = vsel %vm2430, %v2409, -1e+30
    %v2437 = vsel %vm2431, %v2410, -1e+30
    %v2438 = vsel %vm2430, %v2411, -1e+30
    %v2439 = vsel %vm2431, %v2412, -1e+30
    %v2440 = vsel %vm2430, %v2413, -1e+30
    %v2441 = vsel %vm2431, %v2414, -1e+30
    %v2442 = vsel %vm2430, %v2415, -1e+30
    %v2443 = vsel %vm2431, %v2416, -1e+30
    %v2444 = vsel %vm2430, %v2417, -1e+30
    %v2445 = vsel %vm2431, %v2418, -1e+30
    %v2446 = vsel %vm2430, %v2419, -1e+30
    %v2447 = vsel %vm2431, %v2420, -1e+30
    %vm2448 = vcmask 130048
    %v2449 = vsel %vm2448, %v2432, -inf
    %2450 = vmax.xlane.f32.xlu0 %v2449
    %v2451 = vpop.xlane.xlu0 %2450
    %v2452 = vsel %vm2448, %v2433, -inf
    %2453 = vmax.xlane.f32.xlu0 %v2452
    %v2454 = vpop.xlane.xlu0 %2453
    %v2455 = vsel %vm2448, %v2434, -inf
    %2456 = vmax.xlane.f32.xlu0 %v2455
    %v2457 = vpop.xlane.xlu0 %2456
    %v2458 = vsel %vm2448, %v2435, -inf
    %2459 = vmax.xlane.f32.xlu0 %v2458
    %v2460 = vpop.xlane.xlu0 %2459
    %v2461 = vsel %vm2448, %v2436, -inf
    %2462 = vmax.xlane.f32.xlu0 %v2461
    %v2463 = vpop.xlane.xlu0 %2462
    %v2464 = vsel %vm2448, %v2437, -inf
    %2465 = vmax.xlane.f32.xlu0 %v2464
    %v2466 = vpop.xlane.xlu0 %2465
    %v2467 = vsel %vm2448, %v2438, -inf
    %2468 = vmax.xlane.f32.xlu0 %v2467
    %v2469 = vpop.xlane.xlu0 %2468
    %v2470 = vsel %vm2448, %v2439, -inf
    %2471 = vmax.xlane.f32.xlu0 %v2470
    %v2472 = vpop.xlane.xlu0 %2471
    %v2473 = vsel %vm2448, %v2440, -inf
    %2474 = vmax.xlane.f32.xlu0 %v2473
    %v2475 = vpop.xlane.xlu0 %2474
    %v2476 = vsel %vm2448, %v2441, -inf
    %2477 = vmax.xlane.f32.xlu0 %v2476
    %v2478 = vpop.xlane.xlu0 %2477
    %v2479 = vsel %vm2448, %v2442, -inf
    %2480 = vmax.xlane.f32.xlu0 %v2479
    %v2481 = vpop.xlane.xlu0 %2480
    %v2482 = vsel %vm2448, %v2443, -inf
    %2483 = vmax.xlane.f32.xlu0 %v2482
    %v2484 = vpop.xlane.xlu0 %2483
    %v2485 = vsel %vm2448, %v2444, -inf
    %2486 = vmax.xlane.f32.xlu0 %v2485
    %v2487 = vpop.xlane.xlu0 %2486
    %v2488 = vsel %vm2448, %v2445, -inf
    %2489 = vmax.xlane.f32.xlu0 %v2488
    %v2490 = vpop.xlane.xlu0 %2489
    %v2491 = vsel %vm2448, %v2446, -inf
    %2492 = vmax.xlane.f32.xlu0 %v2491
    %v2493 = vpop.xlane.xlu0 %2492
    %v2494 = vsel %vm2448, %v2447, -inf
    %2495 = vmax.xlane.f32.xlu0 %v2494
    %v2496 = vpop.xlane.xlu0 %2495
    %v2497 = vsub.f32 %v2432, %v2451
    %v2498 = vsub.f32 %v2433, %v2454
    %v2499 = vsub.f32 %v2434, %v2457
    %v2500 = vsub.f32 %v2435, %v2460
    %v2501 = vsub.f32 %v2436, %v2463
    %v2502 = vsub.f32 %v2437, %v2466
    %v2503 = vsub.f32 %v2438, %v2469
    %v2504 = vsub.f32 %v2439, %v2472
    %v2505 = vsub.f32 %v2440, %v2475
    %v2506 = vsub.f32 %v2441, %v2478
    %v2507 = vsub.f32 %v2442, %v2481
    %v2508 = vsub.f32 %v2443, %v2484
    %v2509 = vsub.f32 %v2444, %v2487
    %v2510 = vsub.f32 %v2445, %v2490
    %v2511 = vsub.f32 %v2446, %v2493
    %v2512 = vsub.f32 %v2447, %v2496
    %v2513 = vmul.f32 %v2497, 1.442695
    %v2514 = vpow.pop %v2513
    %v2515 = vmul.f32 %v2498, 1.442695
    %v2516 = vpow.pop %v2515
    %v2517 = vmul.f32 %v2499, 1.442695
    %v2518 = vpow.pop %v2517
    %v2519 = vmul.f32 %v2500, 1.442695
    %v2520 = vpow.pop %v2519
    %v2521 = vmul.f32 %v2501, 1.442695
    %v2522 = vpow.pop %v2521
    %v2523 = vmul.f32 %v2502, 1.442695
    %v2524 = vpow.pop %v2523
    %v2525 = vmul.f32 %v2503, 1.442695
    %v2526 = vpow.pop %v2525
    %v2527 = vmul.f32 %v2504, 1.442695
    %v2528 = vpow.pop %v2527
    %v2529 = vmul.f32 %v2505, 1.442695
    %v2530 = vpow.pop %v2529
    %v2531 = vmul.f32 %v2506, 1.442695
    %v2532 = vpow.pop %v2531
    %v2533 = vmul.f32 %v2507, 1.442695
    %v2534 = vpow.pop %v2533
    %v2535 = vmul.f32 %v2508, 1.442695
    %v2536 = vpow.pop %v2535
    %v2537 = vmul.f32 %v2509, 1.442695
    %v2538 = vpow.pop %v2537
    %v2539 = vmul.f32 %v2510, 1.442695
    %v2540 = vpow.pop %v2539
    %v2541 = vmul.f32 %v2511, 1.442695
    %v2542 = vpow.pop %v2541
    %v2543 = vmul.f32 %v2512, 1.442695
    %v2544 = vpow.pop %v2543
    %v2545 = vsel %vm2448, %v2514, 0.0
    %2546 = vadd.xlane.f32.xlu0 %v2545
    %v2547 = vpop.xlane.xlu0 %2546
    %v2548 = vsel %vm2448, %v2516, 0.0
    %2549 = vadd.xlane.f32.xlu0 %v2548
    %v2550 = vpop.xlane.xlu0 %2549
    %v2551 = vsel %vm2448, %v2518, 0.0
    %2552 = vadd.xlane.f32.xlu0 %v2551
    %v2553 = vpop.xlane.xlu0 %2552
    %v2554 = vsel %vm2448, %v2520, 0.0
    %2555 = vadd.xlane.f32.xlu0 %v2554
    %v2556 = vpop.xlane.xlu0 %2555
    %v2557 = vsel %vm2448, %v2522, 0.0
    %2558 = vadd.xlane.f32.xlu0 %v2557
    %v2559 = vpop.xlane.xlu0 %2558
    %v2560 = vsel %vm2448, %v2524, 0.0
    %2561 = vadd.xlane.f32.xlu0 %v2560
    %v2562 = vpop.xlane.xlu0 %2561
    %v2563 = vsel %vm2448, %v2526, 0.0
    %2564 = vadd.xlane.f32.xlu0 %v2563
    %v2565 = vpop.xlane.xlu0 %2564
    %v2566 = vsel %vm2448, %v2528, 0.0
    %2567 = vadd.xlane.f32.xlu0 %v2566
    %v2568 = vpop.xlane.xlu0 %2567
    %v2569 = vsel %vm2448, %v2530, 0.0
    %2570 = vadd.xlane.f32.xlu0 %v2569
    %v2571 = vpop.xlane.xlu0 %2570
    %v2572 = vsel %vm2448, %v2532, 0.0
    %2573 = vadd.xlane.f32.xlu0 %v2572
    %v2574 = vpop.xlane.xlu0 %2573
    %v2575 = vsel %vm2448, %v2534, 0.0
    %2576 = vadd.xlane.f32.xlu0 %v2575
    %v2577 = vpop.xlane.xlu0 %2576
    %v2578 = vsel %vm2448, %v2536, 0.0
    %2579 = vadd.xlane.f32.xlu0 %v2578
    %v2580 = vpop.xlane.xlu0 %2579
    %v2581 = vsel %vm2448, %v2538, 0.0
    %2582 = vadd.xlane.f32.xlu0 %v2581
    %v2583 = vpop.xlane.xlu0 %2582
    %v2584 = vsel %vm2448, %v2540, 0.0
    %2585 = vadd.xlane.f32.xlu0 %v2584
    %v2586 = vpop.xlane.xlu0 %2585
    %v2587 = vsel %vm2448, %v2542, 0.0
    %2588 = vadd.xlane.f32.xlu0 %v2587
    %v2589 = vpop.xlane.xlu0 %2588
    %v2590 = vsel %vm2448, %v2544, 0.0
    %2591 = vadd.xlane.f32.xlu0 %v2590
    %v2592 = vpop.xlane.xlu0 %2591
    %v2593 = vrcp.pop %v2547
    %v2594 = vrcp.pop %v2550
    %v2595 = vrcp.pop %v2553
    %v2596 = vrcp.pop %v2556
    %v2597 = vrcp.pop %v2559
    %v2598 = vrcp.pop %v2562
    %v2599 = vrcp.pop %v2565
    %v2600 = vrcp.pop %v2568
    %v2601 = vrcp.pop %v2571
    %v2602 = vrcp.pop %v2574
    %v2603 = vrcp.pop %v2577
    %v2604 = vrcp.pop %v2580
    %v2605 = vrcp.pop %v2583
    %v2606 = vrcp.pop %v2586
    %v2607 = vrcp.pop %v2589
    %v2608 = vrcp.pop %v2592
    %v2609 = vmul.f32 %v2514, %v2593
    %v2610 = vmul.f32 %v2516, %v2594
    %v2611 = vmul.f32 %v2518, %v2595
    %v2612 = vmul.f32 %v2520, %v2596
    %v2613 = vmul.f32 %v2522, %v2597
    %v2614 = vmul.f32 %v2524, %v2598
    %v2615 = vmul.f32 %v2526, %v2599
    %v2616 = vmul.f32 %v2528, %v2600
    %v2617 = vmul.f32 %v2530, %v2601
    %v2618 = vmul.f32 %v2532, %v2602
    %v2619 = vmul.f32 %v2534, %v2603
    %v2620 = vmul.f32 %v2536, %v2604
    %v2621 = vmul.f32 %v2538, %v2605
    %v2622 = vmul.f32 %v2540, %v2606
    %v2623 = vmul.f32 %v2542, %v2607
    %v2624 = vmul.f32 %v2544, %v2608
    %v2625 = vpack.c.bf16 %v2610, %v2609
    %v2626 = vpack.c.bf16 %v2612, %v2611
    %v2627 = vpack.c.bf16 %v2614, %v2613
    %v2628 = vpack.c.bf16 %v2616, %v2615
    %v2629 = vpack.c.bf16 %v2618, %v2617
    %v2630 = vpack.c.bf16 %v2620, %v2619
    %v2631 = vpack.c.bf16 %v2622, %v2621
    %v2632 = vpack.c.bf16 %v2624, %v2623
    %v2634 = vsel %vm2448, %v2625, 0
    %2636 = vmatprep.subr.bf16.mxu0 0
    %2637 = vmatpush1.bf16.msra.mxu0 %v1986
    %2638 = vmatprep.subr.bf16.mxu0 0
    %2639 = vmatpush1.bf16.msra.mxu0 0
    %2640 = vmatprep.subr.bf16.mxu0 0
    %2641 = vmatpush1.bf16.msra.mxu0 0
    %2642 = vmatprep.subr.bf16.mxu0 0
    %2643 = vmatpush1.bf16.msra.mxu0 0
    %2644 = vmatprep.subr.bf16.mxu0 0
    %2645 = vmatpush1.bf16.msra.mxu0 0
    %2646 = vmatprep.subr.bf16.mxu0 0
    %2647 = vmatpush1.bf16.msra.mxu0 0
    %2648 = vmatprep.subr.bf16.mxu0 0
    %2649 = vmatpush1.bf16.msra.mxu0 0
    %2650 = vmatprep.subr.bf16.mxu0 0
    %2651 = vmatpush1.bf16.msra.mxu0 0
    %2652 = vmatprep.subr.bf16.mxu0 0
    %2653 = vmatpush1.bf16.msra.mxu0 0
    %2654 = vmatprep.subr.bf16.mxu0 0
    %2655 = vmatpush1.bf16.msra.mxu0 0
    %2656 = vmatprep.subr.bf16.mxu0 0
    %2657 = vmatpush1.bf16.msra.mxu0 0
    %2658 = vmatprep.subr.bf16.mxu0 0
    %2659 = vmatpush1.bf16.msra.mxu0 0
    %2660 = vmatprep.subr.bf16.mxu0 0
    %2661 = vmatpush1.bf16.msra.mxu0 0
    %2662 = vmatprep.subr.bf16.mxu0 0
    %2663 = vmatpush1.bf16.msra.mxu0 0
    %2664 = vmatprep.subr.bf16.mxu0 0
    %2665 = vmatpush1.bf16.msra.mxu0 0
    %2666 = vmatprep.subr.bf16.mxu0 0
    %2667 = vmatpush1.bf16.msra.mxu0 0
    %2668 = vmatprep.mubr.bf16.mxu0 0
    %2669 = vmatmul.mubr.bf16.gmra.mrb[0].mxu0 %v2634
    %v2670 = vpop.f32.mrb[0].mxu0
    %v2671 = vadd.f32 0.0, %v2670
    %v2672 = vpop.f32.mrb[0].mxu0
    %v2673 = vpop.f32.mrb[0].mxu0
    %v2674 = vadd.f32 0.0, %v2673
    %v2675 = vpop.f32.mrb[0].mxu0
    %2676 = vdwg.mxu0
    %v2678 = vsel %vm2448, %v2626, 0
    %2680 = vmatprep.subr.bf16.mxu0 0
    %2681 = vmatpush1.bf16.msra.mxu0 %v1990
    %2682 = vmatprep.subr.bf16.mxu0 0
    %2683 = vmatpush1.bf16.msra.mxu0 0
    %2684 = vmatprep.subr.bf16.mxu0 0
    %2685 = vmatpush1.bf16.msra.mxu0 0
    %2686 = vmatprep.subr.bf16.mxu0 0
    %2687 = vmatpush1.bf16.msra.mxu0 0
    %2688 = vmatprep.subr.bf16.mxu0 0
    %2689 = vmatpush1.bf16.msra.mxu0 0
    %2690 = vmatprep.subr.bf16.mxu0 0
    %2691 = vmatpush1.bf16.msra.mxu0 0
    %2692 = vmatprep.subr.bf16.mxu0 0
    %2693 = vmatpush1.bf16.msra.mxu0 0
    %2694 = vmatprep.subr.bf16.mxu0 0
    %2695 = vmatpush1.bf16.msra.mxu0 0
    %2696 = vmatprep.subr.bf16.mxu0 0
    %2697 = vmatpush1.bf16.msra.mxu0 0
    %2698 = vmatprep.subr.bf16.mxu0 0
    %2699 = vmatpush1.bf16.msra.mxu0 0
    %2700 = vmatprep.subr.bf16.mxu0 0
    %2701 = vmatpush1.bf16.msra.mxu0 0
    %2702 = vmatprep.subr.bf16.mxu0 0
    %2703 = vmatpush1.bf16.msra.mxu0 0
    %2704 = vmatprep.subr.bf16.mxu0 0
    %2705 = vmatpush1.bf16.msra.mxu0 0
    %2706 = vmatprep.subr.bf16.mxu0 0
    %2707 = vmatpush1.bf16.msra.mxu0 0
    %2708 = vmatprep.subr.bf16.mxu0 0
    %2709 = vmatpush1.bf16.msra.mxu0 0
    %2710 = vmatprep.subr.bf16.mxu0 0
    %2711 = vmatpush1.bf16.msra.mxu0 0
    %2712 = vmatprep.mubr.bf16.mxu0 0
    %2713 = vmatmul.mubr.bf16.gmra.mrb[0].mxu0 %v2678
    %v2714 = vpop.f32.mrb[0].mxu0
    %v2715 = vadd.f32 0.0, %v2714
    %v2716 = vpop.f32.mrb[0].mxu0
    %v2717 = vpop.f32.mrb[0].mxu0
    %v2718 = vadd.f32 0.0, %v2717
    %v2719 = vpop.f32.mrb[0].mxu0
    %2720 = vdwg.mxu0
    %v2722 = vsel %vm2448, %v2627, 0
    %2724 = vmatprep.subr.bf16.mxu0 0
    %2725 = vmatpush1.bf16.msra.mxu0 %v1994
    %2726 = vmatprep.subr.bf16.mxu0 0
    %2727 = vmatpush1.bf16.msra.mxu0 0
    %2728 = vmatprep.subr.bf16.mxu0 0
    %2729 = vmatpush1.bf16.msra.mxu0 0
    %2730 = vmatprep.subr.bf16.mxu0 0
    %2731 = vmatpush1.bf16.msra.mxu0 0
    %2732 = vmatprep.subr.bf16.mxu0 0
    %2733 = vmatpush1.bf16.msra.mxu0 0
    %2734 = vmatprep.subr.bf16.mxu0 0
    %2735 = vmatpush1.bf16.msra.mxu0 0
    %2736 = vmatprep.subr.bf16.mxu0 0
    %2737 = vmatpush1.bf16.msra.mxu0 0
    %2738 = vmatprep.subr.bf16.mxu0 0
    %2739 = vmatpush1.bf16.msra.mxu0 0
    %2740 = vmatprep.subr.bf16.mxu0 0
    %2741 = vmatpush1.bf16.msra.mxu0 0
    %2742 = vmatprep.subr.bf16.mxu0 0
    %2743 = vmatpush1.bf16.msra.mxu0 0
    %2744 = vmatprep.subr.bf16.mxu0 0
    %2745 = vmatpush1.bf16.msra.mxu0 0
    %2746 = vmatprep.subr.bf16.mxu0 0
    %2747 = vmatpush1.bf16.msra.mxu0 0
    %2748 = vmatprep.subr.bf16.mxu0 0
    %2749 = vmatpush1.bf16.msra.mxu0 0
    %2750 = vmatprep.subr.bf16.mxu0 0
    %2751 = vmatpush1.bf16.msra.mxu0 0
    %2752 = vmatprep.subr.bf16.mxu0 0
    %2753 = vmatpush1.bf16.msra.mxu0 0
    %2754 = vmatprep.subr.bf16.mxu0 0
    %2755 = vmatpush1.bf16.msra.mxu0 0
    %2756 = vmatprep.mubr.bf16.mxu0 0
    %2757 = vmatmul.mubr.bf16.gmra.mrb[0].mxu0 %v2722
    %v2758 = vpop.f32.mrb[0].mxu0
    %v2759 = vadd.f32 0.0, %v2758
    %v2760 = vpop.f32.mrb[0].mxu0
    %v2761 = vpop.f32.mrb[0].mxu0
    %v2762 = vadd.f32 0.0, %v2761
    %v2763 = vpop.f32.mrb[0].mxu0
    %2764 = vdwg.mxu0
    %v2766 = vsel %vm2448, %v2628, 0
    %2768 = vmatprep.subr.bf16.mxu0 0
    %2769 = vmatpush1.bf16.msra.mxu0 %v1998
    %2770 = vmatprep.subr.bf16.mxu0 0
    %2771 = vmatpush1.bf16.msra.mxu0 0
    %2772 = vmatprep.subr.bf16.mxu0 0
    %2773 = vmatpush1.bf16.msra.mxu0 0
    %2774 = vmatprep.subr.bf16.mxu0 0
    %2775 = vmatpush1.bf16.msra.mxu0 0
    %2776 = vmatprep.subr.bf16.mxu0 0
    %2777 = vmatpush1.bf16.msra.mxu0 0
    %2778 = vmatprep.subr.bf16.mxu0 0
    %2779 = vmatpush1.bf16.msra.mxu0 0
    %2780 = vmatprep.subr.bf16.mxu0 0
    %2781 = vmatpush1.bf16.msra.mxu0 0
    %2782 = vmatprep.subr.bf16.mxu0 0
    %2783 = vmatpush1.bf16.msra.mxu0 0
    %2784 = vmatprep.subr.bf16.mxu0 0
    %2785 = vmatpush1.bf16.msra.mxu0 0
    %2786 = vmatprep.subr.bf16.mxu0 0
    %2787 = vmatpush1.bf16.msra.mxu0 0
    %2788 = vmatprep.subr.bf16.mxu0 0
    %2789 = vmatpush1.bf16.msra.mxu0 0
    %2790 = vmatprep.subr.bf16.mxu0 0
    %2791 = vmatpush1.bf16.msra.mxu0 0
    %2792 = vmatprep.subr.bf16.mxu0 0
    %2793 = vmatpush1.bf16.msra.mxu0 0
    %2794 = vmatprep.subr.bf16.mxu0 0
    %2795 = vmatpush1.bf16.msra.mxu0 0
    %2796 = vmatprep.subr.bf16.mxu0 0
    %2797 = vmatpush1.bf16.msra.mxu0 0
    %2798 = vmatprep.subr.bf16.mxu0 0
    %2799 = vmatpush1.bf16.msra.mxu0 0
    %2800 = vmatprep.mubr.bf16.mxu0 0
    %2801 = vmatmul.mubr.bf16.gmra.mrb[0].mxu0 %v2766
    %v2802 = vpop.f32.mrb[0].mxu0
    %v2803 = vadd.f32 0.0, %v2802
    %v2804 = vpop.f32.mrb[0].mxu0
    %v2805 = vpop.f32.mrb[0].mxu0
    %v2806 = vadd.f32 0.0, %v2805
    %v2807 = vpop.f32.mrb[0].mxu0
    %2808 = vdwg.mxu0
    %v2810 = vsel %vm2448, %v2629, 0
    %2812 = vmatprep.subr.bf16.mxu0 0
    %2813 = vmatpush1.bf16.msra.mxu0 %v2002
    %2814 = vmatprep.subr.bf16.mxu0 0
    %2815 = vmatpush1.bf16.msra.mxu0 0
    %2816 = vmatprep.subr.bf16.mxu0 0
    %2817 = vmatpush1.bf16.msra.mxu0 0
    %2818 = vmatprep.subr.bf16.mxu0 0
    %2819 = vmatpush1.bf16.msra.mxu0 0
    %2820 = vmatprep.subr.bf16.mxu0 0
    %2821 = vmatpush1.bf16.msra.mxu0 0
    %2822 = vmatprep.subr.bf16.mxu0 0
    %2823 = vmatpush1.bf16.msra.mxu0 0
    %2824 = vmatprep.subr.bf16.mxu0 0
    %2825 = vmatpush1.bf16.msra.mxu0 0
    %2826 = vmatprep.subr.bf16.mxu0 0
    %2827 = vmatpush1.bf16.msra.mxu0 0
    %2828 = vmatprep.subr.bf16.mxu0 0
    %2829 = vmatpush1.bf16.msra.mxu0 0
    %2830 = vmatprep.subr.bf16.mxu0 0
    %2831 = vmatpush1.bf16.msra.mxu0 0
    %2832 = vmatprep.subr.bf16.mxu0 0
    %2833 = vmatpush1.bf16.msra.mxu0 0
    %2834 = vmatprep.subr.bf16.mxu0 0
    %2835 = vmatpush1.bf16.msra.mxu0 0
    %2836 = vmatprep.subr.bf16.mxu0 0
    %2837 = vmatpush1.bf16.msra.mxu0 0
    %2838 = vmatprep.subr.bf16.mxu0 0
    %2839 = vmatpush1.bf16.msra.mxu0 0
    %2840 = vmatprep.subr.bf16.mxu0 0
    %2841 = vmatpush1.bf16.msra.mxu0 0
    %2842 = vmatprep.subr.bf16.mxu0 0
    %2843 = vmatpush1.bf16.msra.mxu0 0
    %2844 = vmatprep.mubr.bf16.mxu0 0
    %2845 = vmatmul.mubr.bf16.gmra.mrb[0].mxu0 %v2810
    %v2846 = vpop.f32.mrb[0].mxu0
    %v2847 = vadd.f32 0.0, %v2846
    %v2848 = vpop.f32.mrb[0].mxu0
    %v2849 = vpop.f32.mrb[0].mxu0
    %v2850 = vadd.f32 0.0, %v2849
    %v2851 = vpop.f32.mrb[0].mxu0
    %2852 = vdwg.mxu0
    %v2854 = vsel %vm2448, %v2630, 0
    %2856 = vmatprep.subr.bf16.mxu0 0
    %2857 = vmatpush1.bf16.msra.mxu0 %v2006
    %2858 = vmatprep.subr.bf16.mxu0 0
    %2859 = vmatpush1.bf16.msra.mxu0 0
    %2860 = vmatprep.subr.bf16.mxu0 0
    %2861 = vmatpush1.bf16.msra.mxu0 0
    %2862 = vmatprep.subr.bf16.mxu0 0
    %2863 = vmatpush1.bf16.msra.mxu0 0
    %2864 = vmatprep.subr.bf16.mxu0 0
    %2865 = vmatpush1.bf16.msra.mxu0 0
    %2866 = vmatprep.subr.bf16.mxu0 0
    %2867 = vmatpush1.bf16.msra.mxu0 0
    %2868 = vmatprep.subr.bf16.mxu0 0
    %2869 = vmatpush1.bf16.msra.mxu0 0
    %2870 = vmatprep.subr.bf16.mxu0 0
    %2871 = vmatpush1.bf16.msra.mxu0 0
    %2872 = vmatprep.subr.bf16.mxu0 0
    %2873 = vmatpush1.bf16.msra.mxu0 0
    %2874 = vmatprep.subr.bf16.mxu0 0
    %2875 = vmatpush1.bf16.msra.mxu0 0
    %2876 = vmatprep.subr.bf16.mxu0 0
    %2877 = vmatpush1.bf16.msra.mxu0 0
    %2878 = vmatprep.subr.bf16.mxu0 0
    %2879 = vmatpush1.bf16.msra.mxu0 0
    %2880 = vmatprep.subr.bf16.mxu0 0
    %2881 = vmatpush1.bf16.msra.mxu0 0
    %2882 = vmatprep.subr.bf16.mxu0 0
    %2883 = vmatpush1.bf16.msra.mxu0 0
    %2884 = vmatprep.subr.bf16.mxu0 0
    %2885 = vmatpush1.bf16.msra.mxu0 0
    %2886 = vmatprep.subr.bf16.mxu0 0
    %2887 = vmatpush1.bf16.msra.mxu0 0
    %2888 = vmatprep.mubr.bf16.mxu0 0
    %2889 = vmatmul.mubr.bf16.gmra.mrb[0].mxu0 %v2854
    %v2890 = vpop.f32.mrb[0].mxu0
    %v2891 = vadd.f32 0.0, %v2890
    %v2892 = vpop.f32.mrb[0].mxu0
    %v2893 = vpop.f32.mrb[0].mxu0
    %v2894 = vadd.f32 0.0, %v2893
    %v2895 = vpop.f32.mrb[0].mxu0
    %2896 = vdwg.mxu0
    %v2898 = vsel %vm2448, %v2631, 0
    %2900 = vmatprep.subr.bf16.mxu0 0
    %2901 = vmatpush1.bf16.msra.mxu0 %v2010
    %2902 = vmatprep.subr.bf16.mxu0 0
    %2903 = vmatpush1.bf16.msra.mxu0 0
    %2904 = vmatprep.subr.bf16.mxu0 0
    %2905 = vmatpush1.bf16.msra.mxu0 0
    %2906 = vmatprep.subr.bf16.mxu0 0
    %2907 = vmatpush1.bf16.msra.mxu0 0
    %2908 = vmatprep.subr.bf16.mxu0 0
    %2909 = vmatpush1.bf16.msra.mxu0 0
    %2910 = vmatprep.subr.bf16.mxu0 0
    %2911 = vmatpush1.bf16.msra.mxu0 0
    %2912 = vmatprep.subr.bf16.mxu0 0
    %2913 = vmatpush1.bf16.msra.mxu0 0
    %2914 = vmatprep.subr.bf16.mxu0 0
    %2915 = vmatpush1.bf16.msra.mxu0 0
    %2916 = vmatprep.subr.bf16.mxu0 0
    %2917 = vmatpush1.bf16.msra.mxu0 0
    %2918 = vmatprep.subr.bf16.mxu0 0
    %2919 = vmatpush1.bf16.msra.mxu0 0
    %2920 = vmatprep.subr.bf16.mxu0 0
    %2921 = vmatpush1.bf16.msra.mxu0 0
    %2922 = vmatprep.subr.bf16.mxu0 0
    %2923 = vmatpush1.bf16.msra.mxu0 0
    %2924 = vmatprep.subr.bf16.mxu0 0
    %2925 = vmatpush1.bf16.msra.mxu0 0
    %2926 = vmatprep.subr.bf16.mxu0 0
    %2927 = vmatpush1.bf16.msra.mxu0 0
    %2928 = vmatprep.subr.bf16.mxu0 0
    %2929 = vmatpush1.bf16.msra.mxu0 0
    %2930 = vmatprep.subr.bf16.mxu0 0
    %2931 = vmatpush1.bf16.msra.mxu0 0
    %2932 = vmatprep.mubr.bf16.mxu0 0
    %2933 = vmatmul.mubr.bf16.gmra.mrb[0].mxu0 %v2898
    %v2934 = vpop.f32.mrb[0].mxu0
    %v2935 = vadd.f32 0.0, %v2934
    %v2936 = vpop.f32.mrb[0].mxu0
    %v2937 = vpop.f32.mrb[0].mxu0
    %v2938 = vadd.f32 0.0, %v2937
    %v2939 = vpop.f32.mrb[0].mxu0
    %2940 = vdwg.mxu0
    %v2942 = vsel %vm2448, %v2632, 0
    %2944 = vmatprep.subr.bf16.mxu0 0
    %2945 = vmatpush1.bf16.msra.mxu0 %v2014
    %2946 = vmatprep.subr.bf16.mxu0 0
    %2947 = vmatpush1.bf16.msra.mxu0 0
    %2948 = vmatprep.subr.bf16.mxu0 0
    %2949 = vmatpush1.bf16.msra.mxu0 0
    %2950 = vmatprep.subr.bf16.mxu0 0
    %2951 = vmatpush1.bf16.msra.mxu0 0
    %2952 = vmatprep.subr.bf16.mxu0 0
    %2953 = vmatpush1.bf16.msra.mxu0 0
    %2954 = vmatprep.subr.bf16.mxu0 0
    %2955 = vmatpush1.bf16.msra.mxu0 0
    %2956 = vmatprep.subr.bf16.mxu0 0
    %2957 = vmatpush1.bf16.msra.mxu0 0
    %2958 = vmatprep.subr.bf16.mxu0 0
    %2959 = vmatpush1.bf16.msra.mxu0 0
    %2960 = vmatprep.subr.bf16.mxu0 0
    %2961 = vmatpush1.bf16.msra.mxu0 0
    %2962 = vmatprep.subr.bf16.mxu0 0
    %2963 = vmatpush1.bf16.msra.mxu0 0
    %2964 = vmatprep.subr.bf16.mxu0 0
    %2965 = vmatpush1.bf16.msra.mxu0 0
    %2966 = vmatprep.subr.bf16.mxu0 0
    %2967 = vmatpush1.bf16.msra.mxu0 0
    %2968 = vmatprep.subr.bf16.mxu0 0
    %2969 = vmatpush1.bf16.msra.mxu0 0
    %2970 = vmatprep.subr.bf16.mxu0 0
    %2971 = vmatpush1.bf16.msra.mxu0 0
    %2972 = vmatprep.subr.bf16.mxu0 0
    %2973 = vmatpush1.bf16.msra.mxu0 0
    %2974 = vmatprep.subr.bf16.mxu0 0
    %2975 = vmatpush1.bf16.msra.mxu0 0
    %2976 = vmatprep.mubr.bf16.mxu0 0
    %2977 = vmatmul.mubr.bf16.gmra.mrb[0].mxu0 %v2942
    %v2978 = vpop.f32.mrb[0].mxu0
    %v2979 = vadd.f32 0.0, %v2978
    %v2980 = vpop.f32.mrb[0].mxu0
    %v2981 = vpop.f32.mrb[0].mxu0
    %v2982 = vadd.f32 0.0, %v2981
    %v2983 = vpop.f32.mrb[0].mxu0
    %2984 = vdwg.mxu0
    %v2985 = vcombine.low %v2671, %v2759
    %v2986 = vcombine.high %v2671, %v2759
    %v2988 = vunpack.c.l.s4 1983009808
    %v2989 = vunpack.c.0.s8 %v2988
    %v2990 = vlaneseq
    %v2991 = vshrl.u32 %v2990, 7
    %v2992 = vsub.s32 %v2989, %v2991
    %v2993 = vrot.slane %v2985, %v2992
    %v2995 = vunpack.c.l.s4 1983009808
    %v2996 = vunpack.c.0.s8 %v2995
    %v2997 = vlaneseq
    %v2998 = vshrl.u32 %v2997, 7
    %v2999 = vsub.s32 %v2996, %v2998
    %v3000 = vrot.slane %v2986, %v2999
    %v3001 = vcombine.low %v2715, %v2803
    %v3002 = vcombine.high %v2715, %v2803
    %v3004 = vunpack.c.l.s4 1983009808
    %v3005 = vunpack.c.0.s8 %v3004
    %v3006 = vlaneseq
    %v3007 = vshrl.u32 %v3006, 7
    %v3008 = vsub.s32 %v3005, %v3007
    %v3009 = vrot.slane %v3001, %v3008
    %v3011 = vunpack.c.l.s4 1983009808
    %v3012 = vunpack.c.0.s8 %v3011
    %v3013 = vlaneseq
    %v3014 = vshrl.u32 %v3013, 7
    %v3015 = vsub.s32 %v3012, %v3014
    %v3016 = vrot.slane %v3002, %v3015
    %v3017 = vcombine.low %v2993, %v3009
    %v3018 = vcombine.high %v2993, %v3009
    %v3020 = vunpack.c.l.s4 1934713408
    %v3021 = vunpack.c.0.s8 %v3020
    %v3022 = vlaneseq
    %v3023 = vshrl.u32 %v3022, 7
    %v3024 = vsub.s32 %v3021, %v3023
    %v3025 = vrot.slane %v3017, %v3024
    %v3027 = vunpack.c.l.s4 1934713408
    %v3028 = vunpack.c.0.s8 %v3027
    %v3029 = vlaneseq
    %v3030 = vshrl.u32 %v3029, 7
    %v3031 = vsub.s32 %v3028, %v3030
    %v3032 = vrot.slane %v3018, %v3031
    %v3033 = vcombine.low %v3000, %v3016
    %v3034 = vcombine.high %v3000, %v3016
    %v3036 = vunpack.c.l.s4 1934713408
    %v3037 = vunpack.c.0.s8 %v3036
    %v3038 = vlaneseq
    %v3039 = vshrl.u32 %v3038, 7
    %v3040 = vsub.s32 %v3037, %v3039
    %v3041 = vrot.slane %v3033, %v3040
    %v3043 = vunpack.c.l.s4 1934713408
    %v3044 = vunpack.c.0.s8 %v3043
    %v3045 = vlaneseq
    %v3046 = vshrl.u32 %v3045, 7
    %v3047 = vsub.s32 %v3044, %v3046
    %v3048 = vrot.slane %v3034, %v3047
    %v3049 = vcombine.high %v3025, 0.0
    %v3050 = vcombine.high %v3032, 0.0
    %v3051 = vcombine.high %v3041, 0.0
    %v3052 = vcombine.high %v3048, 0.0
    %v3053 = vcombine.low %v2674, %v2762
    %v3054 = vcombine.high %v2674, %v2762
    %v3056 = vunpack.c.l.s4 1983009808
    %v3057 = vunpack.c.0.s8 %v3056
    %v3058 = vlaneseq
    %v3059 = vshrl.u32 %v3058, 7
    %v3060 = vsub.s32 %v3057, %v3059
    %v3061 = vrot.slane %v3053, %v3060
    %v3063 = vunpack.c.l.s4 1983009808
    %v3064 = vunpack.c.0.s8 %v3063
    %v3065 = vlaneseq
    %v3066 = vshrl.u32 %v3065, 7
    %v3067 = vsub.s32 %v3064, %v3066
    %v3068 = vrot.slane %v3054, %v3067
    %v3069 = vcombine.low %v2718, %v2806
    %v3070 = vcombine.high %v2718, %v2806
    %v3072 = vunpack.c.l.s4 1983009808
    %v3073 = vunpack.c.0.s8 %v3072
    %v3074 = vlaneseq
    %v3075 = vshrl.u32 %v3074, 7
    %v3076 = vsub.s32 %v3073, %v3075
    %v3077 = vrot.slane %v3069, %v3076
    %v3079 = vunpack.c.l.s4 1983009808
    %v3080 = vunpack.c.0.s8 %v3079
    %v3081 = vlaneseq
    %v3082 = vshrl.u32 %v3081, 7
    %v3083 = vsub.s32 %v3080, %v3082
    %v3084 = vrot.slane %v3070, %v3083
    %v3085 = vcombine.low %v3061, %v3077
    %v3086 = vcombine.high %v3061, %v3077
    %v3088 = vunpack.c.l.s4 1934713408
    %v3089 = vunpack.c.0.s8 %v3088
    %v3090 = vlaneseq
    %v3091 = vshrl.u32 %v3090, 7
    %v3092 = vsub.s32 %v3089, %v3091
    %v3093 = vrot.slane %v3085, %v3092
    %v3095 = vunpack.c.l.s4 1934713408
    %v3096 = vunpack.c.0.s8 %v3095
    %v3097 = vlaneseq
    %v3098 = vshrl.u32 %v3097, 7
    %v3099 = vsub.s32 %v3096, %v3098
    %v3100 = vrot.slane %v3086, %v3099
    %v3101 = vcombine.low %v3068, %v3084
    %v3102 = vcombine.high %v3068, %v3084
    %v3104 = vunpack.c.l.s4 1934713408
    %v3105 = vunpack.c.0.s8 %v3104
    %v3106 = vlaneseq
    %v3107 = vshrl.u32 %v3106, 7
    %v3108 = vsub.s32 %v3105, %v3107
    %v3109 = vrot.slane %v3101, %v3108
    %v3111 = vunpack.c.l.s4 1934713408
    %v3112 = vunpack.c.0.s8 %v3111
    %v3113 = vlaneseq
    %v3114 = vshrl.u32 %v3113, 7
    %v3115 = vsub.s32 %v3112, %v3114
    %v3116 = vrot.slane %v3102, %v3115
    %v3117 = vcombine.high %v3093, 0.0
    %v3118 = vcombine.high %v3100, 0.0
    %v3119 = vcombine.high %v3109, 0.0
    %v3120 = vcombine.high %v3116, 0.0
    %v3121 = vcombine.low %v2847, %v2935
    %v3122 = vcombine.high %v2847, %v2935
    %v3124 = vunpack.c.l.s4 1983009808
    %v3125 = vunpack.c.0.s8 %v3124
    %v3126 = vlaneseq
    %v3127 = vshrl.u32 %v3126, 7
    %v3128 = vsub.s32 %v3125, %v3127
    %v3129 = vrot.slane %v3121, %v3128
    %v3131 = vunpack.c.l.s4 1983009808
    %v3132 = vunpack.c.0.s8 %v3131
    %v3133 = vlaneseq
    %v3134 = vshrl.u32 %v3133, 7
    %v3135 = vsub.s32 %v3132, %v3134
    %v3136 = vrot.slane %v3122, %v3135
    %v3137 = vcombine.low %v2891, %v2979
    %v3138 = vcombine.high %v2891, %v2979
    %v3140 = vunpack.c.l.s4 1983009808
    %v3141 = vunpack.c.0.s8 %v3140
    %v3142 = vlaneseq
    %v3143 = vshrl.u32 %v3142, 7
    %v3144 = vsub.s32 %v3141, %v3143
    %v3145 = vrot.slane %v3137, %v3144
    %v3147 = vunpack.c.l.s4 1983009808
    %v3148 = vunpack.c.0.s8 %v3147
    %v3149 = vlaneseq
    %v3150 = vshrl.u32 %v3149, 7
    %v3151 = vsub.s32 %v3148, %v3150
    %v3152 = vrot.slane %v3138, %v3151
    %v3153 = vcombine.low %v3129, %v3145
    %v3154 = vcombine.high %v3129, %v3145
    %v3156 = vunpack.c.l.s4 1934713408
    %v3157 = vunpack.c.0.s8 %v3156
    %v3158 = vlaneseq
    %v3159 = vshrl.u32 %v3158, 7
    %v3160 = vsub.s32 %v3157, %v3159
    %v3161 = vrot.slane %v3153, %v3160
    %v3163 = vunpack.c.l.s4 1934713408
    %v3164 = vunpack.c.0.s8 %v3163
    %v3165 = vlaneseq
    %v3166 = vshrl.u32 %v3165, 7
    %v3167 = vsub.s32 %v3164, %v3166
    %v3168 = vrot.slane %v3154, %v3167
    %v3169 = vcombine.low %v3136, %v3152
    %v3170 = vcombine.high %v3136, %v3152
    %v3172 = vunpack.c.l.s4 1934713408
    %v3173 = vunpack.c.0.s8 %v3172
    %v3174 = vlaneseq
    %v3175 = vshrl.u32 %v3174, 7
    %v3176 = vsub.s32 %v3173, %v3175
    %v3177 = vrot.slane %v3169, %v3176
    %v3179 = vunpack.c.l.s4 1934713408
    %v3180 = vunpack.c.0.s8 %v3179
    %v3181 = vlaneseq
    %v3182 = vshrl.u32 %v3181, 7
    %v3183 = vsub.s32 %v3180, %v3182
    %v3184 = vrot.slane %v3170, %v3183
    %v3185 = vcombine.high %v3161, 0.0
    %v3186 = vcombine.high %v3168, 0.0
    %v3187 = vcombine.high %v3177, 0.0
    %v3188 = vcombine.high %v3184, 0.0
    %v3189 = vcombine.low %v2850, %v2938
    %v3190 = vcombine.high %v2850, %v2938
    %v3192 = vunpack.c.l.s4 1983009808
    %v3193 = vunpack.c.0.s8 %v3192
    %v3194 = vlaneseq
    %v3195 = vshrl.u32 %v3194, 7
    %v3196 = vsub.s32 %v3193, %v3195
    %v3197 = vrot.slane %v3189, %v3196
    %v3199 = vunpack.c.l.s4 1983009808
    %v3200 = vunpack.c.0.s8 %v3199
    %v3201 = vlaneseq
    %v3202 = vshrl.u32 %v3201, 7
    %v3203 = vsub.s32 %v3200, %v3202
    %v3204 = vrot.slane %v3190, %v3203
    %v3205 = vcombine.low %v2894, %v2982
    %v3206 = vcombine.high %v2894, %v2982
    %v3208 = vunpack.c.l.s4 1983009808
    %v3209 = vunpack.c.0.s8 %v3208
    %v3210 = vlaneseq
    %v3211 = vshrl.u32 %v3210, 7
    %v3212 = vsub.s32 %v3209, %v3211
    %v3213 = vrot.slane %v3205, %v3212
    %v3215 = vunpack.c.l.s4 1983009808
    %v3216 = vunpack.c.0.s8 %v3215
    %v3217 = vlaneseq
    %v3218 = vshrl.u32 %v3217, 7
    %v3219 = vsub.s32 %v3216, %v3218
    %v3220 = vrot.slane %v3206, %v3219
    %v3221 = vcombine.low %v3197, %v3213
    %v3222 = vcombine.high %v3197, %v3213
    %v3224 = vunpack.c.l.s4 1934713408
    %v3225 = vunpack.c.0.s8 %v3224
    %v3226 = vlaneseq
    %v3227 = vshrl.u32 %v3226, 7
    %v3228 = vsub.s32 %v3225, %v3227
    %v3229 = vrot.slane %v3221, %v3228
    %v3231 = vunpack.c.l.s4 1934713408
    %v3232 = vunpack.c.0.s8 %v3231
    %v3233 = vlaneseq
    %v3234 = vshrl.u32 %v3233, 7
    %v3235 = vsub.s32 %v3232, %v3234
    %v3236 = vrot.slane %v3222, %v3235
    %v3237 = vcombine.low %v3204, %v3220
    %v3238 = vcombine.high %v3204, %v3220
    %v3240 = vunpack.c.l.s4 1934713408
    %v3241 = vunpack.c.0.s8 %v3240
    %v3242 = vlaneseq
    %v3243 = vshrl.u32 %v3242, 7
    %v3244 = vsub.s32 %v3241, %v3243
    %v3245 = vrot.slane %v3237, %v3244
    %v3247 = vunpack.c.l.s4 1934713408
    %v3248 = vunpack.c.0.s8 %v3247
    %v3249 = vlaneseq
    %v3250 = vshrl.u32 %v3249, 7
    %v3251 = vsub.s32 %v3248, %v3250
    %v3252 = vrot.slane %v3238, %v3251
    %v3253 = vcombine.high %v3229, 0.0
    %v3254 = vcombine.high %v3236, 0.0
    %v3255 = vcombine.high %v3245, 0.0
    %v3256 = vcombine.high %v3252, 0.0
    %v3257 = vcombine.low %v3025, %v3032
    %v3259 = vunpack.c.l.s4 1983009808
    %v3260 = vunpack.c.0.s8 %v3259
    %v3261 = vlaneseq
    %v3262 = vshrl.u32 %v3261, 7
    %v3263 = vsub.s32 %v3260, %v3262
    %v3264 = vrot.slane %v3257, %v3263
    %v3265 = vcombine.low %v3049, %v3050
    %v3267 = vunpack.c.l.s4 1983009808
    %v3268 = vunpack.c.0.s8 %v3267
    %v3269 = vlaneseq
    %v3270 = vshrl.u32 %v3269, 7
    %v3271 = vsub.s32 %v3268, %v3270
    %v3272 = vrot.slane %v3265, %v3271
    %v3273 = vcombine.low %v3041, %v3048
    %v3275 = vunpack.c.l.s4 1983009808
    %v3276 = vunpack.c.0.s8 %v3275
    %v3277 = vlaneseq
    %v3278 = vshrl.u32 %v3277, 7
    %v3279 = vsub.s32 %v3276, %v3278
    %v3280 = vrot.slane %v3273, %v3279
    %v3281 = vcombine.low %v3051, %v3052
    %v3283 = vunpack.c.l.s4 1983009808
    %v3284 = vunpack.c.0.s8 %v3283
    %v3285 = vlaneseq
    %v3286 = vshrl.u32 %v3285, 7
    %v3287 = vsub.s32 %v3284, %v3286
    %v3288 = vrot.slane %v3281, %v3287
    %v3289 = vcombine.low %v3264, %v3272
    %v3290 = vcombine.high %v3264, %v3272
    %v3292 = vunpack.c.l.s4 1934713408
    %v3293 = vunpack.c.0.s8 %v3292
    %v3294 = vlaneseq
    %v3295 = vshrl.u32 %v3294, 7
    %v3296 = vsub.s32 %v3293, %v3295
    %v3297 = vrot.slane %v3289, %v3296
    %v3299 = vunpack.c.l.s4 1934713408
    %v3300 = vunpack.c.0.s8 %v3299
    %v3301 = vlaneseq
    %v3302 = vshrl.u32 %v3301, 7
    %v3303 = vsub.s32 %v3300, %v3302
    %v3304 = vrot.slane %v3290, %v3303
    %v3305 = vcombine.low %v3280, %v3288
    %v3306 = vcombine.high %v3280, %v3288
    %v3308 = vunpack.c.l.s4 1934713408
    %v3309 = vunpack.c.0.s8 %v3308
    %v3310 = vlaneseq
    %v3311 = vshrl.u32 %v3310, 7
    %v3312 = vsub.s32 %v3309, %v3311
    %v3313 = vrot.slane %v3305, %v3312
    %v3315 = vunpack.c.l.s4 1934713408
    %v3316 = vunpack.c.0.s8 %v3315
    %v3317 = vlaneseq
    %v3318 = vshrl.u32 %v3317, 7
    %v3319 = vsub.s32 %v3316, %v3318
    %v3320 = vrot.slane %v3306, %v3319
    %v3321 = vcombine.low %v3297, %v3313
    %v3322 = vcombine.high %v3297, %v3313
    %v3323 = vcombine.low %v3304, %v3320
    %v3324 = vcombine.high %v3304, %v3320
    %v3325 = vcombine.low %v3093, %v3100
    %v3327 = vunpack.c.l.s4 1983009808
    %v3328 = vunpack.c.0.s8 %v3327
    %v3329 = vlaneseq
    %v3330 = vshrl.u32 %v3329, 7
    %v3331 = vsub.s32 %v3328, %v3330
    %v3332 = vrot.slane %v3325, %v3331
    %v3333 = vcombine.low %v3117, %v3118
    %v3335 = vunpack.c.l.s4 1983009808
    %v3336 = vunpack.c.0.s8 %v3335
    %v3337 = vlaneseq
    %v3338 = vshrl.u32 %v3337, 7
    %v3339 = vsub.s32 %v3336, %v3338
    %v3340 = vrot.slane %v3333, %v3339
    %v3341 = vcombine.low %v3109, %v3116
    %v3343 = vunpack.c.l.s4 1983009808
    %v3344 = vunpack.c.0.s8 %v3343
    %v3345 = vlaneseq
    %v3346 = vshrl.u32 %v3345, 7
    %v3347 = vsub.s32 %v3344, %v3346
    %v3348 = vrot.slane %v3341, %v3347
    %v3349 = vcombine.low %v3119, %v3120
    %v3351 = vunpack.c.l.s4 1983009808
    %v3352 = vunpack.c.0.s8 %v3351
    %v3353 = vlaneseq
    %v3354 = vshrl.u32 %v3353, 7
    %v3355 = vsub.s32 %v3352, %v3354
    %v3356 = vrot.slane %v3349, %v3355
    %v3357 = vcombine.low %v3332, %v3340
    %v3358 = vcombine.high %v3332, %v3340
    %v3360 = vunpack.c.l.s4 1934713408
    %v3361 = vunpack.c.0.s8 %v3360
    %v3362 = vlaneseq
    %v3363 = vshrl.u32 %v3362, 7
    %v3364 = vsub.s32 %v3361, %v3363
    %v3365 = vrot.slane %v3357, %v3364
    %v3367 = vunpack.c.l.s4 1934713408
    %v3368 = vunpack.c.0.s8 %v3367
    %v3369 = vlaneseq
    %v3370 = vshrl.u32 %v3369, 7
    %v3371 = vsub.s32 %v3368, %v3370
    %v3372 = vrot.slane %v3358, %v3371
    %v3373 = vcombine.low %v3348, %v3356
    %v3374 = vcombine.high %v3348, %v3356
    %v3376 = vunpack.c.l.s4 1934713408
    %v3377 = vunpack.c.0.s8 %v3376
    %v3378 = vlaneseq
    %v3379 = vshrl.u32 %v3378, 7
    %v3380 = vsub.s32 %v3377, %v3379
    %v3381 = vrot.slane %v3373, %v3380
    %v3383 = vunpack.c.l.s4 1934713408
    %v3384 = vunpack.c.0.s8 %v3383
    %v3385 = vlaneseq
    %v3386 = vshrl.u32 %v3385, 7
    %v3387 = vsub.s32 %v3384, %v3386
    %v3388 = vrot.slane %v3374, %v3387
    %v3389 = vcombine.low %v3365, %v3381
    %v3390 = vcombine.high %v3365, %v3381
    %v3391 = vcombine.low %v3372, %v3388
    %v3392 = vcombine.high %v3372, %v3388
    %v3393 = vcombine.low %v3161, %v3168
    %v3395 = vunpack.c.l.s4 1983009808
    %v3396 = vunpack.c.0.s8 %v3395
    %v3397 = vlaneseq
    %v3398 = vshrl.u32 %v3397, 7
    %v3399 = vsub.s32 %v3396, %v3398
    %v3400 = vrot.slane %v3393, %v3399
    %v3401 = vcombine.low %v3185, %v3186
    %v3403 = vunpack.c.l.s4 1983009808
    %v3404 = vunpack.c.0.s8 %v3403
    %v3405 = vlaneseq
    %v3406 = vshrl.u32 %v3405, 7
    %v3407 = vsub.s32 %v3404, %v3406
    %v3408 = vrot.slane %v3401, %v3407
    %v3409 = vcombine.low %v3177, %v3184
    %v3411 = vunpack.c.l.s4 1983009808
    %v3412 = vunpack.c.0.s8 %v3411
    %v3413 = vlaneseq
    %v3414 = vshrl.u32 %v3413, 7
    %v3415 = vsub.s32 %v3412, %v3414
    %v3416 = vrot.slane %v3409, %v3415
    %v3417 = vcombine.low %v3187, %v3188
    %v3419 = vunpack.c.l.s4 1983009808
    %v3420 = vunpack.c.0.s8 %v3419
    %v3421 = vlaneseq
    %v3422 = vshrl.u32 %v3421, 7
    %v3423 = vsub.s32 %v3420, %v3422
    %v3424 = vrot.slane %v3417, %v3423
    %v3425 = vcombine.low %v3400, %v3408
    %v3426 = vcombine.high %v3400, %v3408
    %v3428 = vunpack.c.l.s4 1934713408
    %v3429 = vunpack.c.0.s8 %v3428
    %v3430 = vlaneseq
    %v3431 = vshrl.u32 %v3430, 7
    %v3432 = vsub.s32 %v3429, %v3431
    %v3433 = vrot.slane %v3425, %v3432
    %v3435 = vunpack.c.l.s4 1934713408
    %v3436 = vunpack.c.0.s8 %v3435
    %v3437 = vlaneseq
    %v3438 = vshrl.u32 %v3437, 7
    %v3439 = vsub.s32 %v3436, %v3438
    %v3440 = vrot.slane %v3426, %v3439
    %v3441 = vcombine.low %v3416, %v3424
    %v3442 = vcombine.high %v3416, %v3424
    %v3444 = vunpack.c.l.s4 1934713408
    %v3445 = vunpack.c.0.s8 %v3444
    %v3446 = vlaneseq
    %v3447 = vshrl.u32 %v3446, 7
    %v3448 = vsub.s32 %v3445, %v3447
    %v3449 = vrot.slane %v3441, %v3448
    %v3451 = vunpack.c.l.s4 1934713408
    %v3452 = vunpack.c.0.s8 %v3451
    %v3453 = vlaneseq
    %v3454 = vshrl.u32 %v3453, 7
    %v3455 = vsub.s32 %v3452, %v3454
    %v3456 = vrot.slane %v3442, %v3455
    %v3457 = vcombine.low %v3433, %v3449
    %v3458 = vcombine.high %v3433, %v3449
    %v3459 = vcombine.low %v3440, %v3456
    %v3460 = vcombine.high %v3440, %v3456
    %v3461 = vcombine.low %v3229, %v3236
    %v3463 = vunpack.c.l.s4 1983009808
    %v3464 = vunpack.c.0.s8 %v3463
    %v3465 = vlaneseq
    %v3466 = vshrl.u32 %v3465, 7
    %v3467 = vsub.s32 %v3464, %v3466
    %v3468 = vrot.slane %v3461, %v3467
    %v3469 = vcombine.low %v3253, %v3254
    %v3471 = vunpack.c.l.s4 1983009808
    %v3472 = vunpack.c.0.s8 %v3471
    %v3473 = vlaneseq
    %v3474 = vshrl.u32 %v3473, 7
    %v3475 = vsub.s32 %v3472, %v3474
    %v3476 = vrot.slane %v3469, %v3475
    %v3477 = vcombine.low %v3245, %v3252
    %v3479 = vunpack.c.l.s4 1983009808
    %v3480 = vunpack.c.0.s8 %v3479
    %v3481 = vlaneseq
    %v3482 = vshrl.u32 %v3481, 7
    %v3483 = vsub.s32 %v3480, %v3482
    %v3484 = vrot.slane %v3477, %v3483
    %v3485 = vcombine.low %v3255, %v3256
    %v3487 = vunpack.c.l.s4 1983009808
    %v3488 = vunpack.c.0.s8 %v3487
    %v3489 = vlaneseq
    %v3490 = vshrl.u32 %v3489, 7
    %v3491 = vsub.s32 %v3488, %v3490
    %v3492 = vrot.slane %v3485, %v3491
    %v3493 = vcombine.low %v3468, %v3476
    %v3494 = vcombine.high %v3468, %v3476
    %v3496 = vunpack.c.l.s4 1934713408
    %v3497 = vunpack.c.0.s8 %v3496
    %v3498 = vlaneseq
    %v3499 = vshrl.u32 %v3498, 7
    %v3500 = vsub.s32 %v3497, %v3499
    %v3501 = vrot.slane %v3493, %v3500
    %v3503 = vunpack.c.l.s4 1934713408
    %v3504 = vunpack.c.0.s8 %v3503
    %v3505 = vlaneseq
    %v3506 = vshrl.u32 %v3505, 7
    %v3507 = vsub.s32 %v3504, %v3506
    %v3508 = vrot.slane %v3494, %v3507
    %v3509 = vcombine.low %v3484, %v3492
    %v3510 = vcombine.high %v3484, %v3492
    %v3512 = vunpack.c.l.s4 1934713408
    %v3513 = vunpack.c.0.s8 %v3512
    %v3514 = vlaneseq
    %v3515 = vshrl.u32 %v3514, 7
    %v3516 = vsub.s32 %v3513, %v3515
    %v3517 = vrot.slane %v3509, %v3516
    %v3519 = vunpack.c.l.s4 1934713408
    %v3520 = vunpack.c.0.s8 %v3519
    %v3521 = vlaneseq
    %v3522 = vshrl.u32 %v3521, 7
    %v3523 = vsub.s32 %v3520, %v3522
    %v3524 = vrot.slane %v3510, %v3523
    %v3525 = vcombine.low %v3501, %v3517
    %v3526 = vcombine.high %v3501, %v3517
    %v3527 = vcombine.low %v3508, %v3524
    %v3528 = vcombine.high %v3508, %v3524
    %3533 = vrot.lane.b32.xlu0 %v3322, 32
    %v3534 = vpop.permute.xlu0 %3533
    %3535 = vrot.lane.b32.xlu0 %v3390, 32
    %v3536 = vpop.permute.xlu0 %3535
    %3537 = vrot.lane.b32.xlu0 %v3458, 32
    %v3538 = vpop.permute.xlu0 %3537
    %3539 = vrot.lane.b32.xlu0 %v3526, 32
    %v3540 = vpop.permute.xlu0 %3539
    %3549 = vrot.lane.b32.xlu0 %v3323, 64
    %v3550 = vpop.permute.xlu0 %3549
    %3551 = vrot.lane.b32.xlu0 %v3391, 64
    %v3552 = vpop.permute.xlu0 %3551
    %3553 = vrot.lane.b32.xlu0 %v3459, 64
    %v3554 = vpop.permute.xlu0 %3553
    %3555 = vrot.lane.b32.xlu0 %v3527, 64
    %v3556 = vpop.permute.xlu0 %3555
    %3565 = vrot.lane.b32.xlu0 %v3324, 96
    %v3566 = vpop.permute.xlu0 %3565
    %3567 = vrot.lane.b32.xlu0 %v3392, 96
    %v3568 = vpop.permute.xlu0 %3567
    %3569 = vrot.lane.b32.xlu0 %v3460, 96
    %v3570 = vpop.permute.xlu0 %3569
    %3571 = vrot.lane.b32.xlu0 %v3528, 96
    %v3572 = vpop.permute.xlu0 %3571
    %v3577 = vsel %vm2016, %v3321, %v3534
    %v3578 = vsel %vm2016, %v3389, %v3536
    %v3579 = vsel %vm2016, %v3457, %v3538
    %v3580 = vsel %vm2016, %v3525, %v3540
    %vm3581 = vcmask 523264
    %v3582 = vsel %vm3581, %v3577, %v3550
    %v3583 = vsel %vm3581, %v3578, %v3552
    %v3584 = vsel %vm3581, %v3579, %v3554
    %v3585 = vsel %vm3581, %v3580, %v3556
    %vm3586 = vcmask 785408
    %v3587 = vsel %vm3586, %v3582, %v3566
    %v3588 = vsel %vm3586, %v3583, %v3568
    %v3589 = vsel %vm3586, %v3584, %v3570
    %v3590 = vsel %vm3586, %v3585, %v3572
    %v3591 = vpack.c.bf16 %v3588, %v3587
    %v3592 = vpack.c.bf16 %v3590, %v3589
    %v3594 = vlaneseq
    %v3595 = vshrl.u32 %v3594, 7
    %v3596 = vsub.s32 0, %v3595
    %v3597 = vrot.slane %v393, %v3596
    %v3615 = vunpack.c.l.b16 %v377
    %v3616 = vunpack.c.l.b16 %v378
    %v3617 = vunpack.c.l.b16 %v379
    %v3618 = vunpack.c.l.b16 %v380
    %v3619 = vunpack.c.l.b16 %v381
    %v3620 = vunpack.c.l.b16 %v382
    %v3621 = vunpack.c.l.b16 %v383
    %v3622 = vunpack.c.l.b16 %v384
    %v3623 = vunpack.c.l.b16 %v385
    %v3624 = vunpack.c.l.b16 %v386
    %v3625 = vunpack.c.l.b16 %v387
    %v3626 = vunpack.c.l.b16 %v388
    %v3627 = vunpack.c.l.b16 %v389
    %v3628 = vunpack.c.l.b16 %v390
    %v3629 = vunpack.c.l.b16 %v391
    %v3630 = vunpack.c.l.b16 %v392
    %v3631 = vpack.c.b16 %v3616, %v3615
    %v3632 = vpack.c.b16 %v3618, %v3617
    %v3633 = vpack.c.b16 %v3620, %v3619
    %v3634 = vpack.c.b16 %v3622, %v3621
    %v3635 = vpack.c.b16 %v3624, %v3623
    %v3636 = vpack.c.b16 %v3626, %v3625
    %v3637 = vpack.c.b16 %v3628, %v3627
    %v3638 = vpack.c.b16 %v3630, %v3629
    %3647 = vmatprep.subr.bf16.mxu0 0
    %3648 = vmatpush1.bf16.msra.mxu0 %v3631
    %3649 = vmatprep.subr.bf16.mxu0 0
    %3650 = vmatpush1.bf16.msra.mxu0 %v3632
    %3651 = vmatprep.subr.bf16.mxu0 0
    %3652 = vmatpush1.bf16.msra.mxu0 %v3633
    %3653 = vmatprep.subr.bf16.mxu0 0
    %3654 = vmatpush1.bf16.msra.mxu0 %v3634
    %3655 = vmatprep.subr.bf16.mxu0 0
    %3656 = vmatpush1.bf16.msra.mxu0 %v3635
    %3657 = vmatprep.subr.bf16.mxu0 0
    %3658 = vmatpush1.bf16.msra.mxu0 %v3636
    %3659 = vmatprep.subr.bf16.mxu0 0
    %3660 = vmatpush1.bf16.msra.mxu0 %v3637
    %3661 = vmatprep.subr.bf16.mxu0 0
    %3662 = vmatpush1.bf16.msra.mxu0 %v3638
    %3663 = vmatprep.subr.bf16.mxu0 0
    %3664 = vmatpush1.bf16.msra.mxu0 0
    %3665 = vmatprep.subr.bf16.mxu0 0
    %3666 = vmatpush1.bf16.msra.mxu0 0
    %3667 = vmatprep.subr.bf16.mxu0 0
    %3668 = vmatpush1.bf16.msra.mxu0 0
    %3669 = vmatprep.subr.bf16.mxu0 0
    %3670 = vmatpush1.bf16.msra.mxu0 0
    %3671 = vmatprep.subr.bf16.mxu0 0
    %3672 = vmatpush1.bf16.msra.mxu0 0
    %3673 = vmatprep.subr.bf16.mxu0 0
    %3674 = vmatpush1.bf16.msra.mxu0 0
    %3675 = vmatprep.subr.bf16.mxu0 0
    %3676 = vmatpush1.bf16.msra.mxu0 0
    %3677 = vmatprep.subr.bf16.mxu0 0
    %3678 = vmatpush1.bf16.msra.mxu0 0
    %3679 = vmatprep.mubr.bf16.mxu0 0
    %3680 = vmatmul.mubr.bf16.gmra.mrb[0].mxu0 %v3591
    %v3681 = vpop.f32.mrb[0].mxu0
    %v3682 = vadd.f32 %v3597, %v3681
    %v3683 = vpop.f32.mrb[0].mxu0
    %v3684 = vpop.f32.mrb[0].mxu0
    %v3685 = vadd.f32 %v3597, %v3684
    %v3686 = vpop.f32.mrb[0].mxu0
    %3687 = vmatprep.mubr.bf16.mxu0 0
    %3688 = vmatmul.mubr.bf16.gmra.mrb[0].mxu0 %v3592
    %v3689 = vpop.f32.mrb[0].mxu0
    %v3690 = vadd.f32 %v3597, %v3689
    %v3691 = vpop.f32.mrb[0].mxu0
    %v3692 = vpop.f32.mrb[0].mxu0
    %v3693 = vadd.f32 %v3597, %v3692
    %v3694 = vpop.f32.mrb[0].mxu0
    %3695 = vdwg.mxu0
    %v3696 = vld [vmem:[%s6] sm:$0x1]
    %v3697 = vld [vmem:[%s7] sm:$0x1]
    %v3698 = vadd.f32 %v76, %v3682
    %v3699 = vadd.f32 %v77, %v3685
    %v3700 = vadd.f32 %v78, %v3690
    %v3701 = vadd.f32 %v79, %v3693
    %3702 = vadd.xlane.f32.xlu0 %v3698
    %v3703 = vpop.xlane.xlu0 %3702
    %3704 = vadd.xlane.f32.xlu0 %v3699
    %v3705 = vpop.xlane.xlu0 %3704
    %3706 = vadd.xlane.f32.xlu0 %v3700
    %v3707 = vpop.xlane.xlu0 %3706
    %3708 = vadd.xlane.f32.xlu0 %v3701
    %v3709 = vpop.xlane.xlu0 %3708
    %v3710 = vrcp.pop 128.0
    %v3711 = vmul.f32 %v3703, %v3710
    %v3712 = vmul.f32 %v3705, %v3710
    %v3713 = vmul.f32 %v3707, %v3710
    %v3714 = vmul.f32 %v3709, %v3710
    %v3715 = vsub.f32 %v3698, %v3711
    %v3716 = vsub.f32 %v3699, %v3712
    %v3717 = vsub.f32 %v3700, %v3713
    %v3718 = vsub.f32 %v3701, %v3714
    %v3719 = vmul.f32 %v3715, %v3715
    %v3720 = vmul.f32 %v3716, %v3716
    %v3721 = vmul.f32 %v3717, %v3717
    %v3722 = vmul.f32 %v3718, %v3718
    %3723 = vadd.xlane.f32.xlu0 %v3719
    %v3724 = vpop.xlane.xlu0 %3723
    %3725 = vadd.xlane.f32.xlu0 %v3720
    %v3726 = vpop.xlane.xlu0 %3725
    %3727 = vadd.xlane.f32.xlu0 %v3721
    %v3728 = vpop.xlane.xlu0 %3727
    %3729 = vadd.xlane.f32.xlu0 %v3722
    %v3730 = vpop.xlane.xlu0 %3729
    %v3731 = vmul.f32 %v3724, %v3710
    %v3732 = vmul.f32 %v3726, %v3710
    %v3733 = vmul.f32 %v3728, %v3710
    %v3734 = vmul.f32 %v3730, %v3710
    %v3735 = vadd.f32 %v3731, 1e-05
    %v3736 = vadd.f32 %v3732, 1e-05
    %v3737 = vadd.f32 %v3733, 1e-05
    %v3738 = vadd.f32 %v3734, 1e-05
    %v3739 = vrsqrt.pop %v3735
    %v3740 = vrsqrt.pop %v3736
    %v3741 = vrsqrt.pop %v3737
    %v3742 = vrsqrt.pop %v3738
    %v3743 = vmul.f32 %v3715, %v3739
    %v3744 = vmul.f32 %v3716, %v3740
    %v3745 = vmul.f32 %v3717, %v3741
    %v3746 = vmul.f32 %v3718, %v3742
    %v3748 = vlaneseq
    %v3749 = vshrl.u32 %v3748, 7
    %v3750 = vsub.s32 0, %v3749
    %v3751 = vrot.slane %v3696, %v3750
    %v3753 = vmul.f32 %v3743, %v3751
    %v3754 = vmul.f32 %v3744, %v3751
    %v3755 = vmul.f32 %v3745, %v3751
    %v3756 = vmul.f32 %v3746, %v3751
    %v3758 = vlaneseq
    %v3759 = vshrl.u32 %v3758, 7
    %v3760 = vsub.s32 0, %v3759
    %v3761 = vrot.slane %v3697, %v3760
    %v3763 = vadd.f32 %v3753, %v3761
    %v3764 = vadd.f32 %v3754, %v3761
    %v3765 = vadd.f32 %v3755, %v3761
    %v3766 = vadd.f32 %v3756, %v3761
    %v3767 = vpack.c.bf16 %v3764, %v3763
    %v3768 = vpack.c.bf16 %v3766, %v3765
    %v3771 = vunpack.c.l.b16 %v3767
    %v3772 = vunpack.c.h.b16 %v3767
    %v3773 = vunpack.c.l.b16 %v3768
    %v3774 = vunpack.c.h.b16 %v3768
    %v3775 = vpack.c.b16 %v3771, %v3771
    %v3776 = vpack.c.b16 %v3772, %v3772
    %v3777 = vpack.c.b16 %v3773, %v3773
    %v3778 = vpack.c.b16 %v3774, %v3774
    %3783 = vst [vmem:[#allocation8] sm:$0xf] %v3775
    %3784 = vst [vmem:[#allocation8 + $0x4] sm:$0xf] %v3776
    %3785 = vst [vmem:[#allocation8 + $0x8] sm:$0xf] %v3777
    %3786 = vst [vmem:[#allocation8 + $0xc] sm:$0xf] %v3778
    // Predicated region
    $region46: #{tpu_custom_call.1} parent=1 // pred_check
      _
    $region47: #{tpu_custom_call.1} parent=1 // pred_check_branch
      %3788 = sbr.rel (0) target = $region49
    $region48: #{tpu_custom_call.1} parent=1 // pred_region
      %s3790 = ssub.s32 256, 256
      %3791 = vsyncadd [#allocation4], %s3790
      %s3792 = sshll.u32 [#allocation8], 4
      %s3793 = int_to_ptr.vmem [resolvable:$true] %s3792
      %3798 = dma.vmem_to_hbm [thread:$0]  %s3793, 256, %s8, [#allocation4], 64, 64, 4
    $region49: #{tpu_custom_call.1} parent=1 // pred_fallthru
      _
    // Predicated region
    $region50: #{tpu_custom_call.1} parent=1 // pred_check
      _
    $region51: #{tpu_custom_call.1} parent=1 // pred_check_branch
      %3800 = sbr.rel (0) target = $region53
    $region52: #{tpu_custom_call.1} parent=1 // pred_region
      %3801 = dma.done [#allocation4], 256
    $region53: #{tpu_custom_call.1} parent=1 // pred_fallthru
      _
    %3802 = vsyncpa [#allocation3], 1
    %3803 = vsyncpa [#allocation6], 1
    %3804 = vsyncpa [#allocation4], 1

</llo_original>
